<compile_context>
chip_gen: v7x
topology: tpu7x:2x2x1
jax: 0.10.0
libtpu: 0.0.40
codegen_flags: <defaults>
</compile_context>

<pallas_src>
import functools
import math

import jax
import jax.numpy as jnp
from jax import lax
from jax.experimental import pallas as pl
from jax.experimental.pallas import tpu as pltpu


def _round_up(x, m):
    return (x + m - 1) // m * m


# --------------------------- fused conv + per-tile BN statistics ---------------------------

def _conv_bn_stats_kernel(*refs, stride, KH, KW, Toh, OW, OH, Cin, Coutp,
                          halo_ph, n_pv_h, n_pv_w):
    """refs layout:
         inputs : for each of n_pv_h*n_pv_w phase views: body block (1,Toh,Wph,Cin) bf16
                  [+ halo block (1,halo_ph,Wph,Cin) bf16 when halo_ph>0], then the
                  weight block (KH*KW, Cin, Coutp) bf16 (VMEM-resident, constant index map)
         outputs: y block (1,Toh,OW,Coutp) bf16 ; stats block (1,1,2,Coutp) f32
         scratch: xs (n_pv, Toh+halo_ph, Wph, Cin) bf16 (only when halo_ph>0)
    """
    n_pv = n_pv_h * n_pv_w
    has_halo = halo_ph > 0
    per_view = 2 if has_halo else 1
    n_in = n_pv * per_view + 1

    w_ref = refs[n_in - 1]
    y_ref = refs[n_in]
    st_ref = refs[n_in + 1]
    xs_ref = refs[n_in + 2] if has_halo else None

    # Stitch body + halo rows of every phase view into one contiguous scratch window.
    if has_halo:
        for pv in range(n_pv):
            body = refs[pv * 2]
            halo = refs[pv * 2 + 1]
            xs_ref[pv, 0:Toh] = body[0]
            xs_ref[pv, Toh:Toh + halo_ph] = halo[0]

    # All KH*KW taps fused into a static loop of MXU matmuls, f32 accumulation.
    acc = jnp.zeros((Toh * OW, Coutp), jnp.float32)
    for i in range(KH):
        for j in range(KW):
            pv = (i % stride) * n_pv_w + (j % stride)
            di, dj = i // stride, j // stride
            if has_halo:
                lhs = xs_ref[pv, di:di + Toh, dj:dj + OW, :]
            else:
                lhs = refs[pv][0, di:di + Toh, dj:dj + OW, :]
            acc = acc + jnp.dot(lhs.reshape(Toh * OW, Cin), w_ref[i * KW + j],
                                preferred_element_type=jnp.float32)

    # Mask rows past the true OH (OH is padded up to a multiple of Toh) so the batch
    # statistics only see real output rows.  Static no-op when Toh | OH.
    if OH % Toh != 0:
        t = pl.program_id(1)
        local_oh = lax.broadcasted_iota(jnp.int32, (Toh * OW, 1), 0) // OW
        acc = jnp.where(t * Toh + local_oh < OH, acc, 0.0)

    # Store the activation in bf16; take the statistics from the rounded value so the
    # folded BN exactly normalizes what was stored.
    yb = acc.astype(jnp.bfloat16)
    y_ref[0] = yb.reshape(Toh, OW, Coutp)
    ybf = yb.astype(jnp.float32)
    st_ref[0, 0, 0:1, :] = jnp.sum(ybf, axis=0, keepdims=True)
    st_ref[0, 0, 1:2, :] = jnp.sum(ybf * ybf, axis=0, keepdims=True)


# ----------------------------------------- wrapper -----------------------------------------

def conv2d_batch_leaky(x_nchw, weight, gamma, beta, *,
                       stride=1, leaky_slope=0.1, eps=1e-5):
    """weight: (Cout, Cin, KH, KW) as in PyTorch; x_nchw: (N, Cin, H, W). Returns NCHW f32."""
    N, Cin, H, W = x_nchw.shape
    Cout, _, KH, KW = weight.shape
    s = int(stride)
    pad_h, pad_w = KH // 2, KW // 2                    # PyTorch module: padding = int(k/2)
    OH = (H + 2 * pad_h - KH) // s + 1
    OW = (W + 2 * pad_w - KW) // s + 1
    Coutp = _round_up(Cout, 128)                       # lane-dense stores / MXU N dim

    halo_ph = (KH - 1) // s                            # per-phase row halo
    halo_pw = (KW - 1) // s                            # per-phase column halo
    n_pv_h, n_pv_w = min(s, KH), min(s, KW)            # phase views actually used
    n_pv = n_pv_h * n_pv_w
    Wph = OW + halo_pw                                 # phase-view width held per step

    # ---- VMEM-aware tiling: pick Toh (output rows per grid step) ----
    try:
        vmem_cap = int(pltpu.get_tpu_info().vmem_capacity_bytes)
    except Exception:                                  # conservative (v7x-safe) fallback
        vmem_cap = 64 * 1024 * 1024
    budget = int(vmem_cap * 0.55)

    cin_l = _round_up(Cin, 128)                        # lane padding in VMEM
    wph_s = _round_up(Wph, 8)                          # sublane padding in VMEM
    ow_s = _round_up(OW, 8)

    def step_bytes(toh):
        body = 2 * n_pv * toh * wph_s * cin_l * 2                       # double-buffered
        halo = (2 * n_pv * halo_ph * wph_s * cin_l * 2) if halo_ph else 0
        wgt = 2 * KH * KW * _round_up(Cin, 8) * Coutp * 2
        ybuf = 2 * toh * ow_s * Coutp * 2
        stat = 2 * 8 * Coutp * 4
        acc = _round_up(toh * OW, 8) * Coutp * 4
        xscr = (n_pv * (toh + halo_ph) * wph_s * cin_l * 2) if halo_ph else 0
        return body + halo + wgt + ybuf + stat + acc + xscr

    align = max(halo_ph, 1)                            # halo BlockSpec needs halo_ph | Toh
    Toh = min(_round_up(OH, align),
              _round_up(max(1, 2048 // max(OW, 1)), align))   # ~2048 matmul rows / step
    while Toh > align and step_bytes(Toh) > budget:
        Toh -= align
    Toh = max(Toh, align)
    T = pl.cdiv(OH, Toh)
    OHp = T * Toh

    # ---- layout plumbing only: NHWC, zero pad, bf16 cast, stride phase views ----
    x = jnp.transpose(x_nchw, (0, 2, 3, 1)).astype(jnp.bfloat16)
    extra_h = max(0, (OHp + halo_ph) * s - (H + 2 * pad_h))
    extra_w = max(0, Wph * s - (W + 2 * pad_w))
    x = jnp.pad(x, ((0, 0), (pad_h, pad_h + extra_h), (pad_w, pad_w + extra_w), (0, 0)))

    views = []
    for p in range(n_pv_h):
        for q in range(n_pv_w):
            views.append(x[:, p::s, q::s, :][:, :OHp + halo_ph, :Wph, :])

    # weight rows ordered as (i*KW + j) to match the in-kernel tap loop
    w = jnp.transpose(weight, (2, 3, 1, 0)).reshape(KH * KW, Cin, Cout)
    w = jnp.pad(w, ((0, 0), (0, 0), (0, Coutp - Cout))).astype(jnp.bfloat16)

    # ---- BlockSpecs: body + halo windows into the SAME phase view, weight resident ----
    body_spec = pl.BlockSpec((1, Toh, Wph, Cin), lambda n, t: (n, t, 0, 0))
    if halo_ph > 0:
        hstep = Toh // halo_ph
        halo_spec = pl.BlockSpec((1, halo_ph, Wph, Cin),
                                 lambda n, t: (n, (t + 1) * hstep, 0, 0))
    inputs, in_specs = [], []
    for v in views:
        inputs.append(v)
        in_specs.append(body_spec)
        if halo_ph > 0:
            inputs.append(v)
            in_specs.append(halo_spec)
    inputs.append(w)
    in_specs.append(pl.BlockSpec((KH * KW, Cin, Coutp), lambda n, t: (0, 0, 0)))

    out_specs = [
        pl.BlockSpec((1, Toh, OW, Coutp), lambda n, t: (n, t, 0, 0)),
        pl.BlockSpec((1, 1, 2, Coutp), lambda n, t: (n, t, 0, 0)),
    ]
    out_shape = [
        jax.ShapeDtypeStruct((N, OHp, OW, Coutp), jnp.bfloat16),
        jax.ShapeDtypeStruct((N, T, 2, Coutp), jnp.float32),
    ]
    scratch = []
    if halo_ph > 0:
        scratch.append(pltpu.VMEM((n_pv, Toh + halo_ph, Wph, Cin), jnp.bfloat16))

    est = step_bytes(Toh)
    vmem_limit = int(min(vmem_cap * 9 // 10, max(est + est // 2, 32 * 1024 * 1024)))
    cparams = pltpu.CompilerParams(
        dimension_semantics=("parallel", "parallel"),
        vmem_limit_bytes=vmem_limit)
    cost = pl.CostEstimate(
        flops=2 * N * OHp * OW * KH * KW * Cin * Coutp,
        transcendentals=0,
        bytes_accessed=(sum(int(v.size) for v in views) * 2 + int(w.size) * 2
                        + N * OHp * OW * Coutp * 2 + N * T * 2 * Coutp * 4))

    kern = functools.partial(
        _conv_bn_stats_kernel, stride=s, KH=KH, KW=KW, Toh=Toh, OW=OW, OH=OH,
        Cin=Cin, Coutp=Coutp, halo_ph=halo_ph, n_pv_h=n_pv_h, n_pv_w=n_pv_w)

    y, stats = pl.pallas_call(
        kern,
        grid=(N, T),
        in_specs=in_specs,
        out_specs=out_specs,
        out_shape=out_shape,
        scratch_shapes=scratch,
        compiler_params=cparams,
        cost_estimate=cost,
    )(*inputs)

    # ---- tiny per-channel reduction + folded BN + LeakyReLU + NCHW, fused by XLA ----
    m = float(N * OH * OW)                             # padded rows were masked to zero
    ch_sum = jnp.sum(stats[:, :, 0, :Cout], axis=(0, 1))
    ch_sq = jnp.sum(stats[:, :, 1, :Cout], axis=(0, 1))
    mean = ch_sum / m
    var = jnp.maximum(ch_sq / m - mean * mean, 0.0)    # biased (train-mode) variance
    scale = gamma.reshape(-1).astype(jnp.float32) * lax.rsqrt(var + eps)
    bias = beta.reshape(-1).astype(jnp.float32) - mean * scale
    # TODO(synk): running_mean / running_var momentum update not implemented (training
    #             side-effect; the forward output is unaffected).

    z = y[:, :OH, :, :Cout].astype(jnp.float32) * scale + bias
    out = jnp.where(z >= 0, z, leaky_slope * z)
    return jnp.transpose(out, (0, 3, 1, 2))            # NCHW f32


# ----------------------------------------- reference ---------------------------------------

def _reference(x_nchw, weight, gamma, beta, *, stride, leaky_slope, eps):
    """Pure-JAX reference: bf16-operand conv (f32 acc), bf16 activation storage (matching the
    kernel), train-mode BN, LeakyReLU."""
    KH, KW = weight.shape[2], weight.shape[3]
    pad_h, pad_w = KH // 2, KW // 2
    y = lax.conv_general_dilated(
        x_nchw.astype(jnp.bfloat16), weight.astype(jnp.bfloat16),
        window_strides=(stride, stride),
        padding=[(pad_h, pad_h), (pad_w, pad_w)],
        dimension_numbers=('NCHW', 'OIHW', 'NCHW'),
        preferred_element_type=jnp.float32)
    y = y.astype(jnp.bfloat16).astype(jnp.float32)
    mean = jnp.mean(y, axis=(0, 2, 3), keepdims=True)
    var = jnp.mean((y - mean) ** 2, axis=(0, 2, 3), keepdims=True)
    y = (y - mean) * lax.rsqrt(var + eps)
    y = y * gamma.reshape(1, -1, 1, 1) + beta.reshape(1, -1, 1, 1)
    return jnp.where(y >= 0, y, leaky_slope * y)


if __name__ == "__main__":
    key = jax.random.PRNGKey(0)
    N, Cin, H, W = 2, 4, 16, 16
    Cout, Kk = 8, 3
    leaky_slope = 0.1

    kx, kw = jax.random.split(key)
    x = jax.random.normal(kx, (N, Cin, H, W), dtype=jnp.float32)

    # deterministic Conv2d-style init (kaiming-uniform-like), no bias
    fan_in = Cin * Kk * Kk
    bound = 1.0 / math.sqrt(fan_in)
    weight = jax.random.uniform(kw, (Cout, Cin, Kk, Kk), dtype=jnp.float32,
                                minval=-bound, maxval=bound)
    # BatchNorm2d default affine init
    gamma = jnp.ones((Cout,), jnp.float32)
    beta = jnp.zeros((Cout,), jnp.float32)

    for stride in (1, 2):
        fn = jax.jit(functools.partial(conv2d_batch_leaky, stride=stride,
                                       leaky_slope=leaky_slope, eps=1e-5))
        out = jax.block_until_ready(fn(x, weight, gamma, beta))
        ref = _reference(x, weight, gamma, beta,
                         stride=stride, leaky_slope=leaky_slope, eps=1e-5)
        OHW = (H + 2 * (Kk // 2) - Kk) // stride + 1
        assert out.shape == (N, Cout, OHW, OHW), out.shape
        err = float(jnp.max(jnp.abs(out - ref)))
        # bf16 activation storage -> tolerance sized for one bf16 ulp of the conv output
        assert jnp.allclose(out, ref, atol=1e-2, rtol=1e-2), err

    print("KERNEL_OK")
</pallas_src>

<mosaic_0001>
module attributes {stable_mosaic.version = 11 : i64} {
  func.func @_conv_bn_stats_kernel(%arg0: i32, %arg1: i32, %arg2: memref<1x16x18x4xbf16, #tpu.memory_space<vmem>>, %arg3: memref<1x2x18x4xbf16, #tpu.memory_space<vmem>>, %arg4: memref<9x4x128xbf16, #tpu.memory_space<vmem>>, %arg5: memref<1x16x16x128xbf16, #tpu.memory_space<vmem>>, %arg6: memref<1x1x2x128xf32, #tpu.memory_space<vmem>>, %arg7: memref<1x18x18x4xbf16, #tpu.memory_space<vmem>>) attributes {dimension_semantics = [#tpu.dimension_semantics<parallel>, #tpu.dimension_semantics<parallel>], iteration_bounds = array<i64: 2, 1>, scalar_prefetch = 0 : i64, scratch_operands = 1 : i64, tpu.core_type = #tpu.core_type<tc>, window_params = [{transform_indices = @transform_0, window_bounds = array<i64: 1, 16, 18, 4>}, {transform_indices = @transform_1, window_bounds = array<i64: 1, 2, 18, 4>}, {pipeline_mode = #tpu.pipeline_mode<synchronous>, transform_indices = @transform_2, window_bounds = array<i64: 9, 4, 128>}, {transform_indices = @transform_3, window_bounds = array<i64: 1, 16, 16, 128>}, {transform_indices = @transform_4, window_bounds = array<i64: 1, 1, 2, 128>}]} {
    %c0 = arith.constant 0 : index
    %c0_0 = arith.constant 0 : index
    %c0_1 = arith.constant 0 : index
    %c0_2 = arith.constant 0 : index
    %0 = vector.load %arg2[%c0, %c0_0, %c0_1, %c0_2] : memref<1x16x18x4xbf16, #tpu.memory_space<vmem>>, vector<1x16x18x4xbf16>
    %1 = vector.shape_cast %0 : vector<1x16x18x4xbf16> to vector<16x18x4xbf16>
    %c0_3 = arith.constant 0 : index
    %c0_4 = arith.constant 0 : index
    %c0_5 = arith.constant 0 : index
    %c0_6 = arith.constant 0 : index
    %2 = vector.load %arg7[%c0_3, %c0_4, %c0_5, %c0_6] : memref<1x18x18x4xbf16, #tpu.memory_space<vmem>>, vector<1x16x18x4xbf16>
    %3 = vector.shape_cast %2 : vector<1x16x18x4xbf16> to vector<16x18x4xbf16>
    %4 = vector.shape_cast %1 : vector<16x18x4xbf16> to vector<1x16x18x4xbf16>
    tpu.vector_store %arg7[%c0_3, %c0_4, %c0_5, %c0_6], %4 {strides = array<i32>} : memref<1x18x18x4xbf16, #tpu.memory_space<vmem>>, vector<1x16x18x4xbf16>,
    %c0_7 = arith.constant 0 : index
    %c0_8 = arith.constant 0 : index
    %c0_9 = arith.constant 0 : index
    %c0_10 = arith.constant 0 : index
    %5 = vector.load %arg3[%c0_7, %c0_8, %c0_9, %c0_10] : memref<1x2x18x4xbf16, #tpu.memory_space<vmem>>, vector<1x2x18x4xbf16>
    %6 = vector.shape_cast %5 : vector<1x2x18x4xbf16> to vector<2x18x4xbf16>
    %c0_11 = arith.constant 0 : index
    %c16 = arith.constant 16 : index
    %c0_12 = arith.constant 0 : index
    %c0_13 = arith.constant 0 : index
    %7 = vector.load %arg7[%c0_11, %c16, %c0_12, %c0_13] : memref<1x18x18x4xbf16, #tpu.memory_space<vmem>>, vector<1x2x18x4xbf16>
    %8 = vector.shape_cast %7 : vector<1x2x18x4xbf16> to vector<2x18x4xbf16>
    %9 = vector.shape_cast %6 : vector<2x18x4xbf16> to vector<1x2x18x4xbf16>
    tpu.vector_store %arg7[%c0_11, %c16, %c0_12, %c0_13], %9 {strides = array<i32>} : memref<1x18x18x4xbf16, #tpu.memory_space<vmem>>, vector<1x2x18x4xbf16>,
    %cst = arith.constant 0.000000e+00 : f32
    %10 = vector.broadcast %cst : f32 to vector<256x128xf32>
    %c0_14 = arith.constant 0 : index
    %c0_15 = arith.constant 0 : index
    %c0_16 = arith.constant 0 : index
    %c0_17 = arith.constant 0 : index
    %11 = vector.load %arg7[%c0_14, %c0_15, %c0_16, %c0_17] : memref<1x18x18x4xbf16, #tpu.memory_space<vmem>>, vector<1x16x16x4xbf16>
    %12 = vector.shape_cast %11 : vector<1x16x16x4xbf16> to vector<16x16x4xbf16>
    %13 = vector.shape_cast %12 : vector<16x16x4xbf16> to vector<256x4xbf16>
    %c0_18 = arith.constant 0 : index
    %c0_19 = arith.constant 0 : index
    %c0_20 = arith.constant 0 : index
    %14 = vector.load %arg4[%c0_18, %c0_19, %c0_20] : memref<9x4x128xbf16, #tpu.memory_space<vmem>>, vector<1x4x128xbf16>
    %15 = vector.shape_cast %14 : vector<1x4x128xbf16> to vector<4x128xbf16>
    %cst_21 = arith.constant dense<0.000000e+00> : vector<256x128xf32>
    %16 = tpu.matmul %13, %15, %cst_21 {dimension_numbers = #tpu.dot_dimension_numbers<[1], [0], [0], [1], [0, 0, 1, 1], [], []>} : vector<256x4xbf16>, vector<4x128xbf16>, vector<256x128xf32> -> vector<256x128xf32>
    %17 = arith.addf %10, %16 : vector<256x128xf32>
    %c0_22 = arith.constant 0 : index
    %c0_23 = arith.constant 0 : index
    %c1 = arith.constant 1 : index
    %c0_24 = arith.constant 0 : index
    %18 = vector.load %arg7[%c0_22, %c0_23, %c1, %c0_24] : memref<1x18x18x4xbf16, #tpu.memory_space<vmem>>, vector<1x16x16x4xbf16>
    %19 = vector.shape_cast %18 : vector<1x16x16x4xbf16> to vector<16x16x4xbf16>
    %20 = vector.shape_cast %19 : vector<16x16x4xbf16> to vector<256x4xbf16>
    %c1_25 = arith.constant 1 : index
    %c0_26 = arith.constant 0 : index
    %c0_27 = arith.constant 0 : index
    %21 = vector.load %arg4[%c1_25, %c0_26, %c0_27] : memref<9x4x128xbf16, #tpu.memory_space<vmem>>, vector<1x4x128xbf16>
    %22 = vector.shape_cast %21 : vector<1x4x128xbf16> to vector<4x128xbf16>
    %cst_28 = arith.constant dense<0.000000e+00> : vector<256x128xf32>
    %23 = tpu.matmul %20, %22, %cst_28 {dimension_numbers = #tpu.dot_dimension_numbers<[1], [0], [0], [1], [0, 0, 1, 1], [], []>} : vector<256x4xbf16>, vector<4x128xbf16>, vector<256x128xf32> -> vector<256x128xf32>
    %24 = arith.addf %17, %23 : vector<256x128xf32>
    %c0_29 = arith.constant 0 : index
    %c0_30 = arith.constant 0 : index
    %c2 = arith.constant 2 : index
    %c0_31 = arith.constant 0 : index
    %25 = vector.load %arg7[%c0_29, %c0_30, %c2, %c0_31] : memref<1x18x18x4xbf16, #tpu.memory_space<vmem>>, vector<1x16x16x4xbf16>
    %26 = vector.shape_cast %25 : vector<1x16x16x4xbf16> to vector<16x16x4xbf16>
    %27 = vector.shape_cast %26 : vector<16x16x4xbf16> to vector<256x4xbf16>
    %c2_32 = arith.constant 2 : index
    %c0_33 = arith.constant 0 : index
    %c0_34 = arith.constant 0 : index
    %28 = vector.load %arg4[%c2_32, %c0_33, %c0_34] : memref<9x4x128xbf16, #tpu.memory_space<vmem>>, vector<1x4x128xbf16>
    %29 = vector.shape_cast %28 : vector<1x4x128xbf16> to vector<4x128xbf16>
    %cst_35 = arith.constant dense<0.000000e+00> : vector<256x128xf32>
    %30 = tpu.matmul %27, %29, %cst_35 {dimension_numbers = #tpu.dot_dimension_numbers<[1], [0], [0], [1], [0, 0, 1, 1], [], []>} : vector<256x4xbf16>, vector<4x128xbf16>, vector<256x128xf32> -> vector<256x128xf32>
    %31 = arith.addf %24, %30 : vector<256x128xf32>
    %c0_36 = arith.constant 0 : index
    %c1_37 = arith.constant 1 : index
    %c0_38 = arith.constant 0 : index
    %c0_39 = arith.constant 0 : index
    %32 = vector.load %arg7[%c0_36, %c1_37, %c0_38, %c0_39] : memref<1x18x18x4xbf16, #tpu.memory_space<vmem>>, vector<1x16x16x4xbf16>
    %33 = vector.shape_cast %32 : vector<1x16x16x4xbf16> to vector<16x16x4xbf16>
    %34 = vector.shape_cast %33 : vector<16x16x4xbf16> to vector<256x4xbf16>
    %c3 = arith.constant 3 : index
    %c0_40 = arith.constant 0 : index
    %c0_41 = arith.constant 0 : index
    %35 = vector.load %arg4[%c3, %c0_40, %c0_41] : memref<9x4x128xbf16, #tpu.memory_space<vmem>>, vector<1x4x128xbf16>
    %36 = vector.shape_cast %35 : vector<1x4x128xbf16> to vector<4x128xbf16>
    %cst_42 = arith.constant dense<0.000000e+00> : vector<256x128xf32>
    %37 = tpu.matmul %34, %36, %cst_42 {dimension_numbers = #tpu.dot_dimension_numbers<[1], [0], [0], [1], [0, 0, 1, 1], [], []>} : vector<256x4xbf16>, vector<4x128xbf16>, vector<256x128xf32> -> vector<256x128xf32>
    %38 = arith.addf %31, %37 : vector<256x128xf32>
    %c0_43 = arith.constant 0 : index
    %c1_44 = arith.constant 1 : index
    %c1_45 = arith.constant 1 : index
    %c0_46 = arith.constant 0 : index
    %39 = vector.load %arg7[%c0_43, %c1_44, %c1_45, %c0_46] : memref<1x18x18x4xbf16, #tpu.memory_space<vmem>>, vector<1x16x16x4xbf16>
    %40 = vector.shape_cast %39 : vector<1x16x16x4xbf16> to vector<16x16x4xbf16>
    %41 = vector.shape_cast %40 : vector<16x16x4xbf16> to vector<256x4xbf16>
    %c4 = arith.constant 4 : index
    %c0_47 = arith.constant 0 : index
    %c0_48 = arith.constant 0 : index
    %42 = vector.load %arg4[%c4, %c0_47, %c0_48] : memref<9x4x128xbf16, #tpu.memory_space<vmem>>, vector<1x4x128xbf16>
    %43 = vector.shape_cast %42 : vector<1x4x128xbf16> to vector<4x128xbf16>
    %cst_49 = arith.constant dense<0.000000e+00> : vector<256x128xf32>
    %44 = tpu.matmul %41, %43, %cst_49 {dimension_numbers = #tpu.dot_dimension_numbers<[1], [0], [0], [1], [0, 0, 1, 1], [], []>} : vector<256x4xbf16>, vector<4x128xbf16>, vector<256x128xf32> -> vector<256x128xf32>
    %45 = arith.addf %38, %44 : vector<256x128xf32>
    %c0_50 = arith.constant 0 : index
    %c1_51 = arith.constant 1 : index
    %c2_52 = arith.constant 2 : index
    %c0_53 = arith.constant 0 : index
    %46 = vector.load %arg7[%c0_50, %c1_51, %c2_52, %c0_53] : memref<1x18x18x4xbf16, #tpu.memory_space<vmem>>, vector<1x16x16x4xbf16>
    %47 = vector.shape_cast %46 : vector<1x16x16x4xbf16> to vector<16x16x4xbf16>
    %48 = vector.shape_cast %47 : vector<16x16x4xbf16> to vector<256x4xbf16>
    %c5 = arith.constant 5 : index
    %c0_54 = arith.constant 0 : index
    %c0_55 = arith.constant 0 : index
    %49 = vector.load %arg4[%c5, %c0_54, %c0_55] : memref<9x4x128xbf16, #tpu.memory_space<vmem>>, vector<1x4x128xbf16>
    %50 = vector.shape_cast %49 : vector<1x4x128xbf16> to vector<4x128xbf16>
    %cst_56 = arith.constant dense<0.000000e+00> : vector<256x128xf32>
    %51 = tpu.matmul %48, %50, %cst_56 {dimension_numbers = #tpu.dot_dimension_numbers<[1], [0], [0], [1], [0, 0, 1, 1], [], []>} : vector<256x4xbf16>, vector<4x128xbf16>, vector<256x128xf32> -> vector<256x128xf32>
    %52 = arith.addf %45, %51 : vector<256x128xf32>
    %c0_57 = arith.constant 0 : index
    %c2_58 = arith.constant 2 : index
    %c0_59 = arith.constant 0 : index
    %c0_60 = arith.constant 0 : index
    %53 = vector.load %arg7[%c0_57, %c2_58, %c0_59, %c0_60] : memref<1x18x18x4xbf16, #tpu.memory_space<vmem>>, vector<1x16x16x4xbf16>
    %54 = vector.shape_cast %53 : vector<1x16x16x4xbf16> to vector<16x16x4xbf16>
    %55 = vector.shape_cast %54 : vector<16x16x4xbf16> to vector<256x4xbf16>
    %c6 = arith.constant 6 : index
    %c0_61 = arith.constant 0 : index
    %c0_62 = arith.constant 0 : index
    %56 = vector.load %arg4[%c6, %c0_61, %c0_62] : memref<9x4x128xbf16, #tpu.memory_space<vmem>>, vector<1x4x128xbf16>
    %57 = vector.shape_cast %56 : vector<1x4x128xbf16> to vector<4x128xbf16>
    %cst_63 = arith.constant dense<0.000000e+00> : vector<256x128xf32>
    %58 = tpu.matmul %55, %57, %cst_63 {dimension_numbers = #tpu.dot_dimension_numbers<[1], [0], [0], [1], [0, 0, 1, 1], [], []>} : vector<256x4xbf16>, vector<4x128xbf16>, vector<256x128xf32> -> vector<256x128xf32>
    %59 = arith.addf %52, %58 : vector<256x128xf32>
    %c0_64 = arith.constant 0 : index
    %c2_65 = arith.constant 2 : index
    %c1_66 = arith.constant 1 : index
    %c0_67 = arith.constant 0 : index
    %60 = vector.load %arg7[%c0_64, %c2_65, %c1_66, %c0_67] : memref<1x18x18x4xbf16, #tpu.memory_space<vmem>>, vector<1x16x16x4xbf16>
    %61 = vector.shape_cast %60 : vector<1x16x16x4xbf16> to vector<16x16x4xbf16>
    %62 = vector.shape_cast %61 : vector<16x16x4xbf16> to vector<256x4xbf16>
    %c7 = arith.constant 7 : index
    %c0_68 = arith.constant 0 : index
    %c0_69 = arith.constant 0 : index
    %63 = vector.load %arg4[%c7, %c0_68, %c0_69] : memref<9x4x128xbf16, #tpu.memory_space<vmem>>, vector<1x4x128xbf16>
    %64 = vector.shape_cast %63 : vector<1x4x128xbf16> to vector<4x128xbf16>
    %cst_70 = arith.constant dense<0.000000e+00> : vector<256x128xf32>
    %65 = tpu.matmul %62, %64, %cst_70 {dimension_numbers = #tpu.dot_dimension_numbers<[1], [0], [0], [1], [0, 0, 1, 1], [], []>} : vector<256x4xbf16>, vector<4x128xbf16>, vector<256x128xf32> -> vector<256x128xf32>
    %66 = arith.addf %59, %65 : vector<256x128xf32>
    %c0_71 = arith.constant 0 : index
    %c2_72 = arith.constant 2 : index
    %c2_73 = arith.constant 2 : index
    %c0_74 = arith.constant 0 : index
    %67 = vector.load %arg7[%c0_71, %c2_72, %c2_73, %c0_74] : memref<1x18x18x4xbf16, #tpu.memory_space<vmem>>, vector<1x16x16x4xbf16>
    %68 = vector.shape_cast %67 : vector<1x16x16x4xbf16> to vector<16x16x4xbf16>
    %69 = vector.shape_cast %68 : vector<16x16x4xbf16> to vector<256x4xbf16>
    %c8 = arith.constant 8 : index
    %c0_75 = arith.constant 0 : index
    %c0_76 = arith.constant 0 : index
    %70 = vector.load %arg4[%c8, %c0_75, %c0_76] : memref<9x4x128xbf16, #tpu.memory_space<vmem>>, vector<1x4x128xbf16>
    %71 = vector.shape_cast %70 : vector<1x4x128xbf16> to vector<4x128xbf16>
    %cst_77 = arith.constant dense<0.000000e+00> : vector<256x128xf32>
    %72 = tpu.matmul %69, %71, %cst_77 {dimension_numbers = #tpu.dot_dimension_numbers<[1], [0], [0], [1], [0, 0, 1, 1], [], []>} : vector<256x4xbf16>, vector<4x128xbf16>, vector<256x128xf32> -> vector<256x128xf32>
    %73 = arith.addf %66, %72 : vector<256x128xf32>
    %74 = arith.truncf %73 : vector<256x128xf32> to vector<256x128xbf16>
    %75 = vector.shape_cast %74 : vector<256x128xbf16> to vector<16x16x128xbf16>
    %c0_78 = arith.constant 0 : index
    %c0_79 = arith.constant 0 : index
    %c0_80 = arith.constant 0 : index
    %c0_81 = arith.constant 0 : index
    %76 = vector.load %arg5[%c0_78, %c0_79, %c0_80, %c0_81] : memref<1x16x16x128xbf16, #tpu.memory_space<vmem>>, vector<1x16x16x128xbf16>
    %77 = vector.shape_cast %76 : vector<1x16x16x128xbf16> to vector<16x16x128xbf16>
    %78 = vector.shape_cast %75 : vector<16x16x128xbf16> to vector<1x16x16x128xbf16>
    tpu.vector_store %arg5[%c0_78, %c0_79, %c0_80, %c0_81], %78 {strides = array<i32>} : memref<1x16x16x128xbf16, #tpu.memory_space<vmem>>, vector<1x16x16x128xbf16>,
    %79 = arith.extf %74 : vector<256x128xbf16> to vector<256x128xf32>
    %cst_82 = arith.constant dense<0.000000e+00> : vector<128xf32>
    %80 = vector.multi_reduction <add>, %79, %cst_82 [0] : vector<256x128xf32> to vector<128xf32>
    %81 = vector.shape_cast %80 : vector<128xf32> to vector<1x128xf32>
    %c0_83 = arith.constant 0 : index
    %c0_84 = arith.constant 0 : index
    %c0_85 = arith.constant 0 : index
    %c0_86 = arith.constant 0 : index
    %82 = vector.load %arg6[%c0_83, %c0_84, %c0_85, %c0_86] : memref<1x1x2x128xf32, #tpu.memory_space<vmem>>, vector<1x1x1x128xf32>
    %83 = vector.shape_cast %82 : vector<1x1x1x128xf32> to vector<1x128xf32>
    %84 = vector.shape_cast %81 : vector<1x128xf32> to vector<1x1x1x128xf32>
    tpu.vector_store %arg6[%c0_83, %c0_84, %c0_85, %c0_86], %84 {strides = array<i32>} : memref<1x1x2x128xf32, #tpu.memory_space<vmem>>, vector<1x1x1x128xf32>,
    %85 = arith.mulf %79, %79 : vector<256x128xf32>
    %cst_87 = arith.constant dense<0.000000e+00> : vector<128xf32>
    %86 = vector.multi_reduction <add>, %85, %cst_87 [0] : vector<256x128xf32> to vector<128xf32>
    %87 = vector.shape_cast %86 : vector<128xf32> to vector<1x128xf32>
    %c0_88 = arith.constant 0 : index
    %c0_89 = arith.constant 0 : index
    %c1_90 = arith.constant 1 : index
    %c0_91 = arith.constant 0 : index
    %88 = vector.load %arg6[%c0_88, %c0_89, %c1_90, %c0_91] : memref<1x1x2x128xf32, #tpu.memory_space<vmem>>, vector<1x1x1x128xf32>
    %89 = vector.shape_cast %88 : vector<1x1x1x128xf32> to vector<1x128xf32>
    %90 = vector.shape_cast %87 : vector<1x128xf32> to vector<1x1x1x128xf32>
    tpu.vector_store %arg6[%c0_88, %c0_89, %c1_90, %c0_91], %90 {strides = array<i32>} : memref<1x1x2x128xf32, #tpu.memory_space<vmem>>, vector<1x1x1x128xf32>,
    return
  }
  func.func @transform_0(%arg0: i32, %arg1: i32) -> (i32, i32, i32, i32) {
    %c0_i32 = arith.constant 0 : i32
    %c0_i32_0 = arith.constant 0 : i32
    %c0_i32_1 = arith.constant 0 : i32
    return %arg0, %arg1, %c0_i32, %c0_i32_0 : i32, i32, i32, i32
  }
  func.func @transform_1(%arg0: i32, %arg1: i32) -> (i32, i32, i32, i32) {
    %c1_i32 = arith.constant 1 : i32
    %0 = arith.addi %arg1, %c1_i32 : i32
    %c8_i32 = arith.constant 8 : i32
    %1 = arith.muli %0, %c8_i32 : i32
    %c0_i32 = arith.constant 0 : i32
    %c0_i32_0 = arith.constant 0 : i32
    %c0_i32_1 = arith.constant 0 : i32
    return %arg0, %1, %c0_i32, %c0_i32_0 : i32, i32, i32, i32
  }
  func.func @transform_2(%arg0: i32, %arg1: i32) -> (i32, i32, i32) {
    %c0_i32 = arith.constant 0 : i32
    %c0_i32_0 = arith.constant 0 : i32
    %c0_i32_1 = arith.constant 0 : i32
    %c0_i32_2 = arith.constant 0 : i32
    return %c0_i32, %c0_i32_0, %c0_i32_1 : i32, i32, i32
  }
  func.func @transform_3(%arg0: i32, %arg1: i32) -> (i32, i32, i32, i32) {
    %c0_i32 = arith.constant 0 : i32
    %c0_i32_0 = arith.constant 0 : i32
    %c0_i32_1 = arith.constant 0 : i32
    return %arg0, %arg1, %c0_i32, %c0_i32_0 : i32, i32, i32, i32
  }
  func.func @transform_4(%arg0: i32, %arg1: i32) -> (i32, i32, i32, i32) {
    %c0_i32 = arith.constant 0 : i32
    %c0_i32_0 = arith.constant 0 : i32
    %c0_i32_1 = arith.constant 0 : i32
    return %arg0, %arg1, %c0_i32, %c0_i32_0 : i32, i32, i32, i32
  }
}

</mosaic_0001>

<llo_original>
// kernel: conv2d_batch_leaky.1
$region0: #{conv2d_batch_leaky.1}
  #allocation0 [shape = 'u32[]', space=smem, size = 0x4, offset = 0x4, fixed_abs, tag = 'smem constant byte address 0x4 - core index']
  #allocation1 [shape = 'u32[144,128]{1,0:T(1,128)}', space=vmem, size = 0x12000, scoped, tag = 'internal scratch']
  #allocation2 [shape = 'bf16[1,18,18,4]{3,2,1,0:T(8,128)(2,1)}', space=vmem, size = 0x1b000, scoped, tag = 'scratch operand']
  %s0 = inlined_call_operand.vmem [shape: bf16[2,18,18,4], index: 0, kind: input, shape index: {}, may-alias: {0,1}]
  %s1 = inlined_call_operand.vmem [shape: bf16[2,18,18,4], index: 1, kind: input, shape index: {}, may-alias: {0,1}]
  %s2 = inlined_call_operand.vmem [shape: bf16[9,4,128], index: 2, kind: input, shape index: {}]
  %s3 = inlined_call_operand.vmem [shape: bf16[2,16,16,128], index: 3, kind: output, shape index: {0}]
  %s4 = inlined_call_operand.vmem [shape: f32[2,1,2,128], index: 4, kind: output, shape index: {1}]
  %5 = xla_tuple %s3, %s4
  %s6 = sld [smem:[#allocation0]]
  $region53: #{conv2d_batch_leaky.1} parent=0
    _
  %s8 = ssub.s32 1, %s6
  %s9 = scalar_select 0, %s8, %s6
  loop: start=0, step=1, limit=4
  $region2: #{conv2d_batch_leaky.1} parent=0 // loop_pre_header
    _
  $region3: #{conv2d_batch_leaky.1} parent=0 // loop_header
    %s11 = sphi 0, %s15
    %p12 = scmp.ge.s32.totalorder %s11, 4
    %s18 = sphi 0, %s30
    %s19 = sphi 0, %s26
    %s20 = sphi 0, %s18
    %s21 = sphi 0, %s19
    %s22 = sphi 0, %s20
    %s23 = sphi 0, %s21
    %s35 = sphi 0, %s37
    %s38 = sphi 0, %s35
    %s39 = sphi 0, %s38
    %s55 = sphi 0, %s39
    %s67 = sphi 0, %s69
    %s70 = sphi 0, %s67
    %s71 = sphi 0, %s70
    %s87 = sphi 0, %s71
    %s91 = sphi 0, %s91
    %s93 = sphi 0, %s91
    %s94 = sphi 0, %s93
    %s108 = sphi 0, %s94
    %s116 = sphi 0, %s118
    %s119 = sphi 0, %s116
    %s120 = sphi 0, %s119
    %s136 = sphi 0, %s120
    %s144 = sphi 0, %s146
    %s147 = sphi 0, %s144
    %s148 = sphi 0, %s147
    %s164 = sphi 0, %s148
  $region4: #{conv2d_batch_leaky.1} parent=0 // loop_header_branch
    %14 = sbr.rel (%p12) target = $region8
  $region5: #{conv2d_batch_leaky.1} parent=0 // loop_body
    %s16 = ssub.s32 %s11, 1
    %s17 = ssub.s32 %s11, 2
    %s24 = sadd.s32 1, %s19
    %p25 = scmp.ge.s32.totalorder %s24, 1
    %s26 = scalar_select %p25, 0, %s24
    %s27 = sadd.s32 1, %s18
    %s28 = scalar_select %p25, %s27, %s18
    %p29 = scmp.ge.s32.totalorder %s28, 2
    %s30 = scalar_select %p29, 0, %s28
    %s31 = ssub.s32 %s18, %s30
    %s32 = ssub.s32 %s19, %s26
    %s33 = sor.u32 %s31, %s32
    %p34 = scmp.eq.s32.totalorder %s33, 0
    %s36 = sadd.s32 %s35, 1
    %s37 = scalar_select %p34, %s35, %s36
    %p40 = pneg %p34
    %p41 = scmp.eq.s32.totalorder %s11, 1
    %p42 = por %p40, %p41
    %p43 = scmp.ne.s32.totalorder %s35, %s38
    %p44 = scmp.eq.s32.totalorder %s11, 0
    %p45 = por %p43, %p44
    %p46 = scmp.ne.s32.totalorder %s35, %s38
    %p47 = scmp.eq.s32.totalorder %s16, 1
    %p48 = por %p46, %p47
    %p49 = scmp.ne.s32.totalorder %s38, %s39
    %p50 = scmp.eq.s32.totalorder %s16, 0
    %p51 = por %p49, %p50
    %p52 = scmp.ne.s32.totalorder %s38, %s39
    %p53 = scmp.eq.s32.totalorder %s17, 1
    %p54 = por %p52, %p53
    %p56 = scmp.ne.s32.totalorder %s39, %s55
    %p57 = scmp.eq.s32.totalorder %s17, 0
    %p58 = por %p56, %p57
    %s59 = sadd.s32 %s19, 1
    %s60 = smul.u32 %s59, 8
    %s61 = sadd.s32 %s26, 1
    %s62 = smul.u32 %s61, 8
    %s63 = ssub.s32 %s18, %s30
    %s64 = ssub.s32 %s60, %s62
    %s65 = sor.u32 %s63, %s64
    %p66 = scmp.eq.s32.totalorder %s65, 0
    %s68 = sadd.s32 %s67, 1
    %s69 = scalar_select %p66, %s67, %s68
    %p72 = pneg %p66
    %p73 = scmp.eq.s32.totalorder %s11, 1
    %p74 = por %p72, %p73
    %p75 = scmp.ne.s32.totalorder %s67, %s70
    %p76 = scmp.eq.s32.totalorder %s11, 0
    %p77 = por %p75, %p76
    %p78 = scmp.ne.s32.totalorder %s67, %s70
    %p79 = scmp.eq.s32.totalorder %s16, 1
    %p80 = por %p78, %p79
    %p81 = scmp.ne.s32.totalorder %s70, %s71
    %p82 = scmp.eq.s32.totalorder %s16, 0
    %p83 = por %p81, %p82
    %p84 = scmp.ne.s32.totalorder %s70, %s71
    %p85 = scmp.eq.s32.totalorder %s17, 1
    %p86 = por %p84, %p85
    %p88 = scmp.ne.s32.totalorder %s71, %s87
    %p89 = scmp.eq.s32.totalorder %s17, 0
    %p90 = por %p88, %p89
    %s92 = sadd.s32 %s91, 1
    %p95 = scmp.eq.s32.totalorder %s11, 1
    %p96 = scmp.ne.s32.totalorder %s91, %s93
    %p97 = scmp.eq.s32.totalorder %s11, 0
    %p98 = por %p96, %p97
    %p99 = scmp.ne.s32.totalorder %s91, %s93
    %p100 = scmp.eq.s32.totalorder %s16, 1
    %p101 = por %p99, %p100
    %p102 = scmp.ne.s32.totalorder %s93, %s94
    %p103 = scmp.eq.s32.totalorder %s16, 0
    %p104 = por %p102, %p103
    %p105 = scmp.ne.s32.totalorder %s93, %s94
    %p106 = scmp.eq.s32.totalorder %s17, 1
    %p107 = por %p105, %p106
    %p109 = scmp.ne.s32.totalorder %s94, %s108
    %p110 = scmp.eq.s32.totalorder %s17, 0
    %p111 = por %p109, %p110
    %s112 = ssub.s32 %s18, %s30
    %s113 = ssub.s32 %s19, %s26
    %s114 = sor.u32 %s112, %s113
    %p115 = scmp.eq.s32.totalorder %s114, 0
    %s117 = sadd.s32 %s116, 1
    %s118 = scalar_select %p115, %s116, %s117
    %p121 = pneg %p115
    %p122 = scmp.eq.s32.totalorder %s11, 1
    %p123 = por %p121, %p122
    %p124 = scmp.ne.s32.totalorder %s116, %s119
    %p125 = scmp.eq.s32.totalorder %s11, 0
    %p126 = por %p124, %p125
    %p127 = scmp.ne.s32.totalorder %s116, %s119
    %p128 = scmp.eq.s32.totalorder %s16, 1
    %p129 = por %p127, %p128
    %p130 = scmp.ne.s32.totalorder %s119, %s120
    %p131 = scmp.eq.s32.totalorder %s16, 0
    %p132 = por %p130, %p131
    %p133 = scmp.ne.s32.totalorder %s119, %s120
    %p134 = scmp.eq.s32.totalorder %s17, 1
    %p135 = por %p133, %p134
    %p137 = scmp.ne.s32.totalorder %s120, %s136
    %p138 = scmp.eq.s32.totalorder %s17, 0
    %p139 = por %p137, %p138
    %s140 = ssub.s32 %s18, %s30
    %s141 = ssub.s32 %s19, %s26
    %s142 = sor.u32 %s140, %s141
    %p143 = scmp.eq.s32.totalorder %s142, 0
    %s145 = sadd.s32 %s144, 1
    %s146 = scalar_select %p143, %s144, %s145
    %p149 = pneg %p143
    %p150 = scmp.eq.s32.totalorder %s11, 1
    %p151 = por %p149, %p150
    %p152 = scmp.ne.s32.totalorder %s144, %s147
    %p153 = scmp.eq.s32.totalorder %s11, 0
    %p154 = por %p152, %p153
    %p155 = scmp.ne.s32.totalorder %s144, %s147
    %p156 = scmp.eq.s32.totalorder %s16, 1
    %p157 = por %p155, %p156
    %p158 = scmp.ne.s32.totalorder %s147, %s148
    %p159 = scmp.eq.s32.totalorder %s16, 0
    %p160 = por %p158, %p159
    %p161 = scmp.ne.s32.totalorder %s147, %s148
    %p162 = scmp.eq.s32.totalorder %s17, 1
    %p163 = por %p161, %p162
    %p165 = scmp.ne.s32.totalorder %s148, %s164
    %p166 = scmp.eq.s32.totalorder %s17, 0
    %p167 = por %p165, %p166
    %p168 = scmp.le.s32.totalorder 1, %s11
    %p169 = scmp.lt.s32.totalorder %s11, 3
    %p170 = pnand %p168, %p169
    %p171 = pneg %p170
    // Predicated region
    $region9: #{conv2d_batch_leaky.1} parent=5 // pred_check
      _
    $region10: #{conv2d_batch_leaky.1} parent=5 // pred_check_branch
      %173 = sbr.rel (%p170) target = $region12
    $region11: #{conv2d_batch_leaky.1} parent=5 // pred_region
      %s174 = ssub.s32 %s11, 1
      // Predicated region
      $region13: #{conv2d_batch_leaky.1} parent=11 // pred_check
        %p175 = pneg %p104
      $region14: #{conv2d_batch_leaky.1} parent=11 // pred_check_branch
        %177 = sbr.rel (%p175) target = $region16
      $region15: #{conv2d_batch_leaky.1} parent=11 // pred_region
        _
      $region16: #{conv2d_batch_leaky.1} parent=11 // pred_fallthru
        _
    $region12: #{conv2d_batch_leaky.1} parent=5 // pred_fallthru
      _
    %p178 = scmp.lt.s32.totalorder %s11, 2
    // Predicated region
    $region17: #{conv2d_batch_leaky.1} parent=5 // pred_check
      %p179 = pneg %p178
    $region18: #{conv2d_batch_leaky.1} parent=5 // pred_check_branch
      %181 = sbr.rel (%p179) target = $region20
    $region19: #{conv2d_batch_leaky.1} parent=5 // pred_region
      // Predicated region
      $region21: #{conv2d_batch_leaky.1} parent=19 // pred_check
        %p182 = pneg %p45
      $region22: #{conv2d_batch_leaky.1} parent=19 // pred_check_branch
        %184 = sbr.rel (%p182) target = $region24
      $region23: #{conv2d_batch_leaky.1} parent=19 // pred_region
        %s185 = smul.u32 16, %s19
        %s186 = ssub.s32 18, %s185
        %p187 = scmp.lt.s32.totalorder %s186, 16
        %s188 = scalar_select %p187, %s186, 16
        %s189 = smul.u32 64, %s188
        %s190 = smul.u32 %s189, 3
        %p191 = scmp.lt.s32.totalorder %s18, 1
        %s192 = scalar_select %p191, %s18, 1
        %p193 = scmp.lt.s32.totalorder %s185, 17
        %s194 = scalar_select %p193, %s185, 17
        %s195 = smul.addr %s194, 3
        %s196 = smul.addr %s192, 54
        %s197 = sadd.s32 %s195, %s196
        %s198 = smul.addr %s197, 4
        %s199 = scalar_lea.vmem %s0, %s198
        %s200 = smul.u32 16, %s19
        %s201 = ssub.s32 18, %s200
        %p202 = scmp.lt.s32.totalorder %s201, 16
        %s203 = scalar_select %p202, %s201, 16
        %s204 = smul.u32 64, %s203
        %s205 = smul.u32 %s204, 3
      $region24: #{conv2d_batch_leaky.1} parent=19 // pred_fallthru
        _
      // Predicated region
      $region25: #{conv2d_batch_leaky.1} parent=19 // pred_check
        %p206 = pneg %p77
      $region26: #{conv2d_batch_leaky.1} parent=19 // pred_check_branch
        %208 = sbr.rel (%p206) target = $region28
      $region27: #{conv2d_batch_leaky.1} parent=19 // pred_region
        %s209 = sadd.s32 %s19, 1
        %s210 = smul.u32 %s209, 8
        %s211 = smul.u32 2, %s210
        %p212 = scmp.lt.s32.totalorder %s18, 1
        %s213 = scalar_select %p212, %s18, 1
        %p214 = scmp.lt.s32.totalorder %s211, 17
        %s215 = scalar_select %p214, %s211, 17
        %s216 = smul.addr %s215, 3
        %s217 = smul.addr %s213, 54
        %s218 = sadd.s32 %s216, %s217
        %s219 = smul.addr %s218, 4
        %s220 = scalar_lea.vmem %s1, %s219
        %s221 = sadd.s32 %s19, 1
        %s222 = smul.u32 %s221, 8
        %s223 = smul.u32 2, %s222
      $region28: #{conv2d_batch_leaky.1} parent=19 // pred_fallthru
        _
    $region20: #{conv2d_batch_leaky.1} parent=5 // pred_fallthru
      _
    %p224 = scmp.le.s32.totalorder 1, %s11
    %p225 = scmp.lt.s32.totalorder %s11, 3
    %p226 = pnand %p224, %p225
    %p227 = pneg %p226
    // Predicated region
    $region29: #{conv2d_batch_leaky.1} parent=5 // pred_check
      _
    $region30: #{conv2d_batch_leaky.1} parent=5 // pred_check_branch
      %229 = sbr.rel (%p226) target = $region32
    $region31: #{conv2d_batch_leaky.1} parent=5 // pred_region
      %s230 = ssub.s32 %s11, 1
      %s231 = smul.u32 16, %s21
      %s232 = ssub.s32 18, %s231
      %p233 = scmp.lt.s32.totalorder %s232, 16
      %s234 = scalar_select %p233, %s232, 16
      %s235 = smul.u32 64, %s234
      %s236 = smul.u32 %s235, 3
      %p237 = scmp.lt.s32.totalorder %s20, 1
      %s238 = scalar_select %p237, %s20, 1
      %p239 = scmp.lt.s32.totalorder %s231, 17
      %s240 = scalar_select %p239, %s231, 17
      %s241 = smul.addr %s240, 3
      %s242 = smul.addr %s238, 54
      %s243 = sadd.s32 %s241, %s242
      %s244 = smul.addr %s243, 4
      %s245 = scalar_lea.vmem %s0, %s244
      %p246 = pneg %p51
      %p247 = pneg %p48
      %s248 = sadd.s32 %s21, 1
      %s249 = smul.u32 %s248, 8
      %s250 = smul.u32 2, %s249
      %p251 = scmp.lt.s32.totalorder %s20, 1
      %s252 = scalar_select %p251, %s20, 1
      %p253 = scmp.lt.s32.totalorder %s250, 17
      %s254 = scalar_select %p253, %s250, 17
      %s255 = smul.addr %s254, 3
      %s256 = smul.addr %s252, 54
      %s257 = sadd.s32 %s255, %s256
      %s258 = smul.addr %s257, 4
      %s259 = scalar_lea.vmem %s1, %s258
      %p260 = pneg %p83
      %p261 = pneg %p80
      %p262 = pneg %p104
      %p263 = pneg %p101
      %p264 = pneg %p132
      %p265 = pneg %p129
      %s266 = smul.u32 16, %s21
      %p267 = scmp.lt.s32.totalorder %s20, 1
      %s268 = scalar_select %p267, %s20, 1
      %p269 = scmp.lt.s32.totalorder %s266, 15
      %s270 = scalar_select %p269, %s266, 15
      %s271 = smul.addr %s270, 2
      %s272 = smul.addr %s268, 32
      %s273 = sadd.s32 %s271, %s272
      %s274 = smul.addr %s273, 4
      %s275 = scalar_lea.vmem %s3, %s274
      %p276 = pneg %p160
      %p277 = pneg %p157
      %p278 = scmp.lt.s32.totalorder %s20, 1
      %s279 = scalar_select %p278, %s20, 1
      %p280 = scmp.lt.s32.totalorder %s21, 0
      %s281 = scalar_select %p280, %s21, 0
      %s282 = sadd.s32 %s281, %s279
      %s283 = smul.addr %s282, 2
      %s284 = scalar_lea.vmem %s4, %s283
      %s285 = smul.u32 16, %s21
      %s286 = ssub.s32 18, %s285
      %p287 = scmp.lt.s32.totalorder %s286, 16
      %s288 = scalar_select %p287, %s286, 16
      %s289 = smul.u32 64, %s288
      %s290 = smul.u32 %s289, 3
      %p291 = scmp.lt.s32.totalorder %s20, 1
      %s292 = scalar_select %p291, %s20, 1
      %p293 = scmp.lt.s32.totalorder %s285, 17
      %s294 = scalar_select %p293, %s285, 17
      %s295 = smul.addr %s294, 3
      %s296 = smul.addr %s292, 54
      %s297 = sadd.s32 %s295, %s296
      %s298 = smul.addr %s297, 4
      %s299 = scalar_lea.vmem %s0, %s298
      %s300 = smul.u32 16, %s21
      %s301 = ssub.s32 18, %s300
      %p302 = scmp.lt.s32.totalorder %s301, 16
      %s303 = scalar_select %p302, %s301, 16
      %s304 = smul.u32 64, %s303
      %s305 = smul.u32 %s304, 3
      %s306 = sadd.s32 %s21, 1
      %s307 = smul.u32 %s306, 8
      %s308 = smul.u32 2, %s307
      %p309 = scmp.lt.s32.totalorder %s20, 1
      %s310 = scalar_select %p309, %s20, 1
      %p311 = scmp.lt.s32.totalorder %s308, 17
      %s312 = scalar_select %p311, %s308, 17
      %s313 = smul.addr %s312, 3
      %s314 = smul.addr %s310, 54
      %s315 = sadd.s32 %s313, %s314
      %s316 = smul.addr %s315, 4
      %s317 = scalar_lea.vmem %s1, %s316
      %s318 = sadd.s32 %s21, 1
      %s319 = smul.u32 %s318, 8
      %s320 = smul.u32 2, %s319
      %s321 = smul.u32 16, %s21
      %p322 = scmp.lt.s32.totalorder %s20, 1
      %s323 = scalar_select %p322, %s20, 1
      %p324 = scmp.lt.s32.totalorder %s321, 15
      %s325 = scalar_select %p324, %s321, 15
      %s326 = smul.addr %s325, 2
      %s327 = smul.addr %s323, 32
      %s328 = sadd.s32 %s326, %s327
      %s329 = smul.addr %s328, 4
      %s330 = scalar_lea.vmem %s3, %s329
      %s331 = smul.u32 16, %s21
      %p332 = scmp.lt.s32.totalorder %s20, 1
      %s333 = scalar_select %p332, %s20, 1
      %p334 = scmp.lt.s32.totalorder %s21, 0
      %s335 = scalar_select %p334, %s21, 0
      %s336 = sadd.s32 %s335, %s333
      %s337 = smul.addr %s336, 2
      %s338 = scalar_lea.vmem %s4, %s337
      %v340 = vld [vmem:[%s299] sm:$0xf]
      %v341 = vld [vmem:[%s299 + $0x4] sm:$0xf]
      %v342 = vld [vmem:[%s299 + $0x8] sm:$0x1]
      %v343 = vld [vmem:[%s299 + $0xc] sm:$0xf]
      %v344 = vld [vmem:[%s299 + $0x10] sm:$0xf]
      %v345 = vld [vmem:[%s299 + $0x14] sm:$0x1]
      %v346 = vld [vmem:[%s299 + $0x18] sm:$0xf]
      %v347 = vld [vmem:[%s299 + $0x1c] sm:$0xf]
      %v348 = vld [vmem:[%s299 + $0x20] sm:$0x1]
      %v349 = vld [vmem:[%s299 + $0x24] sm:$0xf]
      %v350 = vld [vmem:[%s299 + $0x28] sm:$0xf]
      %v351 = vld [vmem:[%s299 + $0x2c] sm:$0x1]
      %v352 = vld [vmem:[%s299 + $0x30] sm:$0xf]
      %v353 = vld [vmem:[%s299 + $0x34] sm:$0xf]
      %v354 = vld [vmem:[%s299 + $0x38] sm:$0x1]
      %v355 = vld [vmem:[%s299 + $0x3c] sm:$0xf]
      %v356 = vld [vmem:[%s299 + $0x40] sm:$0xf]
      %v357 = vld [vmem:[%s299 + $0x44] sm:$0x1]
      %v358 = vld [vmem:[%s299 + $0x48] sm:$0xf]
      %v359 = vld [vmem:[%s299 + $0x4c] sm:$0xf]
      %v360 = vld [vmem:[%s299 + $0x50] sm:$0x1]
      %v361 = vld [vmem:[%s299 + $0x54] sm:$0xf]
      %v362 = vld [vmem:[%s299 + $0x58] sm:$0xf]
      %v363 = vld [vmem:[%s299 + $0x5c] sm:$0x1]
      %v364 = vld [vmem:[%s299 + $0x60] sm:$0xf]
      %v365 = vld [vmem:[%s299 + $0x64] sm:$0xf]
      %v366 = vld [vmem:[%s299 + $0x68] sm:$0x1]
      %v367 = vld [vmem:[%s299 + $0x6c] sm:$0xf]
      %v368 = vld [vmem:[%s299 + $0x70] sm:$0xf]
      %v369 = vld [vmem:[%s299 + $0x74] sm:$0x1]
      %v370 = vld [vmem:[%s299 + $0x78] sm:$0xf]
      %v371 = vld [vmem:[%s299 + $0x7c] sm:$0xf]
      %v372 = vld [vmem:[%s299 + $0x80] sm:$0x1]
      %v373 = vld [vmem:[%s299 + $0x84] sm:$0xf]
      %v374 = vld [vmem:[%s299 + $0x88] sm:$0xf]
      %v375 = vld [vmem:[%s299 + $0x8c] sm:$0x1]
      %v376 = vld [vmem:[%s299 + $0x90] sm:$0xf]
      %v377 = vld [vmem:[%s299 + $0x94] sm:$0xf]
      %v378 = vld [vmem:[%s299 + $0x98] sm:$0x1]
      %v379 = vld [vmem:[%s299 + $0x9c] sm:$0xf]
      %v380 = vld [vmem:[%s299 + $0xa0] sm:$0xf]
      %v381 = vld [vmem:[%s299 + $0xa4] sm:$0x1]
      %v382 = vld [vmem:[%s299 + $0xa8] sm:$0xf]
      %v383 = vld [vmem:[%s299 + $0xac] sm:$0xf]
      %v384 = vld [vmem:[%s299 + $0xb0] sm:$0x1]
      %v385 = vld [vmem:[%s299 + $0xb4] sm:$0xf]
      %v386 = vld [vmem:[%s299 + $0xb8] sm:$0xf]
      %v387 = vld [vmem:[%s299 + $0xbc] sm:$0x1]
      %vm388 = vcmask 27648
      %389 = vst.msk [vmem:[#allocation2] sm:$0xf] %vm388, %v340
      %390 = vst.msk [vmem:[#allocation2 + $0x4] sm:$0xf] %vm388, %v341
      %vm391 = vcmask 24576
      %392 = vst.msk [vmem:[#allocation2 + $0x8] sm:$0x1] %vm391, %v342
      %393 = vst.msk [vmem:[#allocation2 + $0xc] sm:$0xf] %vm388, %v343
      %394 = vst.msk [vmem:[#allocation2 + $0x10] sm:$0xf] %vm388, %v344
      %395 = vst.msk [vmem:[#allocation2 + $0x14] sm:$0x1] %vm391, %v345
      %396 = vst.msk [vmem:[#allocation2 + $0x18] sm:$0xf] %vm388, %v346
      %397 = vst.msk [vmem:[#allocation2 + $0x1c] sm:$0xf] %vm388, %v347
      %398 = vst.msk [vmem:[#allocation2 + $0x20] sm:$0x1] %vm391, %v348
      %399 = vst.msk [vmem:[#allocation2 + $0x24] sm:$0xf] %vm388, %v349
      %400 = vst.msk [vmem:[#allocation2 + $0x28] sm:$0xf] %vm388, %v350
      %401 = vst.msk [vmem:[#allocation2 + $0x2c] sm:$0x1] %vm391, %v351
      %402 = vst.msk [vmem:[#allocation2 + $0x30] sm:$0xf] %vm388, %v352
      %403 = vst.msk [vmem:[#allocation2 + $0x34] sm:$0xf] %vm388, %v353
      %404 = vst.msk [vmem:[#allocation2 + $0x38] sm:$0x1] %vm391, %v354
      %405 = vst.msk [vmem:[#allocation2 + $0x3c] sm:$0xf] %vm388, %v355
      %406 = vst.msk [vmem:[#allocation2 + $0x40] sm:$0xf] %vm388, %v356
      %407 = vst.msk [vmem:[#allocation2 + $0x44] sm:$0x1] %vm391, %v357
      %408 = vst.msk [vmem:[#allocation2 + $0x48] sm:$0xf] %vm388, %v358
      %409 = vst.msk [vmem:[#allocation2 + $0x4c] sm:$0xf] %vm388, %v359
      %410 = vst.msk [vmem:[#allocation2 + $0x50] sm:$0x1] %vm391, %v360
      %411 = vst.msk [vmem:[#allocation2 + $0x54] sm:$0xf] %vm388, %v361
      %412 = vst.msk [vmem:[#allocation2 + $0x58] sm:$0xf] %vm388, %v362
      %413 = vst.msk [vmem:[#allocation2 + $0x5c] sm:$0x1] %vm391, %v363
      %414 = vst.msk [vmem:[#allocation2 + $0x60] sm:$0xf] %vm388, %v364
      %415 = vst.msk [vmem:[#allocation2 + $0x64] sm:$0xf] %vm388, %v365
      %416 = vst.msk [vmem:[#allocation2 + $0x68] sm:$0x1] %vm391, %v366
      %417 = vst.msk [vmem:[#allocation2 + $0x6c] sm:$0xf] %vm388, %v367
      %418 = vst.msk [vmem:[#allocation2 + $0x70] sm:$0xf] %vm388, %v368
      %419 = vst.msk [vmem:[#allocation2 + $0x74] sm:$0x1] %vm391, %v369
      %420 = vst.msk [vmem:[#allocation2 + $0x78] sm:$0xf] %vm388, %v370
      %421 = vst.msk [vmem:[#allocation2 + $0x7c] sm:$0xf] %vm388, %v371
      %422 = vst.msk [vmem:[#allocation2 + $0x80] sm:$0x1] %vm391, %v372
      %423 = vst.msk [vmem:[#allocation2 + $0x84] sm:$0xf] %vm388, %v373
      %424 = vst.msk [vmem:[#allocation2 + $0x88] sm:$0xf] %vm388, %v374
      %425 = vst.msk [vmem:[#allocation2 + $0x8c] sm:$0x1] %vm391, %v375
      %426 = vst.msk [vmem:[#allocation2 + $0x90] sm:$0xf] %vm388, %v376
      %427 = vst.msk [vmem:[#allocation2 + $0x94] sm:$0xf] %vm388, %v377
      %428 = vst.msk [vmem:[#allocation2 + $0x98] sm:$0x1] %vm391, %v378
      %429 = vst.msk [vmem:[#allocation2 + $0x9c] sm:$0xf] %vm388, %v379
      %430 = vst.msk [vmem:[#allocation2 + $0xa0] sm:$0xf] %vm388, %v380
      %431 = vst.msk [vmem:[#allocation2 + $0xa4] sm:$0x1] %vm391, %v381
      %432 = vst.msk [vmem:[#allocation2 + $0xa8] sm:$0xf] %vm388, %v382
      %433 = vst.msk [vmem:[#allocation2 + $0xac] sm:$0xf] %vm388, %v383
      %434 = vst.msk [vmem:[#allocation2 + $0xb0] sm:$0x1] %vm391, %v384
      %435 = vst.msk [vmem:[#allocation2 + $0xb4] sm:$0xf] %vm388, %v385
      %436 = vst.msk [vmem:[#allocation2 + $0xb8] sm:$0xf] %vm388, %v386
      %437 = vst.msk [vmem:[#allocation2 + $0xbc] sm:$0x1] %vm391, %v387
      %v438 = vld [vmem:[%s317] sm:$0xf]
      %v439 = vld [vmem:[%s317 + $0x4] sm:$0xf]
      %v440 = vld [vmem:[%s317 + $0x8] sm:$0x1]
      %v441 = vld [vmem:[%s317 + $0xc] sm:$0xf]
      %v442 = vld [vmem:[%s317 + $0x10] sm:$0xf]
      %v443 = vld [vmem:[%s317 + $0x14] sm:$0x1]
      %s444 = scalar_lea.vmem [#allocation2], 192
      %445 = vst.msk [vmem:[%s444] sm:$0xf] %vm388, %v438
      %446 = vst.msk [vmem:[%s444 + $0x4] sm:$0xf] %vm388, %v439
      %447 = vst.msk [vmem:[%s444 + $0x8] sm:$0x1] %vm391, %v440
      %448 = vst.msk [vmem:[%s444 + $0xc] sm:$0xf] %vm388, %v441
      %449 = vst.msk [vmem:[%s444 + $0x10] sm:$0xf] %vm388, %v442
      %450 = vst.msk [vmem:[%s444 + $0x14] sm:$0x1] %vm391, %v443
      %v451 = vld [vmem:[#allocation2] sm:$0xf]
      %v452 = vld [vmem:[#allocation2 + $0x4] sm:$0xf]
      %v453 = vld [vmem:[#allocation2 + $0xc] sm:$0xf]
      %v454 = vld [vmem:[#allocation2 + $0x10] sm:$0xf]
      %v455 = vld [vmem:[#allocation2 + $0x18] sm:$0xf]
      %v456 = vld [vmem:[#allocation2 + $0x1c] sm:$0xf]
      %v457 = vld [vmem:[#allocation2 + $0x24] sm:$0xf]
      %v458 = vld [vmem:[#allocation2 + $0x28] sm:$0xf]
      %v459 = vld [vmem:[#allocation2 + $0x30] sm:$0xf]
      %v460 = vld [vmem:[#allocation2 + $0x34] sm:$0xf]
      %v461 = vld [vmem:[#allocation2 + $0x3c] sm:$0xf]
      %v462 = vld [vmem:[#allocation2 + $0x40] sm:$0xf]
      %v463 = vld [vmem:[#allocation2 + $0x48] sm:$0xf]
      %v464 = vld [vmem:[#allocation2 + $0x4c] sm:$0xf]
      %v465 = vld [vmem:[#allocation2 + $0x54] sm:$0xf]
      %v466 = vld [vmem:[#allocation2 + $0x58] sm:$0xf]
      %v467 = vld [vmem:[#allocation2 + $0x60] sm:$0xf]
      %v468 = vld [vmem:[#allocation2 + $0x64] sm:$0xf]
      %v469 = vld [vmem:[#allocation2 + $0x6c] sm:$0xf]
      %v470 = vld [vmem:[#allocation2 + $0x70] sm:$0xf]
      %v471 = vld [vmem:[#allocation2 + $0x78] sm:$0xf]
      %v472 = vld [vmem:[#allocation2 + $0x7c] sm:$0xf]
      %v473 = vld [vmem:[#allocation2 + $0x84] sm:$0xf]
      %v474 = vld [vmem:[#allocation2 + $0x88] sm:$0xf]
      %v475 = vld [vmem:[#allocation2 + $0x90] sm:$0xf]
      %v476 = vld [vmem:[#allocation2 + $0x94] sm:$0xf]
      %v477 = vld [vmem:[#allocation2 + $0x9c] sm:$0xf]
      %v478 = vld [vmem:[#allocation2 + $0xa0] sm:$0xf]
      %v479 = vld [vmem:[#allocation2 + $0xa8] sm:$0xf]
      %v480 = vld [vmem:[#allocation2 + $0xac] sm:$0xf]
      %v481 = vld [vmem:[#allocation2 + $0xb4] sm:$0xf]
      %v482 = vld [vmem:[#allocation2 + $0xb8] sm:$0xf]
      %v483 = vld [vmem:[%s2] sm:$0x3]
      %v484 = vld [vmem:[#allocation2 + $0x8] sm:$0x1]
      %v485 = vld [vmem:[#allocation2 + $0x14] sm:$0x1]
      %v486 = vld [vmem:[#allocation2 + $0x20] sm:$0x1]
      %v487 = vld [vmem:[#allocation2 + $0x2c] sm:$0x1]
      %v488 = vld [vmem:[#allocation2 + $0x38] sm:$0x1]
      %v489 = vld [vmem:[#allocation2 + $0x44] sm:$0x1]
      %v490 = vld [vmem:[#allocation2 + $0x50] sm:$0x1]
      %v491 = vld [vmem:[#allocation2 + $0x5c] sm:$0x1]
      %v492 = vld [vmem:[#allocation2 + $0x68] sm:$0x1]
      %v493 = vld [vmem:[#allocation2 + $0x74] sm:$0x1]
      %v494 = vld [vmem:[#allocation2 + $0x80] sm:$0x1]
      %v495 = vld [vmem:[#allocation2 + $0x8c] sm:$0x1]
      %v496 = vld [vmem:[#allocation2 + $0x98] sm:$0x1]
      %v497 = vld [vmem:[#allocation2 + $0xa4] sm:$0x1]
      %v498 = vld [vmem:[#allocation2 + $0xb0] sm:$0x1]
      %v499 = vld [vmem:[#allocation2 + $0xbc] sm:$0x1]
      %vm500 = vsmask.f32 3328
      %vm501 = vsmask.f32 7440
      %vm502 = vmor %vm500, %vm501
      %v504 = vshrl.u32 %v451, 16
      %v506 = vrot.slane %v504, 4
      %v507 = vshll.u32 %v451, 16
      %v509 = vrot.slane %v507, 5
      %v510 = vor.u32 %v506, %v509
      %v511 = vrot.slane %v510, 4
      %v513 = vshll.u32 %v452, 16
      %v515 = vrot.slane %v513, 5
      %v516 = vsel %vm502, %v511, %v515
      %v517 = vshrl.u32 %v452, 16
      %v519 = vrot.slane %v517, 4
      %v520 = vor.u32 %v519, %v515
      %v521 = vrot.slane %v520, 4
      %v523 = vshll.u32 %v484, 16
      %v525 = vrot.slane %v523, 5
      %v526 = vsel %vm502, %v521, %v525
      %v528 = vshrl.u32 %v453, 16
      %v530 = vrot.slane %v528, 4
      %v531 = vshll.u32 %v453, 16
      %v533 = vrot.slane %v531, 5
      %v534 = vor.u32 %v530, %v533
      %v535 = vrot.slane %v534, 4
      %v537 = vshll.u32 %v454, 16
      %v539 = vrot.slane %v537, 5
      %v540 = vsel %vm502, %v535, %v539
      %v541 = vshrl.u32 %v454, 16
      %v543 = vrot.slane %v541, 4
      %v544 = vor.u32 %v543, %v539
      %v545 = vrot.slane %v544, 4
      %v547 = vshll.u32 %v485, 16
      %v549 = vrot.slane %v547, 5
      %v550 = vsel %vm502, %v545, %v549
      %v552 = vshrl.u32 %v455, 16
      %v554 = vrot.slane %v552, 4
      %v555 = vshll.u32 %v455, 16
      %v557 = vrot.slane %v555, 5
      %v558 = vor.u32 %v554, %v557
      %v559 = vrot.slane %v558, 4
      %v561 = vshll.u32 %v456, 16
      %v563 = vrot.slane %v561, 5
      %v564 = vsel %vm502, %v559, %v563
      %v565 = vshrl.u32 %v456, 16
      %v567 = vrot.slane %v565, 4
      %v568 = vor.u32 %v567, %v563
      %v569 = vrot.slane %v568, 4
      %v571 = vshll.u32 %v486, 16
      %v573 = vrot.slane %v571, 5
      %v574 = vsel %vm502, %v569, %v573
      %v576 = vshrl.u32 %v457, 16
      %v578 = vrot.slane %v576, 4
      %v579 = vshll.u32 %v457, 16
      %v581 = vrot.slane %v579, 5
      %v582 = vor.u32 %v578, %v581
      %v583 = vrot.slane %v582, 4
      %v585 = vshll.u32 %v458, 16
      %v587 = vrot.slane %v585, 5
      %v588 = vsel %vm502, %v583, %v587
      %v589 = vshrl.u32 %v458, 16
      %v591 = vrot.slane %v589, 4
      %v592 = vor.u32 %v591, %v587
      %v593 = vrot.slane %v592, 4
      %v595 = vshll.u32 %v487, 16
      %v597 = vrot.slane %v595, 5
      %v598 = vsel %vm502, %v593, %v597
      %v600 = vshrl.u32 %v459, 16
      %v602 = vrot.slane %v600, 4
      %v603 = vshll.u32 %v459, 16
      %v605 = vrot.slane %v603, 5
      %v606 = vor.u32 %v602, %v605
      %v607 = vrot.slane %v606, 4
      %v609 = vshll.u32 %v460, 16
      %v611 = vrot.slane %v609, 5
      %v612 = vsel %vm502, %v607, %v611
      %v613 = vshrl.u32 %v460, 16
      %v615 = vrot.slane %v613, 4
      %v616 = vor.u32 %v615, %v611
      %v617 = vrot.slane %v616, 4
      %v619 = vshll.u32 %v488, 16
      %v621 = vrot.slane %v619, 5
      %v622 = vsel %vm502, %v617, %v621
      %v624 = vshrl.u32 %v461, 16
      %v626 = vrot.slane %v624, 4
      %v627 = vshll.u32 %v461, 16
      %v629 = vrot.slane %v627, 5
      %v630 = vor.u32 %v626, %v629
      %v631 = vrot.slane %v630, 4
      %v633 = vshll.u32 %v462, 16
      %v635 = vrot.slane %v633, 5
      %v636 = vsel %vm502, %v631, %v635
      %v637 = vshrl.u32 %v462, 16
      %v639 = vrot.slane %v637, 4
      %v640 = vor.u32 %v639, %v635
      %v641 = vrot.slane %v640, 4
      %v643 = vshll.u32 %v489, 16
      %v645 = vrot.slane %v643, 5
      %v646 = vsel %vm502, %v641, %v645
      %v648 = vshrl.u32 %v463, 16
      %v650 = vrot.slane %v648, 4
      %v651 = vshll.u32 %v463, 16
      %v653 = vrot.slane %v651, 5
      %v654 = vor.u32 %v650, %v653
      %v655 = vrot.slane %v654, 4
      %v657 = vshll.u32 %v464, 16
      %v659 = vrot.slane %v657, 5
      %v660 = vsel %vm502, %v655, %v659
      %v661 = vshrl.u32 %v464, 16
      %v663 = vrot.slane %v661, 4
      %v664 = vor.u32 %v663, %v659
      %v665 = vrot.slane %v664, 4
      %v667 = vshll.u32 %v490, 16
      %v669 = vrot.slane %v667, 5
      %v670 = vsel %vm502, %v665, %v669
      %v672 = vshrl.u32 %v465, 16
      %v674 = vrot.slane %v672, 4
      %v675 = vshll.u32 %v465, 16
      %v677 = vrot.slane %v675, 5
      %v678 = vor.u32 %v674, %v677
      %v679 = vrot.slane %v678, 4
      %v681 = vshll.u32 %v466, 16
      %v683 = vrot.slane %v681, 5
      %v684 = vsel %vm502, %v679, %v683
      %v685 = vshrl.u32 %v466, 16
      %v687 = vrot.slane %v685, 4
      %v688 = vor.u32 %v687, %v683
      %v689 = vrot.slane %v688, 4
      %v691 = vshll.u32 %v491, 16
      %v693 = vrot.slane %v691, 5
      %v694 = vsel %vm502, %v689, %v693
      %v696 = vshrl.u32 %v467, 16
      %v698 = vrot.slane %v696, 4
      %v699 = vshll.u32 %v467, 16
      %v701 = vrot.slane %v699, 5
      %v702 = vor.u32 %v698, %v701
      %v703 = vrot.slane %v702, 4
      %v705 = vshll.u32 %v468, 16
      %v707 = vrot.slane %v705, 5
      %v708 = vsel %vm502, %v703, %v707
      %v709 = vshrl.u32 %v468, 16
      %v711 = vrot.slane %v709, 4
      %v712 = vor.u32 %v711, %v707
      %v713 = vrot.slane %v712, 4
      %v715 = vshll.u32 %v492, 16
      %v717 = vrot.slane %v715, 5
      %v718 = vsel %vm502, %v713, %v717
      %v720 = vshrl.u32 %v469, 16
      %v722 = vrot.slane %v720, 4
      %v723 = vshll.u32 %v469, 16
      %v725 = vrot.slane %v723, 5
      %v726 = vor.u32 %v722, %v725
      %v727 = vrot.slane %v726, 4
      %v729 = vshll.u32 %v470, 16
      %v731 = vrot.slane %v729, 5
      %v732 = vsel %vm502, %v727, %v731
      %v733 = vshrl.u32 %v470, 16
      %v735 = vrot.slane %v733, 4
      %v736 = vor.u32 %v735, %v731
      %v737 = vrot.slane %v736, 4
      %v739 = vshll.u32 %v493, 16
      %v741 = vrot.slane %v739, 5
      %v742 = vsel %vm502, %v737, %v741
      %v744 = vshrl.u32 %v471, 16
      %v746 = vrot.slane %v744, 4
      %v747 = vshll.u32 %v471, 16
      %v749 = vrot.slane %v747, 5
      %v750 = vor.u32 %v746, %v749
      %v751 = vrot.slane %v750, 4
      %v753 = vshll.u32 %v472, 16
      %v755 = vrot.slane %v753, 5
      %v756 = vsel %vm502, %v751, %v755
      %v757 = vshrl.u32 %v472, 16
      %v759 = vrot.slane %v757, 4
      %v760 = vor.u32 %v759, %v755
      %v761 = vrot.slane %v760, 4
      %v763 = vshll.u32 %v494, 16
      %v765 = vrot.slane %v763, 5
      %v766 = vsel %vm502, %v761, %v765
      %v768 = vshrl.u32 %v473, 16
      %v770 = vrot.slane %v768, 4
      %v771 = vshll.u32 %v473, 16
      %v773 = vrot.slane %v771, 5
      %v774 = vor.u32 %v770, %v773
      %v775 = vrot.slane %v774, 4
      %v777 = vshll.u32 %v474, 16
      %v779 = vrot.slane %v777, 5
      %v780 = vsel %vm502, %v775, %v779
      %v781 = vshrl.u32 %v474, 16
      %v783 = vrot.slane %v781, 4
      %v784 = vor.u32 %v783, %v779
      %v785 = vrot.slane %v784, 4
      %v787 = vshll.u32 %v495, 16
      %v789 = vrot.slane %v787, 5
      %v790 = vsel %vm502, %v785, %v789
      %v792 = vshrl.u32 %v475, 16
      %v794 = vrot.slane %v792, 4
      %v795 = vshll.u32 %v475, 16
      %v797 = vrot.slane %v795, 5
      %v798 = vor.u32 %v794, %v797
      %v799 = vrot.slane %v798, 4
      %v801 = vshll.u32 %v476, 16
      %v803 = vrot.slane %v801, 5
      %v804 = vsel %vm502, %v799, %v803
      %v805 = vshrl.u32 %v476, 16
      %v807 = vrot.slane %v805, 4
      %v808 = vor.u32 %v807, %v803
      %v809 = vrot.slane %v808, 4
      %v811 = vshll.u32 %v496, 16
      %v813 = vrot.slane %v811, 5
      %v814 = vsel %vm502, %v809, %v813
      %v816 = vshrl.u32 %v477, 16
      %v818 = vrot.slane %v816, 4
      %v819 = vshll.u32 %v477, 16
      %v821 = vrot.slane %v819, 5
      %v822 = vor.u32 %v818, %v821
      %v823 = vrot.slane %v822, 4
      %v825 = vshll.u32 %v478, 16
      %v827 = vrot.slane %v825, 5
      %v828 = vsel %vm502, %v823, %v827
      %v829 = vshrl.u32 %v478, 16
      %v831 = vrot.slane %v829, 4
      %v832 = vor.u32 %v831, %v827
      %v833 = vrot.slane %v832, 4
      %v835 = vshll.u32 %v497, 16
      %v837 = vrot.slane %v835, 5
      %v838 = vsel %vm502, %v833, %v837
      %v840 = vshrl.u32 %v479, 16
      %v842 = vrot.slane %v840, 4
      %v843 = vshll.u32 %v479, 16
      %v845 = vrot.slane %v843, 5
      %v846 = vor.u32 %v842, %v845
      %v847 = vrot.slane %v846, 4
      %v849 = vshll.u32 %v480, 16
      %v851 = vrot.slane %v849, 5
      %v852 = vsel %vm502, %v847, %v851
      %v853 = vshrl.u32 %v480, 16
      %v855 = vrot.slane %v853, 4
      %v856 = vor.u32 %v855, %v851
      %v857 = vrot.slane %v856, 4
      %v859 = vshll.u32 %v498, 16
      %v861 = vrot.slane %v859, 5
      %v862 = vsel %vm502, %v857, %v861
      %v864 = vshrl.u32 %v481, 16
      %v866 = vrot.slane %v864, 4
      %v867 = vshll.u32 %v481, 16
      %v869 = vrot.slane %v867, 5
      %v870 = vor.u32 %v866, %v869
      %v871 = vrot.slane %v870, 4
      %v873 = vshll.u32 %v482, 16
      %v875 = vrot.slane %v873, 5
      %v876 = vsel %vm502, %v871, %v875
      %v877 = vshrl.u32 %v482, 16
      %v879 = vrot.slane %v877, 4
      %v880 = vor.u32 %v879, %v875
      %v881 = vrot.slane %v880, 4
      %v883 = vshll.u32 %v499, 16
      %v885 = vrot.slane %v883, 5
      %v886 = vsel %vm502, %v881, %v885
      %s887 = scalar_lea.vmem %s2, 2
      %v888 = vld [vmem:[%s887] sm:$0x3]
      %v889 = vunpack.c.l.b16 %v516
      %v890 = vunpack.c.l.b16 %v526
      %v891 = vunpack.c.l.b16 %v540
      %v892 = vunpack.c.l.b16 %v550
      %v893 = vunpack.c.l.b16 %v564
      %v894 = vunpack.c.l.b16 %v574
      %v895 = vunpack.c.l.b16 %v588
      %v896 = vunpack.c.l.b16 %v598
      %v897 = vunpack.c.l.b16 %v612
      %v898 = vunpack.c.l.b16 %v622
      %v899 = vunpack.c.l.b16 %v636
      %v900 = vunpack.c.l.b16 %v646
      %v901 = vunpack.c.l.b16 %v660
      %v902 = vunpack.c.l.b16 %v670
      %v903 = vunpack.c.l.b16 %v684
      %v904 = vunpack.c.l.b16 %v694
      %v905 = vunpack.c.l.b16 %v708
      %v906 = vunpack.c.l.b16 %v718
      %v907 = vunpack.c.l.b16 %v732
      %v908 = vunpack.c.l.b16 %v742
      %v909 = vunpack.c.l.b16 %v756
      %v910 = vunpack.c.l.b16 %v766
      %v911 = vunpack.c.l.b16 %v780
      %v912 = vunpack.c.l.b16 %v790
      %v913 = vunpack.c.l.b16 %v804
      %v914 = vunpack.c.l.b16 %v814
      %v915 = vunpack.c.l.b16 %v828
      %v916 = vunpack.c.l.b16 %v838
      %v917 = vunpack.c.l.b16 %v852
      %v918 = vunpack.c.l.b16 %v862
      %v919 = vunpack.c.l.b16 %v876
      %v920 = vunpack.c.l.b16 %v886
      %v921 = vpack.c.b16 %v890, %v889
      %v922 = vpack.c.b16 %v892, %v891
      %v923 = vpack.c.b16 %v894, %v893
      %v924 = vpack.c.b16 %v896, %v895
      %v925 = vpack.c.b16 %v898, %v897
      %v926 = vpack.c.b16 %v900, %v899
      %v927 = vpack.c.b16 %v902, %v901
      %v928 = vpack.c.b16 %v904, %v903
      %v929 = vpack.c.b16 %v906, %v905
      %v930 = vpack.c.b16 %v908, %v907
      %v931 = vpack.c.b16 %v910, %v909
      %v932 = vpack.c.b16 %v912, %v911
      %v933 = vpack.c.b16 %v914, %v913
      %v934 = vpack.c.b16 %v916, %v915
      %v935 = vpack.c.b16 %v918, %v917
      %v936 = vpack.c.b16 %v920, %v919
      %vm937 = vcmask 31744
      %v939 = vsel %vm937, %v921, 0
      %v942 = vsel %vm937, %v922, 0
      %v945 = vsel %vm937, %v923, 0
      %v948 = vsel %vm937, %v924, 0
      %v951 = vsel %vm937, %v925, 0
      %v954 = vsel %vm937, %v926, 0
      %v957 = vsel %vm937, %v927, 0
      %v960 = vsel %vm937, %v928, 0
      %v963 = vsel %vm937, %v929, 0
      %v966 = vsel %vm937, %v930, 0
      %v969 = vsel %vm937, %v931, 0
      %v972 = vsel %vm937, %v932, 0
      %v975 = vsel %vm937, %v933, 0
      %v978 = vsel %vm937, %v934, 0
      %v981 = vsel %vm937, %v935, 0
      %v984 = vsel %vm937, %v936, 0
      %vm986 = vcmask 1041408
      %v988 = vsel %vm986, %v888, 0
      %990 = vmatprep.subr.bf16.mxu0 0
      %991 = vmatpush1.bf16.msra.mxu0 %v988
      %992 = vmatprep.subr.bf16.mxu0 0
      %993 = vmatpush1.bf16.msra.mxu0 0
      %994 = vmatprep.subr.bf16.mxu0 0
      %995 = vmatpush1.bf16.msra.mxu0 0
      %996 = vmatprep.subr.bf16.mxu0 0
      %997 = vmatpush1.bf16.msra.mxu0 0
      %998 = vmatprep.subr.bf16.mxu0 0
      %999 = vmatpush1.bf16.msra.mxu0 0
      %1000 = vmatprep.subr.bf16.mxu0 0
      %1001 = vmatpush1.bf16.msra.mxu0 0
      %1002 = vmatprep.subr.bf16.mxu0 0
      %1003 = vmatpush1.bf16.msra.mxu0 0
      %1004 = vmatprep.subr.bf16.mxu0 0
      %1005 = vmatpush1.bf16.msra.mxu0 0
      %1006 = vmatprep.subr.bf16.mxu0 0
      %1007 = vmatpush1.bf16.msra.mxu0 0
      %1008 = vmatprep.subr.bf16.mxu0 0
      %1009 = vmatpush1.bf16.msra.mxu0 0
      %1010 = vmatprep.subr.bf16.mxu0 0
      %1011 = vmatpush1.bf16.msra.mxu0 0
      %1012 = vmatprep.subr.bf16.mxu0 0
      %1013 = vmatpush1.bf16.msra.mxu0 0
      %1014 = vmatprep.subr.bf16.mxu0 0
      %1015 = vmatpush1.bf16.msra.mxu0 0
      %1016 = vmatprep.subr.bf16.mxu0 0
      %1017 = vmatpush1.bf16.msra.mxu0 0
      %1018 = vmatprep.subr.bf16.mxu0 0
      %1019 = vmatpush1.bf16.msra.mxu0 0
      %1020 = vmatprep.subr.bf16.mxu0 0
      %1021 = vmatpush1.bf16.msra.mxu0 0
      %1022 = vmatprep.mubr.bf16.mxu0 0
      %1023 = vmatmul.mubr.bf16.gmra.mrb[0].mxu0 %v939
      %v1024 = vpop.f32.mrb[0].mxu0
      %v1025 = vadd.f32 0.0, %v1024
      %v1026 = vpop.f32.mrb[0].mxu0
      %v1027 = vpop.f32.mrb[0].mxu0
      %v1028 = vadd.f32 0.0, %v1027
      %v1029 = vpop.f32.mrb[0].mxu0
      %1030 = vmatprep.mubr.bf16.mxu0 0
      %1031 = vmatmul.mubr.bf16.gmra.mrb[0].mxu0 %v942
      %v1032 = vpop.f32.mrb[0].mxu0
      %v1033 = vadd.f32 0.0, %v1032
      %v1034 = vpop.f32.mrb[0].mxu0
      %v1035 = vpop.f32.mrb[0].mxu0
      %v1036 = vadd.f32 0.0, %v1035
      %v1037 = vpop.f32.mrb[0].mxu0
      %1038 = vmatprep.mubr.bf16.mxu0 0
      %1039 = vmatmul.mubr.bf16.gmra.mrb[0].mxu0 %v945
      %v1040 = vpop.f32.mrb[0].mxu0
      %v1041 = vadd.f32 0.0, %v1040
      %v1042 = vpop.f32.mrb[0].mxu0
      %v1043 = vpop.f32.mrb[0].mxu0
      %v1044 = vadd.f32 0.0, %v1043
      %v1045 = vpop.f32.mrb[0].mxu0
      %1046 = vmatprep.mubr.bf16.mxu0 0
      %1047 = vmatmul.mubr.bf16.gmra.mrb[0].mxu0 %v948
      %v1048 = vpop.f32.mrb[0].mxu0
      %v1049 = vadd.f32 0.0, %v1048
      %v1050 = vpop.f32.mrb[0].mxu0
      %v1051 = vpop.f32.mrb[0].mxu0
      %v1052 = vadd.f32 0.0, %v1051
      %v1053 = vpop.f32.mrb[0].mxu0
      %1054 = vmatprep.mubr.bf16.mxu0 0
      %1055 = vmatmul.mubr.bf16.gmra.mrb[0].mxu0 %v951
      %v1056 = vpop.f32.mrb[0].mxu0
      %v1057 = vadd.f32 0.0, %v1056
      %v1058 = vpop.f32.mrb[0].mxu0
      %v1059 = vpop.f32.mrb[0].mxu0
      %v1060 = vadd.f32 0.0, %v1059
      %v1061 = vpop.f32.mrb[0].mxu0
      %1062 = vmatprep.mubr.bf16.mxu0 0
      %1063 = vmatmul.mubr.bf16.gmra.mrb[0].mxu0 %v954
      %v1064 = vpop.f32.mrb[0].mxu0
      %v1065 = vadd.f32 0.0, %v1064
      %v1066 = vpop.f32.mrb[0].mxu0
      %v1067 = vpop.f32.mrb[0].mxu0
      %v1068 = vadd.f32 0.0, %v1067
      %v1069 = vpop.f32.mrb[0].mxu0
      %1070 = vmatprep.mubr.bf16.mxu0 0
      %1071 = vmatmul.mubr.bf16.gmra.mrb[0].mxu0 %v957
      %v1072 = vpop.f32.mrb[0].mxu0
      %v1073 = vadd.f32 0.0, %v1072
      %v1074 = vpop.f32.mrb[0].mxu0
      %v1075 = vpop.f32.mrb[0].mxu0
      %v1076 = vadd.f32 0.0, %v1075
      %v1077 = vpop.f32.mrb[0].mxu0
      %1078 = vmatprep.mubr.bf16.mxu0 0
      %1079 = vmatmul.mubr.bf16.gmra.mrb[0].mxu0 %v960
      %v1080 = vpop.f32.mrb[0].mxu0
      %v1081 = vadd.f32 0.0, %v1080
      %v1082 = vpop.f32.mrb[0].mxu0
      %v1083 = vpop.f32.mrb[0].mxu0
      %v1084 = vadd.f32 0.0, %v1083
      %v1085 = vpop.f32.mrb[0].mxu0
      %1086 = vmatprep.mubr.bf16.mxu0 0
      %1087 = vmatmul.mubr.bf16.gmra.mrb[0].mxu0 %v963
      %v1088 = vpop.f32.mrb[0].mxu0
      %v1089 = vadd.f32 0.0, %v1088
      %v1090 = vpop.f32.mrb[0].mxu0
      %v1091 = vpop.f32.mrb[0].mxu0
      %v1092 = vadd.f32 0.0, %v1091
      %v1093 = vpop.f32.mrb[0].mxu0
      %1094 = vmatprep.mubr.bf16.mxu0 0
      %1095 = vmatmul.mubr.bf16.gmra.mrb[0].mxu0 %v966
      %v1096 = vpop.f32.mrb[0].mxu0
      %v1097 = vadd.f32 0.0, %v1096
      %v1098 = vpop.f32.mrb[0].mxu0
      %v1099 = vpop.f32.mrb[0].mxu0
      %v1100 = vadd.f32 0.0, %v1099
      %v1101 = vpop.f32.mrb[0].mxu0
      %1102 = vmatprep.mubr.bf16.mxu0 0
      %1103 = vmatmul.mubr.bf16.gmra.mrb[0].mxu0 %v969
      %v1104 = vpop.f32.mrb[0].mxu0
      %v1105 = vadd.f32 0.0, %v1104
      %v1106 = vpop.f32.mrb[0].mxu0
      %v1107 = vpop.f32.mrb[0].mxu0
      %v1108 = vadd.f32 0.0, %v1107
      %v1109 = vpop.f32.mrb[0].mxu0
      %1110 = vmatprep.mubr.bf16.mxu0 0
      %1111 = vmatmul.mubr.bf16.gmra.mrb[0].mxu0 %v972
      %v1112 = vpop.f32.mrb[0].mxu0
      %v1113 = vadd.f32 0.0, %v1112
      %v1114 = vpop.f32.mrb[0].mxu0
      %v1115 = vpop.f32.mrb[0].mxu0
      %v1116 = vadd.f32 0.0, %v1115
      %v1117 = vpop.f32.mrb[0].mxu0
      %1118 = vmatprep.mubr.bf16.mxu0 0
      %1119 = vmatmul.mubr.bf16.gmra.mrb[0].mxu0 %v975
      %v1120 = vpop.f32.mrb[0].mxu0
      %v1121 = vadd.f32 0.0, %v1120
      %v1122 = vpop.f32.mrb[0].mxu0
      %v1123 = vpop.f32.mrb[0].mxu0
      %v1124 = vadd.f32 0.0, %v1123
      %v1125 = vpop.f32.mrb[0].mxu0
      %1126 = vmatprep.mubr.bf16.mxu0 0
      %1127 = vmatmul.mubr.bf16.gmra.mrb[0].mxu0 %v978
      %v1128 = vpop.f32.mrb[0].mxu0
      %v1129 = vadd.f32 0.0, %v1128
      %v1130 = vpop.f32.mrb[0].mxu0
      %v1131 = vpop.f32.mrb[0].mxu0
      %v1132 = vadd.f32 0.0, %v1131
      %v1133 = vpop.f32.mrb[0].mxu0
      %1134 = vmatprep.mubr.bf16.mxu0 0
      %1135 = vmatmul.mubr.bf16.gmra.mrb[0].mxu0 %v981
      %v1136 = vpop.f32.mrb[0].mxu0
      %v1137 = vadd.f32 0.0, %v1136
      %v1138 = vpop.f32.mrb[0].mxu0
      %v1139 = vpop.f32.mrb[0].mxu0
      %v1140 = vadd.f32 0.0, %v1139
      %v1141 = vpop.f32.mrb[0].mxu0
      %1142 = vmatprep.mubr.bf16.mxu0 0
      %1143 = vmatmul.mubr.bf16.gmra.mrb[0].mxu0 %v984
      %v1144 = vpop.f32.mrb[0].mxu0
      %v1145 = vadd.f32 0.0, %v1144
      %v1146 = vpop.f32.mrb[0].mxu0
      %v1147 = vpop.f32.mrb[0].mxu0
      %v1148 = vadd.f32 0.0, %v1147
      %v1149 = vpop.f32.mrb[0].mxu0
      %1150 = vdwg.mxu0
      %v1183 = vunpack.c.l.b16 %v451
      %v1184 = vunpack.c.l.b16 %v452
      %v1185 = vunpack.c.l.b16 %v453
      %v1186 = vunpack.c.l.b16 %v454
      %v1187 = vunpack.c.l.b16 %v455
      %v1188 = vunpack.c.l.b16 %v456
      %v1189 = vunpack.c.l.b16 %v457
      %v1190 = vunpack.c.l.b16 %v458
      %v1191 = vunpack.c.l.b16 %v459
      %v1192 = vunpack.c.l.b16 %v460
      %v1193 = vunpack.c.l.b16 %v461
      %v1194 = vunpack.c.l.b16 %v462
      %v1195 = vunpack.c.l.b16 %v463
      %v1196 = vunpack.c.l.b16 %v464
      %v1197 = vunpack.c.l.b16 %v465
      %v1198 = vunpack.c.l.b16 %v466
      %v1199 = vunpack.c.l.b16 %v467
      %v1200 = vunpack.c.l.b16 %v468
      %v1201 = vunpack.c.l.b16 %v469
      %v1202 = vunpack.c.l.b16 %v470
      %v1203 = vunpack.c.l.b16 %v471
      %v1204 = vunpack.c.l.b16 %v472
      %v1205 = vunpack.c.l.b16 %v473
      %v1206 = vunpack.c.l.b16 %v474
      %v1207 = vunpack.c.l.b16 %v475
      %v1208 = vunpack.c.l.b16 %v476
      %v1209 = vunpack.c.l.b16 %v477
      %v1210 = vunpack.c.l.b16 %v478
      %v1211 = vunpack.c.l.b16 %v479
      %v1212 = vunpack.c.l.b16 %v480
      %v1213 = vunpack.c.l.b16 %v481
      %v1214 = vunpack.c.l.b16 %v482
      %v1215 = vpack.c.b16 %v1184, %v1183
      %v1216 = vpack.c.b16 %v1186, %v1185
      %v1217 = vpack.c.b16 %v1188, %v1187
      %v1218 = vpack.c.b16 %v1190, %v1189
      %v1219 = vpack.c.b16 %v1192, %v1191
      %v1220 = vpack.c.b16 %v1194, %v1193
      %v1221 = vpack.c.b16 %v1196, %v1195
      %v1222 = vpack.c.b16 %v1198, %v1197
      %v1223 = vpack.c.b16 %v1200, %v1199
      %v1224 = vpack.c.b16 %v1202, %v1201
      %v1225 = vpack.c.b16 %v1204, %v1203
      %v1226 = vpack.c.b16 %v1206, %v1205
      %v1227 = vpack.c.b16 %v1208, %v1207
      %v1228 = vpack.c.b16 %v1210, %v1209
      %v1229 = vpack.c.b16 %v1212, %v1211
      %v1230 = vpack.c.b16 %v1214, %v1213
      %v1232 = vsel %vm937, %v1215, 0
      %v1235 = vsel %vm937, %v1216, 0
      %v1238 = vsel %vm937, %v1217, 0
      %v1241 = vsel %vm937, %v1218, 0
      %v1244 = vsel %vm937, %v1219, 0
      %v1247 = vsel %vm937, %v1220, 0
      %v1250 = vsel %vm937, %v1221, 0
      %v1253 = vsel %vm937, %v1222, 0
      %v1256 = vsel %vm937, %v1223, 0
      %v1259 = vsel %vm937, %v1224, 0
      %v1262 = vsel %vm937, %v1225, 0
      %v1265 = vsel %vm937, %v1226, 0
      %v1268 = vsel %vm937, %v1227, 0
      %v1271 = vsel %vm937, %v1228, 0
      %v1274 = vsel %vm937, %v1229, 0
      %v1277 = vsel %vm937, %v1230, 0
      %v1280 = vsel %vm986, %v483, 0
      %1282 = vmatprep.subr.bf16.mxu0 0
      %1283 = vmatpush1.bf16.msra.mxu0 %v1280
      %1284 = vmatprep.subr.bf16.mxu0 0
      %1285 = vmatpush1.bf16.msra.mxu0 0
      %1286 = vmatprep.subr.bf16.mxu0 0
      %1287 = vmatpush1.bf16.msra.mxu0 0
      %1288 = vmatprep.subr.bf16.mxu0 0
      %1289 = vmatpush1.bf16.msra.mxu0 0
      %1290 = vmatprep.subr.bf16.mxu0 0
      %1291 = vmatpush1.bf16.msra.mxu0 0
      %1292 = vmatprep.subr.bf16.mxu0 0
      %1293 = vmatpush1.bf16.msra.mxu0 0
      %1294 = vmatprep.subr.bf16.mxu0 0
      %1295 = vmatpush1.bf16.msra.mxu0 0
      %1296 = vmatprep.subr.bf16.mxu0 0
      %1297 = vmatpush1.bf16.msra.mxu0 0
      %1298 = vmatprep.subr.bf16.mxu0 0
      %1299 = vmatpush1.bf16.msra.mxu0 0
      %1300 = vmatprep.subr.bf16.mxu0 0
      %1301 = vmatpush1.bf16.msra.mxu0 0
      %1302 = vmatprep.subr.bf16.mxu0 0
      %1303 = vmatpush1.bf16.msra.mxu0 0
      %1304 = vmatprep.subr.bf16.mxu0 0
      %1305 = vmatpush1.bf16.msra.mxu0 0
      %1306 = vmatprep.subr.bf16.mxu0 0
      %1307 = vmatpush1.bf16.msra.mxu0 0
      %1308 = vmatprep.subr.bf16.mxu0 0
      %1309 = vmatpush1.bf16.msra.mxu0 0
      %1310 = vmatprep.subr.bf16.mxu0 0
      %1311 = vmatpush1.bf16.msra.mxu0 0
      %1312 = vmatprep.subr.bf16.mxu0 0
      %1313 = vmatpush1.bf16.msra.mxu0 0
      %1314 = vmatprep.mubr.bf16.mxu0 0
      %1315 = vmatmul.mubr.bf16.gmra.mrb[0].mxu0 %v1232
      %v1316 = vpop.f32.mrb[0].mxu0
      %v1317 = vadd.f32 %v1025, %v1316
      %v1318 = vpop.f32.mrb[0].mxu0
      %v1319 = vpop.f32.mrb[0].mxu0
      %v1320 = vadd.f32 %v1028, %v1319
      %v1321 = vpop.f32.mrb[0].mxu0
      %1322 = vmatprep.mubr.bf16.mxu0 0
      %1323 = vmatmul.mubr.bf16.gmra.mrb[0].mxu0 %v1235
      %v1324 = vpop.f32.mrb[0].mxu0
      %v1325 = vadd.f32 %v1033, %v1324
      %v1326 = vpop.f32.mrb[0].mxu0
      %v1327 = vpop.f32.mrb[0].mxu0
      %v1328 = vadd.f32 %v1036, %v1327
      %v1329 = vpop.f32.mrb[0].mxu0
      %1330 = vmatprep.mubr.bf16.mxu0 0
      %1331 = vmatmul.mubr.bf16.gmra.mrb[0].mxu0 %v1238
      %v1332 = vpop.f32.mrb[0].mxu0
      %v1333 = vadd.f32 %v1041, %v1332
      %v1334 = vpop.f32.mrb[0].mxu0
      %v1335 = vpop.f32.mrb[0].mxu0
      %v1336 = vadd.f32 %v1044, %v1335
      %v1337 = vpop.f32.mrb[0].mxu0
      %1338 = vmatprep.mubr.bf16.mxu0 0
      %1339 = vmatmul.mubr.bf16.gmra.mrb[0].mxu0 %v1241
      %v1340 = vpop.f32.mrb[0].mxu0
      %v1341 = vadd.f32 %v1049, %v1340
      %v1342 = vpop.f32.mrb[0].mxu0
      %v1343 = vpop.f32.mrb[0].mxu0
      %v1344 = vadd.f32 %v1052, %v1343
      %v1345 = vpop.f32.mrb[0].mxu0
      %1346 = vmatprep.mubr.bf16.mxu0 0
      %1347 = vmatmul.mubr.bf16.gmra.mrb[0].mxu0 %v1244
      %v1348 = vpop.f32.mrb[0].mxu0
      %v1349 = vadd.f32 %v1057, %v1348
      %v1350 = vpop.f32.mrb[0].mxu0
      %v1351 = vpop.f32.mrb[0].mxu0
      %v1352 = vadd.f32 %v1060, %v1351
      %v1353 = vpop.f32.mrb[0].mxu0
      %1354 = vmatprep.mubr.bf16.mxu0 0
      %1355 = vmatmul.mubr.bf16.gmra.mrb[0].mxu0 %v1247
      %v1356 = vpop.f32.mrb[0].mxu0
      %v1357 = vadd.f32 %v1065, %v1356
      %v1358 = vpop.f32.mrb[0].mxu0
      %v1359 = vpop.f32.mrb[0].mxu0
      %v1360 = vadd.f32 %v1068, %v1359
      %v1361 = vpop.f32.mrb[0].mxu0
      %1362 = vmatprep.mubr.bf16.mxu0 0
      %1363 = vmatmul.mubr.bf16.gmra.mrb[0].mxu0 %v1250
      %v1364 = vpop.f32.mrb[0].mxu0
      %v1365 = vadd.f32 %v1073, %v1364
      %v1366 = vpop.f32.mrb[0].mxu0
      %v1367 = vpop.f32.mrb[0].mxu0
      %v1368 = vadd.f32 %v1076, %v1367
      %v1369 = vpop.f32.mrb[0].mxu0
      %1370 = vmatprep.mubr.bf16.mxu0 0
      %1371 = vmatmul.mubr.bf16.gmra.mrb[0].mxu0 %v1253
      %v1372 = vpop.f32.mrb[0].mxu0
      %v1373 = vadd.f32 %v1081, %v1372
      %v1374 = vpop.f32.mrb[0].mxu0
      %v1375 = vpop.f32.mrb[0].mxu0
      %v1376 = vadd.f32 %v1084, %v1375
      %v1377 = vpop.f32.mrb[0].mxu0
      %1378 = vmatprep.mubr.bf16.mxu0 0
      %1379 = vmatmul.mubr.bf16.gmra.mrb[0].mxu0 %v1256
      %v1380 = vpop.f32.mrb[0].mxu0
      %v1381 = vadd.f32 %v1089, %v1380
      %v1382 = vpop.f32.mrb[0].mxu0
      %v1383 = vpop.f32.mrb[0].mxu0
      %v1384 = vadd.f32 %v1092, %v1383
      %v1385 = vpop.f32.mrb[0].mxu0
      %1386 = vmatprep.mubr.bf16.mxu0 0
      %1387 = vmatmul.mubr.bf16.gmra.mrb[0].mxu0 %v1259
      %v1388 = vpop.f32.mrb[0].mxu0
      %v1389 = vadd.f32 %v1097, %v1388
      %v1390 = vpop.f32.mrb[0].mxu0
      %v1391 = vpop.f32.mrb[0].mxu0
      %v1392 = vadd.f32 %v1100, %v1391
      %v1393 = vpop.f32.mrb[0].mxu0
      %1394 = vmatprep.mubr.bf16.mxu0 0
      %1395 = vmatmul.mubr.bf16.gmra.mrb[0].mxu0 %v1262
      %v1396 = vpop.f32.mrb[0].mxu0
      %v1397 = vadd.f32 %v1105, %v1396
      %v1398 = vpop.f32.mrb[0].mxu0
      %v1399 = vpop.f32.mrb[0].mxu0
      %v1400 = vadd.f32 %v1108, %v1399
      %v1401 = vpop.f32.mrb[0].mxu0
      %1402 = vmatprep.mubr.bf16.mxu0 0
      %1403 = vmatmul.mubr.bf16.gmra.mrb[0].mxu0 %v1265
      %v1404 = vpop.f32.mrb[0].mxu0
      %v1405 = vadd.f32 %v1113, %v1404
      %v1406 = vpop.f32.mrb[0].mxu0
      %v1407 = vpop.f32.mrb[0].mxu0
      %v1408 = vadd.f32 %v1116, %v1407
      %v1409 = vpop.f32.mrb[0].mxu0
      %1410 = vmatprep.mubr.bf16.mxu0 0
      %1411 = vmatmul.mubr.bf16.gmra.mrb[0].mxu0 %v1268
      %v1412 = vpop.f32.mrb[0].mxu0
      %v1413 = vadd.f32 %v1121, %v1412
      %v1414 = vpop.f32.mrb[0].mxu0
      %v1415 = vpop.f32.mrb[0].mxu0
      %v1416 = vadd.f32 %v1124, %v1415
      %v1417 = vpop.f32.mrb[0].mxu0
      %1418 = vmatprep.mubr.bf16.mxu0 0
      %1419 = vmatmul.mubr.bf16.gmra.mrb[0].mxu0 %v1271
      %v1420 = vpop.f32.mrb[0].mxu0
      %v1421 = vadd.f32 %v1129, %v1420
      %v1422 = vpop.f32.mrb[0].mxu0
      %v1423 = vpop.f32.mrb[0].mxu0
      %v1424 = vadd.f32 %v1132, %v1423
      %v1425 = vpop.f32.mrb[0].mxu0
      %1426 = vmatprep.mubr.bf16.mxu0 0
      %1427 = vmatmul.mubr.bf16.gmra.mrb[0].mxu0 %v1274
      %v1428 = vpop.f32.mrb[0].mxu0
      %v1429 = vadd.f32 %v1137, %v1428
      %v1430 = vpop.f32.mrb[0].mxu0
      %v1431 = vpop.f32.mrb[0].mxu0
      %v1432 = vadd.f32 %v1140, %v1431
      %v1433 = vpop.f32.mrb[0].mxu0
      %1434 = vmatprep.mubr.bf16.mxu0 0
      %1435 = vmatmul.mubr.bf16.gmra.mrb[0].mxu0 %v1277
      %v1436 = vpop.f32.mrb[0].mxu0
      %v1437 = vadd.f32 %v1145, %v1436
      %v1438 = vpop.f32.mrb[0].mxu0
      %v1439 = vpop.f32.mrb[0].mxu0
      %v1440 = vadd.f32 %v1148, %v1439
      %v1441 = vpop.f32.mrb[0].mxu0
      %1442 = vdwg.mxu0
      %v1443 = vld [vmem:[#allocation2] sm:$0xe]
      %v1444 = vld [vmem:[#allocation2 + $0xc] sm:$0xe]
      %v1445 = vld [vmem:[#allocation2 + $0x18] sm:$0xe]
      %v1446 = vld [vmem:[#allocation2 + $0x24] sm:$0xe]
      %v1447 = vld [vmem:[#allocation2 + $0x30] sm:$0xe]
      %v1448 = vld [vmem:[#allocation2 + $0x3c] sm:$0xe]
      %v1449 = vld [vmem:[#allocation2 + $0x48] sm:$0xe]
      %v1450 = vld [vmem:[#allocation2 + $0x54] sm:$0xe]
      %v1451 = vld [vmem:[#allocation2 + $0x60] sm:$0xe]
      %v1452 = vld [vmem:[#allocation2 + $0x6c] sm:$0xe]
      %v1453 = vld [vmem:[#allocation2 + $0x78] sm:$0xe]
      %v1454 = vld [vmem:[#allocation2 + $0x84] sm:$0xe]
      %v1455 = vld [vmem:[#allocation2 + $0x90] sm:$0xe]
      %v1456 = vld [vmem:[#allocation2 + $0x9c] sm:$0xe]
      %v1457 = vld [vmem:[#allocation2 + $0xa8] sm:$0xe]
      %v1458 = vld [vmem:[#allocation2 + $0xb4] sm:$0xe]
      %vm1491 = vcmask 1042432
      %vm1492 = vcmask 1046532
      %vm1493 = vmor %vm1491, %vm1492
      %v1494 = vrot.slane %v1443, 5
      %v1495 = vrot.slane %v1494, 4
      %v1496 = vrot.slane %v452, 5
      %v1497 = vsel %vm1493, %v1495, %v1496
      %v1498 = vrot.slane %v1496, 4
      %v1499 = vrot.slane %v484, 5
      %v1500 = vsel %vm1493, %v1498, %v1499
      %v1501 = vrot.slane %v1444, 5
      %v1502 = vrot.slane %v1501, 4
      %v1503 = vrot.slane %v454, 5
      %v1504 = vsel %vm1493, %v1502, %v1503
      %v1505 = vrot.slane %v1503, 4
      %v1506 = vrot.slane %v485, 5
      %v1507 = vsel %vm1493, %v1505, %v1506
      %v1508 = vrot.slane %v1445, 5
      %v1509 = vrot.slane %v1508, 4
      %v1510 = vrot.slane %v456, 5
      %v1511 = vsel %vm1493, %v1509, %v1510
      %v1512 = vrot.slane %v1510, 4
      %v1513 = vrot.slane %v486, 5
      %v1514 = vsel %vm1493, %v1512, %v1513
      %v1515 = vrot.slane %v1446, 5
      %v1516 = vrot.slane %v1515, 4
      %v1517 = vrot.slane %v458, 5
      %v1518 = vsel %vm1493, %v1516, %v1517
      %v1519 = vrot.slane %v1517, 4
      %v1520 = vrot.slane %v487, 5
      %v1521 = vsel %vm1493, %v1519, %v1520
      %v1522 = vrot.slane %v1447, 5
      %v1523 = vrot.slane %v1522, 4
      %v1524 = vrot.slane %v460, 5
      %v1525 = vsel %vm1493, %v1523, %v1524
      %v1526 = vrot.slane %v1524, 4
      %v1527 = vrot.slane %v488, 5
      %v1528 = vsel %vm1493, %v1526, %v1527
      %v1529 = vrot.slane %v1448, 5
      %v1530 = vrot.slane %v1529, 4
      %v1531 = vrot.slane %v462, 5
      %v1532 = vsel %vm1493, %v1530, %v1531
      %v1533 = vrot.slane %v1531, 4
      %v1534 = vrot.slane %v489, 5
      %v1535 = vsel %vm1493, %v1533, %v1534
      %v1536 = vrot.slane %v1449, 5
      %v1537 = vrot.slane %v1536, 4
      %v1538 = vrot.slane %v464, 5
      %v1539 = vsel %vm1493, %v1537, %v1538
      %v1540 = vrot.slane %v1538, 4
      %v1541 = vrot.slane %v490, 5
      %v1542 = vsel %vm1493, %v1540, %v1541
      %v1543 = vrot.slane %v1450, 5
      %v1544 = vrot.slane %v1543, 4
      %v1545 = vrot.slane %v466, 5
      %v1546 = vsel %vm1493, %v1544, %v1545
      %v1547 = vrot.slane %v1545, 4
      %v1548 = vrot.slane %v491, 5
      %v1549 = vsel %vm1493, %v1547, %v1548
      %v1550 = vrot.slane %v1451, 5
      %v1551 = vrot.slane %v1550, 4
      %v1552 = vrot.slane %v468, 5
      %v1553 = vsel %vm1493, %v1551, %v1552
      %v1554 = vrot.slane %v1552, 4
      %v1555 = vrot.slane %v492, 5
      %v1556 = vsel %vm1493, %v1554, %v1555
      %v1557 = vrot.slane %v1452, 5
      %v1558 = vrot.slane %v1557, 4
      %v1559 = vrot.slane %v470, 5
      %v1560 = vsel %vm1493, %v1558, %v1559
      %v1561 = vrot.slane %v1559, 4
      %v1562 = vrot.slane %v493, 5
      %v1563 = vsel %vm1493, %v1561, %v1562
      %v1564 = vrot.slane %v1453, 5
      %v1565 = vrot.slane %v1564, 4
      %v1566 = vrot.slane %v472, 5
      %v1567 = vsel %vm1493, %v1565, %v1566
      %v1568 = vrot.slane %v1566, 4
      %v1569 = vrot.slane %v494, 5
      %v1570 = vsel %vm1493, %v1568, %v1569
      %v1571 = vrot.slane %v1454, 5
      %v1572 = vrot.slane %v1571, 4
      %v1573 = vrot.slane %v474, 5
      %v1574 = vsel %vm1493, %v1572, %v1573
      %v1575 = vrot.slane %v1573, 4
      %v1576 = vrot.slane %v495, 5
      %v1577 = vsel %vm1493, %v1575, %v1576
      %v1578 = vrot.slane %v1455, 5
      %v1579 = vrot.slane %v1578, 4
      %v1580 = vrot.slane %v476, 5
      %v1581 = vsel %vm1493, %v1579, %v1580
      %v1582 = vrot.slane %v1580, 4
      %v1583 = vrot.slane %v496, 5
      %v1584 = vsel %vm1493, %v1582, %v1583
      %v1585 = vrot.slane %v1456, 5
      %v1586 = vrot.slane %v1585, 4
      %v1587 = vrot.slane %v478, 5
      %v1588 = vsel %vm1493, %v1586, %v1587
      %v1589 = vrot.slane %v1587, 4
      %v1590 = vrot.slane %v497, 5
      %v1591 = vsel %vm1493, %v1589, %v1590
      %v1592 = vrot.slane %v1457, 5
      %v1593 = vrot.slane %v1592, 4
      %v1594 = vrot.slane %v480, 5
      %v1595 = vsel %vm1493, %v1593, %v1594
      %v1596 = vrot.slane %v1594, 4
      %v1597 = vrot.slane %v498, 5
      %v1598 = vsel %vm1493, %v1596, %v1597
      %v1599 = vrot.slane %v1458, 5
      %v1600 = vrot.slane %v1599, 4
      %v1601 = vrot.slane %v482, 5
      %v1602 = vsel %vm1493, %v1600, %v1601
      %v1603 = vrot.slane %v1601, 4
      %v1604 = vrot.slane %v499, 5
      %v1605 = vsel %vm1493, %v1603, %v1604
      %s1606 = scalar_lea.vmem %s2, 4
      %v1607 = vld [vmem:[%s1606] sm:$0x3]
      %v1608 = vunpack.c.l.b16 %v1497
      %v1609 = vunpack.c.l.b16 %v1500
      %v1610 = vunpack.c.l.b16 %v1504
      %v1611 = vunpack.c.l.b16 %v1507
      %v1612 = vunpack.c.l.b16 %v1511
      %v1613 = vunpack.c.l.b16 %v1514
      %v1614 = vunpack.c.l.b16 %v1518
      %v1615 = vunpack.c.l.b16 %v1521
      %v1616 = vunpack.c.l.b16 %v1525
      %v1617 = vunpack.c.l.b16 %v1528
      %v1618 = vunpack.c.l.b16 %v1532
      %v1619 = vunpack.c.l.b16 %v1535
      %v1620 = vunpack.c.l.b16 %v1539
      %v1621 = vunpack.c.l.b16 %v1542
      %v1622 = vunpack.c.l.b16 %v1546
      %v1623 = vunpack.c.l.b16 %v1549
      %v1624 = vunpack.c.l.b16 %v1553
      %v1625 = vunpack.c.l.b16 %v1556
      %v1626 = vunpack.c.l.b16 %v1560
      %v1627 = vunpack.c.l.b16 %v1563
      %v1628 = vunpack.c.l.b16 %v1567
      %v1629 = vunpack.c.l.b16 %v1570
      %v1630 = vunpack.c.l.b16 %v1574
      %v1631 = vunpack.c.l.b16 %v1577
      %v1632 = vunpack.c.l.b16 %v1581
      %v1633 = vunpack.c.l.b16 %v1584
      %v1634 = vunpack.c.l.b16 %v1588
      %v1635 = vunpack.c.l.b16 %v1591
      %v1636 = vunpack.c.l.b16 %v1595
      %v1637 = vunpack.c.l.b16 %v1598
      %v1638 = vunpack.c.l.b16 %v1602
      %v1639 = vunpack.c.l.b16 %v1605
      %v1640 = vpack.c.b16 %v1609, %v1608
      %v1641 = vpack.c.b16 %v1611, %v1610
      %v1642 = vpack.c.b16 %v1613, %v1612
      %v1643 = vpack.c.b16 %v1615, %v1614
      %v1644 = vpack.c.b16 %v1617, %v1616
      %v1645 = vpack.c.b16 %v1619, %v1618
      %v1646 = vpack.c.b16 %v1621, %v1620
      %v1647 = vpack.c.b16 %v1623, %v1622
      %v1648 = vpack.c.b16 %v1625, %v1624
      %v1649 = vpack.c.b16 %v1627, %v1626
      %v1650 = vpack.c.b16 %v1629, %v1628
      %v1651 = vpack.c.b16 %v1631, %v1630
      %v1652 = vpack.c.b16 %v1633, %v1632
      %v1653 = vpack.c.b16 %v1635, %v1634
      %v1654 = vpack.c.b16 %v1637, %v1636
      %v1655 = vpack.c.b16 %v1639, %v1638
      %v1657 = vsel %vm937, %v1640, 0
      %v1660 = vsel %vm937, %v1641, 0
      %v1663 = vsel %vm937, %v1642, 0
      %v1666 = vsel %vm937, %v1643, 0
      %v1669 = vsel %vm937, %v1644, 0
      %v1672 = vsel %vm937, %v1645, 0
      %v1675 = vsel %vm937, %v1646, 0
      %v1678 = vsel %vm937, %v1647, 0
      %v1681 = vsel %vm937, %v1648, 0
      %v1684 = vsel %vm937, %v1649, 0
      %v1687 = vsel %vm937, %v1650, 0
      %v1690 = vsel %vm937, %v1651, 0
      %v1693 = vsel %vm937, %v1652, 0
      %v1696 = vsel %vm937, %v1653, 0
      %v1699 = vsel %vm937, %v1654, 0
      %v1702 = vsel %vm937, %v1655, 0
      %v1705 = vsel %vm986, %v1607, 0
      %1707 = vmatprep.subr.bf16.mxu0 0
      %1708 = vmatpush1.bf16.msra.mxu0 %v1705
      %1709 = vmatprep.subr.bf16.mxu0 0
      %1710 = vmatpush1.bf16.msra.mxu0 0
      %1711 = vmatprep.subr.bf16.mxu0 0
      %1712 = vmatpush1.bf16.msra.mxu0 0
      %1713 = vmatprep.subr.bf16.mxu0 0
      %1714 = vmatpush1.bf16.msra.mxu0 0
      %1715 = vmatprep.subr.bf16.mxu0 0
      %1716 = vmatpush1.bf16.msra.mxu0 0
      %1717 = vmatprep.subr.bf16.mxu0 0
      %1718 = vmatpush1.bf16.msra.mxu0 0
      %1719 = vmatprep.subr.bf16.mxu0 0
      %1720 = vmatpush1.bf16.msra.mxu0 0
      %1721 = vmatprep.subr.bf16.mxu0 0
      %1722 = vmatpush1.bf16.msra.mxu0 0
      %1723 = vmatprep.subr.bf16.mxu0 0
      %1724 = vmatpush1.bf16.msra.mxu0 0
      %1725 = vmatprep.subr.bf16.mxu0 0
      %1726 = vmatpush1.bf16.msra.mxu0 0
      %1727 = vmatprep.subr.bf16.mxu0 0
      %1728 = vmatpush1.bf16.msra.mxu0 0
      %1729 = vmatprep.subr.bf16.mxu0 0
      %1730 = vmatpush1.bf16.msra.mxu0 0
      %1731 = vmatprep.subr.bf16.mxu0 0
      %1732 = vmatpush1.bf16.msra.mxu0 0
      %1733 = vmatprep.subr.bf16.mxu0 0
      %1734 = vmatpush1.bf16.msra.mxu0 0
      %1735 = vmatprep.subr.bf16.mxu0 0
      %1736 = vmatpush1.bf16.msra.mxu0 0
      %1737 = vmatprep.subr.bf16.mxu0 0
      %1738 = vmatpush1.bf16.msra.mxu0 0
      %1739 = vmatprep.mubr.bf16.mxu0 0
      %1740 = vmatmul.mubr.bf16.gmra.mrb[0].mxu0 %v1657
      %v1741 = vpop.f32.mrb[0].mxu0
      %v1742 = vadd.f32 0.0, %v1741
      %v1743 = vpop.f32.mrb[0].mxu0
      %v1744 = vpop.f32.mrb[0].mxu0
      %v1745 = vadd.f32 0.0, %v1744
      %v1746 = vpop.f32.mrb[0].mxu0
      %1747 = vmatprep.mubr.bf16.mxu0 0
      %1748 = vmatmul.mubr.bf16.gmra.mrb[0].mxu0 %v1660
      %v1749 = vpop.f32.mrb[0].mxu0
      %v1750 = vadd.f32 0.0, %v1749
      %v1751 = vpop.f32.mrb[0].mxu0
      %v1752 = vpop.f32.mrb[0].mxu0
      %v1753 = vadd.f32 0.0, %v1752
      %v1754 = vpop.f32.mrb[0].mxu0
      %1755 = vmatprep.mubr.bf16.mxu0 0
      %1756 = vmatmul.mubr.bf16.gmra.mrb[0].mxu0 %v1663
      %v1757 = vpop.f32.mrb[0].mxu0
      %v1758 = vadd.f32 0.0, %v1757
      %v1759 = vpop.f32.mrb[0].mxu0
      %v1760 = vpop.f32.mrb[0].mxu0
      %v1761 = vadd.f32 0.0, %v1760
      %v1762 = vpop.f32.mrb[0].mxu0
      %1763 = vmatprep.mubr.bf16.mxu0 0
      %1764 = vmatmul.mubr.bf16.gmra.mrb[0].mxu0 %v1666
      %v1765 = vpop.f32.mrb[0].mxu0
      %v1766 = vadd.f32 0.0, %v1765
      %v1767 = vpop.f32.mrb[0].mxu0
      %v1768 = vpop.f32.mrb[0].mxu0
      %v1769 = vadd.f32 0.0, %v1768
      %v1770 = vpop.f32.mrb[0].mxu0
      %1771 = vmatprep.mubr.bf16.mxu0 0
      %1772 = vmatmul.mubr.bf16.gmra.mrb[0].mxu0 %v1669
      %v1773 = vpop.f32.mrb[0].mxu0
      %v1774 = vadd.f32 0.0, %v1773
      %v1775 = vpop.f32.mrb[0].mxu0
      %v1776 = vpop.f32.mrb[0].mxu0
      %v1777 = vadd.f32 0.0, %v1776
      %v1778 = vpop.f32.mrb[0].mxu0
      %1779 = vmatprep.mubr.bf16.mxu0 0
      %1780 = vmatmul.mubr.bf16.gmra.mrb[0].mxu0 %v1672
      %v1781 = vpop.f32.mrb[0].mxu0
      %v1782 = vadd.f32 0.0, %v1781
      %v1783 = vpop.f32.mrb[0].mxu0
      %v1784 = vpop.f32.mrb[0].mxu0
      %v1785 = vadd.f32 0.0, %v1784
      %v1786 = vpop.f32.mrb[0].mxu0
      %1787 = vmatprep.mubr.bf16.mxu0 0
      %1788 = vmatmul.mubr.bf16.gmra.mrb[0].mxu0 %v1675
      %v1789 = vpop.f32.mrb[0].mxu0
      %v1790 = vadd.f32 0.0, %v1789
      %v1791 = vpop.f32.mrb[0].mxu0
      %v1792 = vpop.f32.mrb[0].mxu0
      %v1793 = vadd.f32 0.0, %v1792
      %v1794 = vpop.f32.mrb[0].mxu0
      %1795 = vmatprep.mubr.bf16.mxu0 0
      %1796 = vmatmul.mubr.bf16.gmra.mrb[0].mxu0 %v1678
      %v1797 = vpop.f32.mrb[0].mxu0
      %v1798 = vadd.f32 0.0, %v1797
      %v1799 = vpop.f32.mrb[0].mxu0
      %v1800 = vpop.f32.mrb[0].mxu0
      %v1801 = vadd.f32 0.0, %v1800
      %v1802 = vpop.f32.mrb[0].mxu0
      %1803 = vmatprep.mubr.bf16.mxu0 0
      %1804 = vmatmul.mubr.bf16.gmra.mrb[0].mxu0 %v1681
      %v1805 = vpop.f32.mrb[0].mxu0
      %v1806 = vadd.f32 0.0, %v1805
      %v1807 = vpop.f32.mrb[0].mxu0
      %v1808 = vpop.f32.mrb[0].mxu0
      %v1809 = vadd.f32 0.0, %v1808
      %v1810 = vpop.f32.mrb[0].mxu0
      %1811 = vmatprep.mubr.bf16.mxu0 0
      %1812 = vmatmul.mubr.bf16.gmra.mrb[0].mxu0 %v1684
      %v1813 = vpop.f32.mrb[0].mxu0
      %v1814 = vadd.f32 0.0, %v1813
      %v1815 = vpop.f32.mrb[0].mxu0
      %v1816 = vpop.f32.mrb[0].mxu0
      %v1817 = vadd.f32 0.0, %v1816
      %v1818 = vpop.f32.mrb[0].mxu0
      %1819 = vmatprep.mubr.bf16.mxu0 0
      %1820 = vmatmul.mubr.bf16.gmra.mrb[0].mxu0 %v1687
      %v1821 = vpop.f32.mrb[0].mxu0
      %v1822 = vadd.f32 0.0, %v1821
      %v1823 = vpop.f32.mrb[0].mxu0
      %v1824 = vpop.f32.mrb[0].mxu0
      %v1825 = vadd.f32 0.0, %v1824
      %v1826 = vpop.f32.mrb[0].mxu0
      %1827 = vmatprep.mubr.bf16.mxu0 0
      %1828 = vmatmul.mubr.bf16.gmra.mrb[0].mxu0 %v1690
      %v1829 = vpop.f32.mrb[0].mxu0
      %v1830 = vadd.f32 0.0, %v1829
      %v1831 = vpop.f32.mrb[0].mxu0
      %v1832 = vpop.f32.mrb[0].mxu0
      %v1833 = vadd.f32 0.0, %v1832
      %v1834 = vpop.f32.mrb[0].mxu0
      %1835 = vmatprep.mubr.bf16.mxu0 0
      %1836 = vmatmul.mubr.bf16.gmra.mrb[0].mxu0 %v1693
      %v1837 = vpop.f32.mrb[0].mxu0
      %v1838 = vadd.f32 0.0, %v1837
      %v1839 = vpop.f32.mrb[0].mxu0
      %v1840 = vpop.f32.mrb[0].mxu0
      %v1841 = vadd.f32 0.0, %v1840
      %v1842 = vpop.f32.mrb[0].mxu0
      %1843 = vmatprep.mubr.bf16.mxu0 0
      %1844 = vmatmul.mubr.bf16.gmra.mrb[0].mxu0 %v1696
      %v1845 = vpop.f32.mrb[0].mxu0
      %v1846 = vadd.f32 0.0, %v1845
      %v1847 = vpop.f32.mrb[0].mxu0
      %v1848 = vpop.f32.mrb[0].mxu0
      %v1849 = vadd.f32 0.0, %v1848
      %v1850 = vpop.f32.mrb[0].mxu0
      %1851 = vmatprep.mubr.bf16.mxu0 0
      %1852 = vmatmul.mubr.bf16.gmra.mrb[0].mxu0 %v1699
      %v1853 = vpop.f32.mrb[0].mxu0
      %v1854 = vadd.f32 0.0, %v1853
      %v1855 = vpop.f32.mrb[0].mxu0
      %v1856 = vpop.f32.mrb[0].mxu0
      %v1857 = vadd.f32 0.0, %v1856
      %v1858 = vpop.f32.mrb[0].mxu0
      %1859 = vmatprep.mubr.bf16.mxu0 0
      %1860 = vmatmul.mubr.bf16.gmra.mrb[0].mxu0 %v1702
      %v1861 = vpop.f32.mrb[0].mxu0
      %v1862 = vadd.f32 0.0, %v1861
      %v1863 = vpop.f32.mrb[0].mxu0
      %v1864 = vpop.f32.mrb[0].mxu0
      %v1865 = vadd.f32 0.0, %v1864
      %v1866 = vpop.f32.mrb[0].mxu0
      %1867 = vdwg.mxu0
      %v1868 = vadd.f32 %v1317, %v1742
      %v1869 = vadd.f32 %v1320, %v1745
      %v1870 = vadd.f32 %v1325, %v1750
      %v1871 = vadd.f32 %v1328, %v1753
      %v1872 = vadd.f32 %v1333, %v1758
      %v1873 = vadd.f32 %v1336, %v1761
      %v1874 = vadd.f32 %v1341, %v1766
      %v1875 = vadd.f32 %v1344, %v1769
      %v1876 = vadd.f32 %v1349, %v1774
      %v1877 = vadd.f32 %v1352, %v1777
      %v1878 = vadd.f32 %v1357, %v1782
      %v1879 = vadd.f32 %v1360, %v1785
      %v1880 = vadd.f32 %v1365, %v1790
      %v1881 = vadd.f32 %v1368, %v1793
      %v1882 = vadd.f32 %v1373, %v1798
      %v1883 = vadd.f32 %v1376, %v1801
      %v1884 = vadd.f32 %v1381, %v1806
      %v1885 = vadd.f32 %v1384, %v1809
      %v1886 = vadd.f32 %v1389, %v1814
      %v1887 = vadd.f32 %v1392, %v1817
      %v1888 = vadd.f32 %v1397, %v1822
      %v1889 = vadd.f32 %v1400, %v1825
      %v1890 = vadd.f32 %v1405, %v1830
      %v1891 = vadd.f32 %v1408, %v1833
      %v1892 = vadd.f32 %v1413, %v1838
      %v1893 = vadd.f32 %v1416, %v1841
      %v1894 = vadd.f32 %v1421, %v1846
      %v1895 = vadd.f32 %v1424, %v1849
      %v1896 = vadd.f32 %v1429, %v1854
      %v1897 = vadd.f32 %v1432, %v1857
      %v1898 = vadd.f32 %v1437, %v1862
      %v1899 = vadd.f32 %v1440, %v1865
      %s1900 = scalar_lea.vmem [#allocation2], 12
      %v1901 = vld [vmem:[%s1900] sm:$0xf]
      %v1902 = vld [vmem:[%s1900 + $0x4] sm:$0xf]
      %v1903 = vld [vmem:[%s1900 + $0xc] sm:$0xf]
      %v1904 = vld [vmem:[%s1900 + $0x10] sm:$0xf]
      %v1905 = vld [vmem:[%s1900 + $0x18] sm:$0xf]
      %v1906 = vld [vmem:[%s1900 + $0x1c] sm:$0xf]
      %v1907 = vld [vmem:[%s1900 + $0x24] sm:$0xf]
      %v1908 = vld [vmem:[%s1900 + $0x28] sm:$0xf]
      %v1909 = vld [vmem:[%s1900 + $0x30] sm:$0xf]
      %v1910 = vld [vmem:[%s1900 + $0x34] sm:$0xf]
      %v1911 = vld [vmem:[%s1900 + $0x3c] sm:$0xf]
      %v1912 = vld [vmem:[%s1900 + $0x40] sm:$0xf]
      %v1913 = vld [vmem:[%s1900 + $0x48] sm:$0xf]
      %v1914 = vld [vmem:[%s1900 + $0x4c] sm:$0xf]
      %v1915 = vld [vmem:[%s1900 + $0x54] sm:$0xf]
      %v1916 = vld [vmem:[%s1900 + $0x58] sm:$0xf]
      %v1917 = vld [vmem:[%s1900 + $0x60] sm:$0xf]
      %v1918 = vld [vmem:[%s1900 + $0x64] sm:$0xf]
      %v1919 = vld [vmem:[%s1900 + $0x6c] sm:$0xf]
      %v1920 = vld [vmem:[%s1900 + $0x70] sm:$0xf]
      %v1921 = vld [vmem:[%s1900 + $0x78] sm:$0xf]
      %v1922 = vld [vmem:[%s1900 + $0x7c] sm:$0xf]
      %v1923 = vld [vmem:[%s1900 + $0x84] sm:$0xf]
      %v1924 = vld [vmem:[%s1900 + $0x88] sm:$0xf]
      %v1925 = vld [vmem:[%s1900 + $0x90] sm:$0xf]
      %v1926 = vld [vmem:[%s1900 + $0x94] sm:$0xf]
      %v1927 = vld [vmem:[%s1900 + $0x9c] sm:$0xf]
      %v1928 = vld [vmem:[%s1900 + $0xa0] sm:$0xf]
      %v1929 = vld [vmem:[%s1900 + $0xa8] sm:$0xf]
      %v1930 = vld [vmem:[%s1900 + $0xac] sm:$0xf]
      %v1931 = vld [vmem:[%s1900 + $0xb4] sm:$0xf]
      %v1932 = vld [vmem:[%s1900 + $0xb8] sm:$0xf]
      %s1933 = scalar_lea.vmem %s2, 6
      %v1934 = vld [vmem:[%s1933] sm:$0x3]
      %v1967 = vunpack.c.l.b16 %v1901
      %v1968 = vunpack.c.l.b16 %v1902
      %v1969 = vunpack.c.l.b16 %v1903
      %v1970 = vunpack.c.l.b16 %v1904
      %v1971 = vunpack.c.l.b16 %v1905
      %v1972 = vunpack.c.l.b16 %v1906
      %v1973 = vunpack.c.l.b16 %v1907
      %v1974 = vunpack.c.l.b16 %v1908
      %v1975 = vunpack.c.l.b16 %v1909
      %v1976 = vunpack.c.l.b16 %v1910
      %v1977 = vunpack.c.l.b16 %v1911
      %v1978 = vunpack.c.l.b16 %v1912
      %v1979 = vunpack.c.l.b16 %v1913
      %v1980 = vunpack.c.l.b16 %v1914
      %v1981 = vunpack.c.l.b16 %v1915
      %v1982 = vunpack.c.l.b16 %v1916
      %v1983 = vunpack.c.l.b16 %v1917
      %v1984 = vunpack.c.l.b16 %v1918
      %v1985 = vunpack.c.l.b16 %v1919
      %v1986 = vunpack.c.l.b16 %v1920
      %v1987 = vunpack.c.l.b16 %v1921
      %v1988 = vunpack.c.l.b16 %v1922
      %v1989 = vunpack.c.l.b16 %v1923
      %v1990 = vunpack.c.l.b16 %v1924
      %v1991 = vunpack.c.l.b16 %v1925
      %v1992 = vunpack.c.l.b16 %v1926
      %v1993 = vunpack.c.l.b16 %v1927
      %v1994 = vunpack.c.l.b16 %v1928
      %v1995 = vunpack.c.l.b16 %v1929
      %v1996 = vunpack.c.l.b16 %v1930
      %v1997 = vunpack.c.l.b16 %v1931
      %v1998 = vunpack.c.l.b16 %v1932
      %v1999 = vpack.c.b16 %v1968, %v1967
      %v2000 = vpack.c.b16 %v1970, %v1969
      %v2001 = vpack.c.b16 %v1972, %v1971
      %v2002 = vpack.c.b16 %v1974, %v1973
      %v2003 = vpack.c.b16 %v1976, %v1975
      %v2004 = vpack.c.b16 %v1978, %v1977
      %v2005 = vpack.c.b16 %v1980, %v1979
      %v2006 = vpack.c.b16 %v1982, %v1981
      %v2007 = vpack.c.b16 %v1984, %v1983
      %v2008 = vpack.c.b16 %v1986, %v1985
      %v2009 = vpack.c.b16 %v1988, %v1987
      %v2010 = vpack.c.b16 %v1990, %v1989
      %v2011 = vpack.c.b16 %v1992, %v1991
      %v2012 = vpack.c.b16 %v1994, %v1993
      %v2013 = vpack.c.b16 %v1996, %v1995
      %v2014 = vpack.c.b16 %v1998, %v1997
      %v2016 = vsel %vm937, %v1999, 0
      %v2019 = vsel %vm937, %v2000, 0
      %v2022 = vsel %vm937, %v2001, 0
      %v2025 = vsel %vm937, %v2002, 0
      %v2028 = vsel %vm937, %v2003, 0
      %v2031 = vsel %vm937, %v2004, 0
      %v2034 = vsel %vm937, %v2005, 0
      %v2037 = vsel %vm937, %v2006, 0
      %v2040 = vsel %vm937, %v2007, 0
      %v2043 = vsel %vm937, %v2008, 0
      %v2046 = vsel %vm937, %v2009, 0
      %v2049 = vsel %vm937, %v2010, 0
      %v2052 = vsel %vm937, %v2011, 0
      %v2055 = vsel %vm937, %v2012, 0
      %v2058 = vsel %vm937, %v2013, 0
      %v2061 = vsel %vm937, %v2014, 0
      %v2064 = vsel %vm986, %v1934, 0
      %2066 = vmatprep.subr.bf16.mxu0 0
      %2067 = vmatpush1.bf16.msra.mxu0 %v2064
      %2068 = vmatprep.subr.bf16.mxu0 0
      %2069 = vmatpush1.bf16.msra.mxu0 0
      %2070 = vmatprep.subr.bf16.mxu0 0
      %2071 = vmatpush1.bf16.msra.mxu0 0
      %2072 = vmatprep.subr.bf16.mxu0 0
      %2073 = vmatpush1.bf16.msra.mxu0 0
      %2074 = vmatprep.subr.bf16.mxu0 0
      %2075 = vmatpush1.bf16.msra.mxu0 0
      %2076 = vmatprep.subr.bf16.mxu0 0
      %2077 = vmatpush1.bf16.msra.mxu0 0
      %2078 = vmatprep.subr.bf16.mxu0 0
      %2079 = vmatpush1.bf16.msra.mxu0 0
      %2080 = vmatprep.subr.bf16.mxu0 0
      %2081 = vmatpush1.bf16.msra.mxu0 0
      %2082 = vmatprep.subr.bf16.mxu0 0
      %2083 = vmatpush1.bf16.msra.mxu0 0
      %2084 = vmatprep.subr.bf16.mxu0 0
      %2085 = vmatpush1.bf16.msra.mxu0 0
      %2086 = vmatprep.subr.bf16.mxu0 0
      %2087 = vmatpush1.bf16.msra.mxu0 0
      %2088 = vmatprep.subr.bf16.mxu0 0
      %2089 = vmatpush1.bf16.msra.mxu0 0
      %2090 = vmatprep.subr.bf16.mxu0 0
      %2091 = vmatpush1.bf16.msra.mxu0 0
      %2092 = vmatprep.subr.bf16.mxu0 0
      %2093 = vmatpush1.bf16.msra.mxu0 0
      %2094 = vmatprep.subr.bf16.mxu0 0
      %2095 = vmatpush1.bf16.msra.mxu0 0
      %2096 = vmatprep.subr.bf16.mxu0 0
      %2097 = vmatpush1.bf16.msra.mxu0 0
      %2098 = vmatprep.mubr.bf16.mxu0 0
      %2099 = vmatmul.mubr.bf16.gmra.mrb[0].mxu0 %v2016
      %v2100 = vpop.f32.mrb[0].mxu0
      %v2101 = vadd.f32 0.0, %v2100
      %v2102 = vpop.f32.mrb[0].mxu0
      %v2103 = vpop.f32.mrb[0].mxu0
      %v2104 = vadd.f32 0.0, %v2103
      %v2105 = vpop.f32.mrb[0].mxu0
      %2106 = vmatprep.mubr.bf16.mxu0 0
      %2107 = vmatmul.mubr.bf16.gmra.mrb[0].mxu0 %v2019
      %v2108 = vpop.f32.mrb[0].mxu0
      %v2109 = vadd.f32 0.0, %v2108
      %v2110 = vpop.f32.mrb[0].mxu0
      %v2111 = vpop.f32.mrb[0].mxu0
      %v2112 = vadd.f32 0.0, %v2111
      %v2113 = vpop.f32.mrb[0].mxu0
      %2114 = vmatprep.mubr.bf16.mxu0 0
      %2115 = vmatmul.mubr.bf16.gmra.mrb[0].mxu0 %v2022
      %v2116 = vpop.f32.mrb[0].mxu0
      %v2117 = vadd.f32 0.0, %v2116
      %v2118 = vpop.f32.mrb[0].mxu0
      %v2119 = vpop.f32.mrb[0].mxu0
      %v2120 = vadd.f32 0.0, %v2119
      %v2121 = vpop.f32.mrb[0].mxu0
      %2122 = vmatprep.mubr.bf16.mxu0 0
      %2123 = vmatmul.mubr.bf16.gmra.mrb[0].mxu0 %v2025
      %v2124 = vpop.f32.mrb[0].mxu0
      %v2125 = vadd.f32 0.0, %v2124
      %v2126 = vpop.f32.mrb[0].mxu0
      %v2127 = vpop.f32.mrb[0].mxu0
      %v2128 = vadd.f32 0.0, %v2127
      %v2129 = vpop.f32.mrb[0].mxu0
      %2130 = vmatprep.mubr.bf16.mxu0 0
      %2131 = vmatmul.mubr.bf16.gmra.mrb[0].mxu0 %v2028
      %v2132 = vpop.f32.mrb[0].mxu0
      %v2133 = vadd.f32 0.0, %v2132
      %v2134 = vpop.f32.mrb[0].mxu0
      %v2135 = vpop.f32.mrb[0].mxu0
      %v2136 = vadd.f32 0.0, %v2135
      %v2137 = vpop.f32.mrb[0].mxu0
      %2138 = vmatprep.mubr.bf16.mxu0 0
      %2139 = vmatmul.mubr.bf16.gmra.mrb[0].mxu0 %v2031
      %v2140 = vpop.f32.mrb[0].mxu0
      %v2141 = vadd.f32 0.0, %v2140
      %v2142 = vpop.f32.mrb[0].mxu0
      %v2143 = vpop.f32.mrb[0].mxu0
      %v2144 = vadd.f32 0.0, %v2143
      %v2145 = vpop.f32.mrb[0].mxu0
      %2146 = vmatprep.mubr.bf16.mxu0 0
      %2147 = vmatmul.mubr.bf16.gmra.mrb[0].mxu0 %v2034
      %v2148 = vpop.f32.mrb[0].mxu0
      %v2149 = vadd.f32 0.0, %v2148
      %v2150 = vpop.f32.mrb[0].mxu0
      %v2151 = vpop.f32.mrb[0].mxu0
      %v2152 = vadd.f32 0.0, %v2151
      %v2153 = vpop.f32.mrb[0].mxu0
      %2154 = vmatprep.mubr.bf16.mxu0 0
      %2155 = vmatmul.mubr.bf16.gmra.mrb[0].mxu0 %v2037
      %v2156 = vpop.f32.mrb[0].mxu0
      %v2157 = vadd.f32 0.0, %v2156
      %v2158 = vpop.f32.mrb[0].mxu0
      %v2159 = vpop.f32.mrb[0].mxu0
      %v2160 = vadd.f32 0.0, %v2159
      %v2161 = vpop.f32.mrb[0].mxu0
      %2162 = vmatprep.mubr.bf16.mxu0 0
      %2163 = vmatmul.mubr.bf16.gmra.mrb[0].mxu0 %v2040
      %v2164 = vpop.f32.mrb[0].mxu0
      %v2165 = vadd.f32 0.0, %v2164
      %v2166 = vpop.f32.mrb[0].mxu0
      %v2167 = vpop.f32.mrb[0].mxu0
      %v2168 = vadd.f32 0.0, %v2167
      %v2169 = vpop.f32.mrb[0].mxu0
      %2170 = vmatprep.mubr.bf16.mxu0 0
      %2171 = vmatmul.mubr.bf16.gmra.mrb[0].mxu0 %v2043
      %v2172 = vpop.f32.mrb[0].mxu0
      %v2173 = vadd.f32 0.0, %v2172
      %v2174 = vpop.f32.mrb[0].mxu0
      %v2175 = vpop.f32.mrb[0].mxu0
      %v2176 = vadd.f32 0.0, %v2175
      %v2177 = vpop.f32.mrb[0].mxu0
      %2178 = vmatprep.mubr.bf16.mxu0 0
      %2179 = vmatmul.mubr.bf16.gmra.mrb[0].mxu0 %v2046
      %v2180 = vpop.f32.mrb[0].mxu0
      %v2181 = vadd.f32 0.0, %v2180
      %v2182 = vpop.f32.mrb[0].mxu0
      %v2183 = vpop.f32.mrb[0].mxu0
      %v2184 = vadd.f32 0.0, %v2183
      %v2185 = vpop.f32.mrb[0].mxu0
      %2186 = vmatprep.mubr.bf16.mxu0 0
      %2187 = vmatmul.mubr.bf16.gmra.mrb[0].mxu0 %v2049
      %v2188 = vpop.f32.mrb[0].mxu0
      %v2189 = vadd.f32 0.0, %v2188
      %v2190 = vpop.f32.mrb[0].mxu0
      %v2191 = vpop.f32.mrb[0].mxu0
      %v2192 = vadd.f32 0.0, %v2191
      %v2193 = vpop.f32.mrb[0].mxu0
      %2194 = vmatprep.mubr.bf16.mxu0 0
      %2195 = vmatmul.mubr.bf16.gmra.mrb[0].mxu0 %v2052
      %v2196 = vpop.f32.mrb[0].mxu0
      %v2197 = vadd.f32 0.0, %v2196
      %v2198 = vpop.f32.mrb[0].mxu0
      %v2199 = vpop.f32.mrb[0].mxu0
      %v2200 = vadd.f32 0.0, %v2199
      %v2201 = vpop.f32.mrb[0].mxu0
      %2202 = vmatprep.mubr.bf16.mxu0 0
      %2203 = vmatmul.mubr.bf16.gmra.mrb[0].mxu0 %v2055
      %v2204 = vpop.f32.mrb[0].mxu0
      %v2205 = vadd.f32 0.0, %v2204
      %v2206 = vpop.f32.mrb[0].mxu0
      %v2207 = vpop.f32.mrb[0].mxu0
      %v2208 = vadd.f32 0.0, %v2207
      %v2209 = vpop.f32.mrb[0].mxu0
      %2210 = vmatprep.mubr.bf16.mxu0 0
      %2211 = vmatmul.mubr.bf16.gmra.mrb[0].mxu0 %v2058
      %v2212 = vpop.f32.mrb[0].mxu0
      %v2213 = vadd.f32 0.0, %v2212
      %v2214 = vpop.f32.mrb[0].mxu0
      %v2215 = vpop.f32.mrb[0].mxu0
      %v2216 = vadd.f32 0.0, %v2215
      %v2217 = vpop.f32.mrb[0].mxu0
      %2218 = vmatprep.mubr.bf16.mxu0 0
      %2219 = vmatmul.mubr.bf16.gmra.mrb[0].mxu0 %v2061
      %v2220 = vpop.f32.mrb[0].mxu0
      %v2221 = vadd.f32 0.0, %v2220
      %v2222 = vpop.f32.mrb[0].mxu0
      %v2223 = vpop.f32.mrb[0].mxu0
      %v2224 = vadd.f32 0.0, %v2223
      %v2225 = vpop.f32.mrb[0].mxu0
      %2226 = vdwg.mxu0
      %v2227 = vadd.f32 %v1868, %v2101
      %v2228 = vadd.f32 %v1869, %v2104
      %v2229 = vadd.f32 %v1870, %v2109
      %v2230 = vadd.f32 %v1871, %v2112
      %v2231 = vadd.f32 %v1872, %v2117
      %v2232 = vadd.f32 %v1873, %v2120
      %v2233 = vadd.f32 %v1874, %v2125
      %v2234 = vadd.f32 %v1875, %v2128
      %v2235 = vadd.f32 %v1876, %v2133
      %v2236 = vadd.f32 %v1877, %v2136
      %v2237 = vadd.f32 %v1878, %v2141
      %v2238 = vadd.f32 %v1879, %v2144
      %v2239 = vadd.f32 %v1880, %v2149
      %v2240 = vadd.f32 %v1881, %v2152
      %v2241 = vadd.f32 %v1882, %v2157
      %v2242 = vadd.f32 %v1883, %v2160
      %v2243 = vadd.f32 %v1884, %v2165
      %v2244 = vadd.f32 %v1885, %v2168
      %v2245 = vadd.f32 %v1886, %v2173
      %v2246 = vadd.f32 %v1887, %v2176
      %v2247 = vadd.f32 %v1888, %v2181
      %v2248 = vadd.f32 %v1889, %v2184
      %v2249 = vadd.f32 %v1890, %v2189
      %v2250 = vadd.f32 %v1891, %v2192
      %v2251 = vadd.f32 %v1892, %v2197
      %v2252 = vadd.f32 %v1893, %v2200
      %v2253 = vadd.f32 %v1894, %v2205
      %v2254 = vadd.f32 %v1895, %v2208
      %v2255 = vadd.f32 %v1896, %v2213
      %v2256 = vadd.f32 %v1897, %v2216
      %v2257 = vadd.f32 %v1898, %v2221
      %v2258 = vadd.f32 %v1899, %v2224
      %v2259 = vld [vmem:[%s1900] sm:$0xf]
      %v2260 = vld [vmem:[%s1900 + $0x4] sm:$0xf]
      %v2261 = vld [vmem:[%s1900 + $0x8] sm:$0x1]
      %v2262 = vld [vmem:[%s1900 + $0xc] sm:$0xf]
      %v2263 = vld [vmem:[%s1900 + $0x10] sm:$0xf]
      %v2264 = vld [vmem:[%s1900 + $0x14] sm:$0x1]
      %v2265 = vld [vmem:[%s1900 + $0x18] sm:$0xf]
      %v2266 = vld [vmem:[%s1900 + $0x1c] sm:$0xf]
      %v2267 = vld [vmem:[%s1900 + $0x20] sm:$0x1]
      %v2268 = vld [vmem:[%s1900 + $0x24] sm:$0xf]
      %v2269 = vld [vmem:[%s1900 + $0x28] sm:$0xf]
      %v2270 = vld [vmem:[%s1900 + $0x2c] sm:$0x1]
      %v2271 = vld [vmem:[%s1900 + $0x30] sm:$0xf]
      %v2272 = vld [vmem:[%s1900 + $0x34] sm:$0xf]
      %v2273 = vld [vmem:[%s1900 + $0x38] sm:$0x1]
      %v2274 = vld [vmem:[%s1900 + $0x3c] sm:$0xf]
      %v2275 = vld [vmem:[%s1900 + $0x40] sm:$0xf]
      %v2276 = vld [vmem:[%s1900 + $0x44] sm:$0x1]
      %v2277 = vld [vmem:[%s1900 + $0x48] sm:$0xf]
      %v2278 = vld [vmem:[%s1900 + $0x4c] sm:$0xf]
      %v2279 = vld [vmem:[%s1900 + $0x50] sm:$0x1]
      %v2280 = vld [vmem:[%s1900 + $0x54] sm:$0xf]
      %v2281 = vld [vmem:[%s1900 + $0x58] sm:$0xf]
      %v2282 = vld [vmem:[%s1900 + $0x5c] sm:$0x1]
      %v2283 = vld [vmem:[%s1900 + $0x60] sm:$0xf]
      %v2284 = vld [vmem:[%s1900 + $0x64] sm:$0xf]
      %v2285 = vld [vmem:[%s1900 + $0x68] sm:$0x1]
      %v2286 = vld [vmem:[%s1900 + $0x6c] sm:$0xf]
      %v2287 = vld [vmem:[%s1900 + $0x70] sm:$0xf]
      %v2288 = vld [vmem:[%s1900 + $0x74] sm:$0x1]
      %v2289 = vld [vmem:[%s1900 + $0x78] sm:$0xf]
      %v2290 = vld [vmem:[%s1900 + $0x7c] sm:$0xf]
      %v2291 = vld [vmem:[%s1900 + $0x80] sm:$0x1]
      %v2292 = vld [vmem:[%s1900 + $0x84] sm:$0xf]
      %v2293 = vld [vmem:[%s1900 + $0x88] sm:$0xf]
      %v2294 = vld [vmem:[%s1900 + $0x8c] sm:$0x1]
      %v2295 = vld [vmem:[%s1900 + $0x90] sm:$0xf]
      %v2296 = vld [vmem:[%s1900 + $0x94] sm:$0xf]
      %v2297 = vld [vmem:[%s1900 + $0x98] sm:$0x1]
      %v2298 = vld [vmem:[%s1900 + $0x9c] sm:$0xf]
      %v2299 = vld [vmem:[%s1900 + $0xa0] sm:$0xf]
      %v2300 = vld [vmem:[%s1900 + $0xa4] sm:$0x1]
      %v2301 = vld [vmem:[%s1900 + $0xa8] sm:$0xf]
      %v2302 = vld [vmem:[%s1900 + $0xac] sm:$0xf]
      %v2303 = vld [vmem:[%s1900 + $0xb0] sm:$0x1]
      %v2304 = vld [vmem:[%s1900 + $0xb4] sm:$0xf]
      %v2305 = vld [vmem:[%s1900 + $0xb8] sm:$0xf]
      %v2306 = vld [vmem:[%s1900 + $0xbc] sm:$0x1]
      %v2308 = vshrl.u32 %v2259, 16
      %v2310 = vrot.slane %v2308, 4
      %v2311 = vshll.u32 %v2259, 16
      %v2313 = vrot.slane %v2311, 5
      %v2314 = vor.u32 %v2310, %v2313
      %v2315 = vrot.slane %v2314, 4
      %v2317 = vshll.u32 %v2260, 16
      %v2319 = vrot.slane %v2317, 5
      %v2320 = vsel %vm502, %v2315, %v2319
      %v2321 = vshrl.u32 %v2260, 16
      %v2323 = vrot.slane %v2321, 4
      %v2324 = vor.u32 %v2323, %v2319
      %v2325 = vrot.slane %v2324, 4
      %v2327 = vshll.u32 %v2261, 16
      %v2329 = vrot.slane %v2327, 5
      %v2330 = vsel %vm502, %v2325, %v2329
      %v2332 = vshrl.u32 %v2262, 16
      %v2334 = vrot.slane %v2332, 4
      %v2335 = vshll.u32 %v2262, 16
      %v2337 = vrot.slane %v2335, 5
      %v2338 = vor.u32 %v2334, %v2337
      %v2339 = vrot.slane %v2338, 4
      %v2341 = vshll.u32 %v2263, 16
      %v2343 = vrot.slane %v2341, 5
      %v2344 = vsel %vm502, %v2339, %v2343
      %v2345 = vshrl.u32 %v2263, 16
      %v2347 = vrot.slane %v2345, 4
      %v2348 = vor.u32 %v2347, %v2343
      %v2349 = vrot.slane %v2348, 4
      %v2351 = vshll.u32 %v2264, 16
      %v2353 = vrot.slane %v2351, 5
      %v2354 = vsel %vm502, %v2349, %v2353
      %v2356 = vshrl.u32 %v2265, 16
      %v2358 = vrot.slane %v2356, 4
      %v2359 = vshll.u32 %v2265, 16
      %v2361 = vrot.slane %v2359, 5
      %v2362 = vor.u32 %v2358, %v2361
      %v2363 = vrot.slane %v2362, 4
      %v2365 = vshll.u32 %v2266, 16
      %v2367 = vrot.slane %v2365, 5
      %v2368 = vsel %vm502, %v2363, %v2367
      %v2369 = vshrl.u32 %v2266, 16
      %v2371 = vrot.slane %v2369, 4
      %v2372 = vor.u32 %v2371, %v2367
      %v2373 = vrot.slane %v2372, 4
      %v2375 = vshll.u32 %v2267, 16
      %v2377 = vrot.slane %v2375, 5
      %v2378 = vsel %vm502, %v2373, %v2377
      %v2380 = vshrl.u32 %v2268, 16
      %v2382 = vrot.slane %v2380, 4
      %v2383 = vshll.u32 %v2268, 16
      %v2385 = vrot.slane %v2383, 5
      %v2386 = vor.u32 %v2382, %v2385
      %v2387 = vrot.slane %v2386, 4
      %v2389 = vshll.u32 %v2269, 16
      %v2391 = vrot.slane %v2389, 5
      %v2392 = vsel %vm502, %v2387, %v2391
      %v2393 = vshrl.u32 %v2269, 16
      %v2395 = vrot.slane %v2393, 4
      %v2396 = vor.u32 %v2395, %v2391
      %v2397 = vrot.slane %v2396, 4
      %v2399 = vshll.u32 %v2270, 16
      %v2401 = vrot.slane %v2399, 5
      %v2402 = vsel %vm502, %v2397, %v2401
      %v2404 = vshrl.u32 %v2271, 16
      %v2406 = vrot.slane %v2404, 4
      %v2407 = vshll.u32 %v2271, 16
      %v2409 = vrot.slane %v2407, 5
      %v2410 = vor.u32 %v2406, %v2409
      %v2411 = vrot.slane %v2410, 4
      %v2413 = vshll.u32 %v2272, 16
      %v2415 = vrot.slane %v2413, 5
      %v2416 = vsel %vm502, %v2411, %v2415
      %v2417 = vshrl.u32 %v2272, 16
      %v2419 = vrot.slane %v2417, 4
      %v2420 = vor.u32 %v2419, %v2415
      %v2421 = vrot.slane %v2420, 4
      %v2423 = vshll.u32 %v2273, 16
      %v2425 = vrot.slane %v2423, 5
      %v2426 = vsel %vm502, %v2421, %v2425
      %v2428 = vshrl.u32 %v2274, 16
      %v2430 = vrot.slane %v2428, 4
      %v2431 = vshll.u32 %v2274, 16
      %v2433 = vrot.slane %v2431, 5
      %v2434 = vor.u32 %v2430, %v2433
      %v2435 = vrot.slane %v2434, 4
      %v2437 = vshll.u32 %v2275, 16
      %v2439 = vrot.slane %v2437, 5
      %v2440 = vsel %vm502, %v2435, %v2439
      %v2441 = vshrl.u32 %v2275, 16
      %v2443 = vrot.slane %v2441, 4
      %v2444 = vor.u32 %v2443, %v2439
      %v2445 = vrot.slane %v2444, 4
      %v2447 = vshll.u32 %v2276, 16
      %v2449 = vrot.slane %v2447, 5
      %v2450 = vsel %vm502, %v2445, %v2449
      %v2452 = vshrl.u32 %v2277, 16
      %v2454 = vrot.slane %v2452, 4
      %v2455 = vshll.u32 %v2277, 16
      %v2457 = vrot.slane %v2455, 5
      %v2458 = vor.u32 %v2454, %v2457
      %v2459 = vrot.slane %v2458, 4
      %v2461 = vshll.u32 %v2278, 16
      %v2463 = vrot.slane %v2461, 5
      %v2464 = vsel %vm502, %v2459, %v2463
      %v2465 = vshrl.u32 %v2278, 16
      %v2467 = vrot.slane %v2465, 4
      %v2468 = vor.u32 %v2467, %v2463
      %v2469 = vrot.slane %v2468, 4
      %v2471 = vshll.u32 %v2279, 16
      %v2473 = vrot.slane %v2471, 5
      %v2474 = vsel %vm502, %v2469, %v2473
      %v2476 = vshrl.u32 %v2280, 16
      %v2478 = vrot.slane %v2476, 4
      %v2479 = vshll.u32 %v2280, 16
      %v2481 = vrot.slane %v2479, 5
      %v2482 = vor.u32 %v2478, %v2481
      %v2483 = vrot.slane %v2482, 4
      %v2485 = vshll.u32 %v2281, 16
      %v2487 = vrot.slane %v2485, 5
      %v2488 = vsel %vm502, %v2483, %v2487
      %v2489 = vshrl.u32 %v2281, 16
      %v2491 = vrot.slane %v2489, 4
      %v2492 = vor.u32 %v2491, %v2487
      %v2493 = vrot.slane %v2492, 4
      %v2495 = vshll.u32 %v2282, 16
      %v2497 = vrot.slane %v2495, 5
      %v2498 = vsel %vm502, %v2493, %v2497
      %v2500 = vshrl.u32 %v2283, 16
      %v2502 = vrot.slane %v2500, 4
      %v2503 = vshll.u32 %v2283, 16
      %v2505 = vrot.slane %v2503, 5
      %v2506 = vor.u32 %v2502, %v2505
      %v2507 = vrot.slane %v2506, 4
      %v2509 = vshll.u32 %v2284, 16
      %v2511 = vrot.slane %v2509, 5
      %v2512 = vsel %vm502, %v2507, %v2511
      %v2513 = vshrl.u32 %v2284, 16
      %v2515 = vrot.slane %v2513, 4
      %v2516 = vor.u32 %v2515, %v2511
      %v2517 = vrot.slane %v2516, 4
      %v2519 = vshll.u32 %v2285, 16
      %v2521 = vrot.slane %v2519, 5
      %v2522 = vsel %vm502, %v2517, %v2521
      %v2524 = vshrl.u32 %v2286, 16
      %v2526 = vrot.slane %v2524, 4
      %v2527 = vshll.u32 %v2286, 16
      %v2529 = vrot.slane %v2527, 5
      %v2530 = vor.u32 %v2526, %v2529
      %v2531 = vrot.slane %v2530, 4
      %v2533 = vshll.u32 %v2287, 16
      %v2535 = vrot.slane %v2533, 5
      %v2536 = vsel %vm502, %v2531, %v2535
      %v2537 = vshrl.u32 %v2287, 16
      %v2539 = vrot.slane %v2537, 4
      %v2540 = vor.u32 %v2539, %v2535
      %v2541 = vrot.slane %v2540, 4
      %v2543 = vshll.u32 %v2288, 16
      %v2545 = vrot.slane %v2543, 5
      %v2546 = vsel %vm502, %v2541, %v2545
      %v2548 = vshrl.u32 %v2289, 16
      %v2550 = vrot.slane %v2548, 4
      %v2551 = vshll.u32 %v2289, 16
      %v2553 = vrot.slane %v2551, 5
      %v2554 = vor.u32 %v2550, %v2553
      %v2555 = vrot.slane %v2554, 4
      %v2557 = vshll.u32 %v2290, 16
      %v2559 = vrot.slane %v2557, 5
      %v2560 = vsel %vm502, %v2555, %v2559
      %v2561 = vshrl.u32 %v2290, 16
      %v2563 = vrot.slane %v2561, 4
      %v2564 = vor.u32 %v2563, %v2559
      %v2565 = vrot.slane %v2564, 4
      %v2567 = vshll.u32 %v2291, 16
      %v2569 = vrot.slane %v2567, 5
      %v2570 = vsel %vm502, %v2565, %v2569
      %v2572 = vshrl.u32 %v2292, 16
      %v2574 = vrot.slane %v2572, 4
      %v2575 = vshll.u32 %v2292, 16
      %v2577 = vrot.slane %v2575, 5
      %v2578 = vor.u32 %v2574, %v2577
      %v2579 = vrot.slane %v2578, 4
      %v2581 = vshll.u32 %v2293, 16
      %v2583 = vrot.slane %v2581, 5
      %v2584 = vsel %vm502, %v2579, %v2583
      %v2585 = vshrl.u32 %v2293, 16
      %v2587 = vrot.slane %v2585, 4
      %v2588 = vor.u32 %v2587, %v2583
      %v2589 = vrot.slane %v2588, 4
      %v2591 = vshll.u32 %v2294, 16
      %v2593 = vrot.slane %v2591, 5
      %v2594 = vsel %vm502, %v2589, %v2593
      %v2596 = vshrl.u32 %v2295, 16
      %v2598 = vrot.slane %v2596, 4
      %v2599 = vshll.u32 %v2295, 16
      %v2601 = vrot.slane %v2599, 5
      %v2602 = vor.u32 %v2598, %v2601
      %v2603 = vrot.slane %v2602, 4
      %v2605 = vshll.u32 %v2296, 16
      %v2607 = vrot.slane %v2605, 5
      %v2608 = vsel %vm502, %v2603, %v2607
      %v2609 = vshrl.u32 %v2296, 16
      %v2611 = vrot.slane %v2609, 4
      %v2612 = vor.u32 %v2611, %v2607
      %v2613 = vrot.slane %v2612, 4
      %v2615 = vshll.u32 %v2297, 16
      %v2617 = vrot.slane %v2615, 5
      %v2618 = vsel %vm502, %v2613, %v2617
      %v2620 = vshrl.u32 %v2298, 16
      %v2622 = vrot.slane %v2620, 4
      %v2623 = vshll.u32 %v2298, 16
      %v2625 = vrot.slane %v2623, 5
      %v2626 = vor.u32 %v2622, %v2625
      %v2627 = vrot.slane %v2626, 4
      %v2629 = vshll.u32 %v2299, 16
      %v2631 = vrot.slane %v2629, 5
      %v2632 = vsel %vm502, %v2627, %v2631
      %v2633 = vshrl.u32 %v2299, 16
      %v2635 = vrot.slane %v2633, 4
      %v2636 = vor.u32 %v2635, %v2631
      %v2637 = vrot.slane %v2636, 4
      %v2639 = vshll.u32 %v2300, 16
      %v2641 = vrot.slane %v2639, 5
      %v2642 = vsel %vm502, %v2637, %v2641
      %v2644 = vshrl.u32 %v2301, 16
      %v2646 = vrot.slane %v2644, 4
      %v2647 = vshll.u32 %v2301, 16
      %v2649 = vrot.slane %v2647, 5
      %v2650 = vor.u32 %v2646, %v2649
      %v2651 = vrot.slane %v2650, 4
      %v2653 = vshll.u32 %v2302, 16
      %v2655 = vrot.slane %v2653, 5
      %v2656 = vsel %vm502, %v2651, %v2655
      %v2657 = vshrl.u32 %v2302, 16
      %v2659 = vrot.slane %v2657, 4
      %v2660 = vor.u32 %v2659, %v2655
      %v2661 = vrot.slane %v2660, 4
      %v2663 = vshll.u32 %v2303, 16
      %v2665 = vrot.slane %v2663, 5
      %v2666 = vsel %vm502, %v2661, %v2665
      %v2668 = vshrl.u32 %v2304, 16
      %v2670 = vrot.slane %v2668, 4
      %v2671 = vshll.u32 %v2304, 16
      %v2673 = vrot.slane %v2671, 5
      %v2674 = vor.u32 %v2670, %v2673
      %v2675 = vrot.slane %v2674, 4
      %v2677 = vshll.u32 %v2305, 16
      %v2679 = vrot.slane %v2677, 5
      %v2680 = vsel %vm502, %v2675, %v2679
      %v2681 = vshrl.u32 %v2305, 16
      %v2683 = vrot.slane %v2681, 4
      %v2684 = vor.u32 %v2683, %v2679
      %v2685 = vrot.slane %v2684, 4
      %v2687 = vshll.u32 %v2306, 16
      %v2689 = vrot.slane %v2687, 5
      %v2690 = vsel %vm502, %v2685, %v2689
      %s2691 = scalar_lea.vmem %s2, 8
      %v2692 = vld [vmem:[%s2691] sm:$0x3]
      %v2693 = vunpack.c.l.b16 %v2320
      %v2694 = vunpack.c.l.b16 %v2330
      %v2695 = vunpack.c.l.b16 %v2344
      %v2696 = vunpack.c.l.b16 %v2354
      %v2697 = vunpack.c.l.b16 %v2368
      %v2698 = vunpack.c.l.b16 %v2378
      %v2699 = vunpack.c.l.b16 %v2392
      %v2700 = vunpack.c.l.b16 %v2402
      %v2701 = vunpack.c.l.b16 %v2416
      %v2702 = vunpack.c.l.b16 %v2426
      %v2703 = vunpack.c.l.b16 %v2440
      %v2704 = vunpack.c.l.b16 %v2450
      %v2705 = vunpack.c.l.b16 %v2464
      %v2706 = vunpack.c.l.b16 %v2474
      %v2707 = vunpack.c.l.b16 %v2488
      %v2708 = vunpack.c.l.b16 %v2498
      %v2709 = vunpack.c.l.b16 %v2512
      %v2710 = vunpack.c.l.b16 %v2522
      %v2711 = vunpack.c.l.b16 %v2536
      %v2712 = vunpack.c.l.b16 %v2546
      %v2713 = vunpack.c.l.b16 %v2560
      %v2714 = vunpack.c.l.b16 %v2570
      %v2715 = vunpack.c.l.b16 %v2584
      %v2716 = vunpack.c.l.b16 %v2594
      %v2717 = vunpack.c.l.b16 %v2608
      %v2718 = vunpack.c.l.b16 %v2618
      %v2719 = vunpack.c.l.b16 %v2632
      %v2720 = vunpack.c.l.b16 %v2642
      %v2721 = vunpack.c.l.b16 %v2656
      %v2722 = vunpack.c.l.b16 %v2666
      %v2723 = vunpack.c.l.b16 %v2680
      %v2724 = vunpack.c.l.b16 %v2690
      %v2725 = vpack.c.b16 %v2694, %v2693
      %v2726 = vpack.c.b16 %v2696, %v2695
      %v2727 = vpack.c.b16 %v2698, %v2697
      %v2728 = vpack.c.b16 %v2700, %v2699
      %v2729 = vpack.c.b16 %v2702, %v2701
      %v2730 = vpack.c.b16 %v2704, %v2703
      %v2731 = vpack.c.b16 %v2706, %v2705
      %v2732 = vpack.c.b16 %v2708, %v2707
      %v2733 = vpack.c.b16 %v2710, %v2709
      %v2734 = vpack.c.b16 %v2712, %v2711
      %v2735 = vpack.c.b16 %v2714, %v2713
      %v2736 = vpack.c.b16 %v2716, %v2715
      %v2737 = vpack.c.b16 %v2718, %v2717
      %v2738 = vpack.c.b16 %v2720, %v2719
      %v2739 = vpack.c.b16 %v2722, %v2721
      %v2740 = vpack.c.b16 %v2724, %v2723
      %v2742 = vsel %vm937, %v2725, 0
      %v2745 = vsel %vm937, %v2726, 0
      %v2748 = vsel %vm937, %v2727, 0
      %v2751 = vsel %vm937, %v2728, 0
      %v2754 = vsel %vm937, %v2729, 0
      %v2757 = vsel %vm937, %v2730, 0
      %v2760 = vsel %vm937, %v2731, 0
      %v2763 = vsel %vm937, %v2732, 0
      %v2766 = vsel %vm937, %v2733, 0
      %v2769 = vsel %vm937, %v2734, 0
      %v2772 = vsel %vm937, %v2735, 0
      %v2775 = vsel %vm937, %v2736, 0
      %v2778 = vsel %vm937, %v2737, 0
      %v2781 = vsel %vm937, %v2738, 0
      %v2784 = vsel %vm937, %v2739, 0
      %v2787 = vsel %vm937, %v2740, 0
      %v2790 = vsel %vm986, %v2692, 0
      %2792 = vmatprep.subr.bf16.mxu0 0
      %2793 = vmatpush1.bf16.msra.mxu0 %v2790
      %2794 = vmatprep.subr.bf16.mxu0 0
      %2795 = vmatpush1.bf16.msra.mxu0 0
      %2796 = vmatprep.subr.bf16.mxu0 0
      %2797 = vmatpush1.bf16.msra.mxu0 0
      %2798 = vmatprep.subr.bf16.mxu0 0
      %2799 = vmatpush1.bf16.msra.mxu0 0
      %2800 = vmatprep.subr.bf16.mxu0 0
      %2801 = vmatpush1.bf16.msra.mxu0 0
      %2802 = vmatprep.subr.bf16.mxu0 0
      %2803 = vmatpush1.bf16.msra.mxu0 0
      %2804 = vmatprep.subr.bf16.mxu0 0
      %2805 = vmatpush1.bf16.msra.mxu0 0
      %2806 = vmatprep.subr.bf16.mxu0 0
      %2807 = vmatpush1.bf16.msra.mxu0 0
      %2808 = vmatprep.subr.bf16.mxu0 0
      %2809 = vmatpush1.bf16.msra.mxu0 0
      %2810 = vmatprep.subr.bf16.mxu0 0
      %2811 = vmatpush1.bf16.msra.mxu0 0
      %2812 = vmatprep.subr.bf16.mxu0 0
      %2813 = vmatpush1.bf16.msra.mxu0 0
      %2814 = vmatprep.subr.bf16.mxu0 0
      %2815 = vmatpush1.bf16.msra.mxu0 0
      %2816 = vmatprep.subr.bf16.mxu0 0
      %2817 = vmatpush1.bf16.msra.mxu0 0
      %2818 = vmatprep.subr.bf16.mxu0 0
      %2819 = vmatpush1.bf16.msra.mxu0 0
      %2820 = vmatprep.subr.bf16.mxu0 0
      %2821 = vmatpush1.bf16.msra.mxu0 0
      %2822 = vmatprep.subr.bf16.mxu0 0
      %2823 = vmatpush1.bf16.msra.mxu0 0
      %2824 = vmatprep.mubr.bf16.mxu0 0
      %2825 = vmatmul.mubr.bf16.gmra.mrb[0].mxu0 %v2742
      %v2826 = vpop.f32.mrb[0].mxu0
      %v2827 = vadd.f32 0.0, %v2826
      %v2828 = vpop.f32.mrb[0].mxu0
      %v2829 = vpop.f32.mrb[0].mxu0
      %v2830 = vadd.f32 0.0, %v2829
      %v2831 = vpop.f32.mrb[0].mxu0
      %2832 = vmatprep.mubr.bf16.mxu0 0
      %2833 = vmatmul.mubr.bf16.gmra.mrb[0].mxu0 %v2745
      %v2834 = vpop.f32.mrb[0].mxu0
      %v2835 = vadd.f32 0.0, %v2834
      %v2836 = vpop.f32.mrb[0].mxu0
      %v2837 = vpop.f32.mrb[0].mxu0
      %v2838 = vadd.f32 0.0, %v2837
      %v2839 = vpop.f32.mrb[0].mxu0
      %2840 = vmatprep.mubr.bf16.mxu0 0
      %2841 = vmatmul.mubr.bf16.gmra.mrb[0].mxu0 %v2748
      %v2842 = vpop.f32.mrb[0].mxu0
      %v2843 = vadd.f32 0.0, %v2842
      %v2844 = vpop.f32.mrb[0].mxu0
      %v2845 = vpop.f32.mrb[0].mxu0
      %v2846 = vadd.f32 0.0, %v2845
      %v2847 = vpop.f32.mrb[0].mxu0
      %2848 = vmatprep.mubr.bf16.mxu0 0
      %2849 = vmatmul.mubr.bf16.gmra.mrb[0].mxu0 %v2751
      %v2850 = vpop.f32.mrb[0].mxu0
      %v2851 = vadd.f32 0.0, %v2850
      %v2852 = vpop.f32.mrb[0].mxu0
      %v2853 = vpop.f32.mrb[0].mxu0
      %v2854 = vadd.f32 0.0, %v2853
      %v2855 = vpop.f32.mrb[0].mxu0
      %2856 = vmatprep.mubr.bf16.mxu0 0
      %2857 = vmatmul.mubr.bf16.gmra.mrb[0].mxu0 %v2754
      %v2858 = vpop.f32.mrb[0].mxu0
      %v2859 = vadd.f32 0.0, %v2858
      %v2860 = vpop.f32.mrb[0].mxu0
      %v2861 = vpop.f32.mrb[0].mxu0
      %v2862 = vadd.f32 0.0, %v2861
      %v2863 = vpop.f32.mrb[0].mxu0
      %2864 = vmatprep.mubr.bf16.mxu0 0
      %2865 = vmatmul.mubr.bf16.gmra.mrb[0].mxu0 %v2757
      %v2866 = vpop.f32.mrb[0].mxu0
      %v2867 = vadd.f32 0.0, %v2866
      %v2868 = vpop.f32.mrb[0].mxu0
      %v2869 = vpop.f32.mrb[0].mxu0
      %v2870 = vadd.f32 0.0, %v2869
      %v2871 = vpop.f32.mrb[0].mxu0
      %2872 = vmatprep.mubr.bf16.mxu0 0
      %2873 = vmatmul.mubr.bf16.gmra.mrb[0].mxu0 %v2760
      %v2874 = vpop.f32.mrb[0].mxu0
      %v2875 = vadd.f32 0.0, %v2874
      %v2876 = vpop.f32.mrb[0].mxu0
      %v2877 = vpop.f32.mrb[0].mxu0
      %v2878 = vadd.f32 0.0, %v2877
      %v2879 = vpop.f32.mrb[0].mxu0
      %2880 = vmatprep.mubr.bf16.mxu0 0
      %2881 = vmatmul.mubr.bf16.gmra.mrb[0].mxu0 %v2763
      %v2882 = vpop.f32.mrb[0].mxu0
      %v2883 = vadd.f32 0.0, %v2882
      %v2884 = vpop.f32.mrb[0].mxu0
      %v2885 = vpop.f32.mrb[0].mxu0
      %v2886 = vadd.f32 0.0, %v2885
      %v2887 = vpop.f32.mrb[0].mxu0
      %2888 = vmatprep.mubr.bf16.mxu0 0
      %2889 = vmatmul.mubr.bf16.gmra.mrb[0].mxu0 %v2766
      %v2890 = vpop.f32.mrb[0].mxu0
      %v2891 = vadd.f32 0.0, %v2890
      %v2892 = vpop.f32.mrb[0].mxu0
      %v2893 = vpop.f32.mrb[0].mxu0
      %v2894 = vadd.f32 0.0, %v2893
      %v2895 = vpop.f32.mrb[0].mxu0
      %2896 = vmatprep.mubr.bf16.mxu0 0
      %2897 = vmatmul.mubr.bf16.gmra.mrb[0].mxu0 %v2769
      %v2898 = vpop.f32.mrb[0].mxu0
      %v2899 = vadd.f32 0.0, %v2898
      %v2900 = vpop.f32.mrb[0].mxu0
      %v2901 = vpop.f32.mrb[0].mxu0
      %v2902 = vadd.f32 0.0, %v2901
      %v2903 = vpop.f32.mrb[0].mxu0
      %2904 = vmatprep.mubr.bf16.mxu0 0
      %2905 = vmatmul.mubr.bf16.gmra.mrb[0].mxu0 %v2772
      %v2906 = vpop.f32.mrb[0].mxu0
      %v2907 = vadd.f32 0.0, %v2906
      %v2908 = vpop.f32.mrb[0].mxu0
      %v2909 = vpop.f32.mrb[0].mxu0
      %v2910 = vadd.f32 0.0, %v2909
      %v2911 = vpop.f32.mrb[0].mxu0
      %2912 = vmatprep.mubr.bf16.mxu0 0
      %2913 = vmatmul.mubr.bf16.gmra.mrb[0].mxu0 %v2775
      %v2914 = vpop.f32.mrb[0].mxu0
      %v2915 = vadd.f32 0.0, %v2914
      %v2916 = vpop.f32.mrb[0].mxu0
      %v2917 = vpop.f32.mrb[0].mxu0
      %v2918 = vadd.f32 0.0, %v2917
      %v2919 = vpop.f32.mrb[0].mxu0
      %2920 = vmatprep.mubr.bf16.mxu0 0
      %2921 = vmatmul.mubr.bf16.gmra.mrb[0].mxu0 %v2778
      %v2922 = vpop.f32.mrb[0].mxu0
      %v2923 = vadd.f32 0.0, %v2922
      %v2924 = vpop.f32.mrb[0].mxu0
      %v2925 = vpop.f32.mrb[0].mxu0
      %v2926 = vadd.f32 0.0, %v2925
      %v2927 = vpop.f32.mrb[0].mxu0
      %2928 = vmatprep.mubr.bf16.mxu0 0
      %2929 = vmatmul.mubr.bf16.gmra.mrb[0].mxu0 %v2781
      %v2930 = vpop.f32.mrb[0].mxu0
      %v2931 = vadd.f32 0.0, %v2930
      %v2932 = vpop.f32.mrb[0].mxu0
      %v2933 = vpop.f32.mrb[0].mxu0
      %v2934 = vadd.f32 0.0, %v2933
      %v2935 = vpop.f32.mrb[0].mxu0
      %2936 = vmatprep.mubr.bf16.mxu0 0
      %2937 = vmatmul.mubr.bf16.gmra.mrb[0].mxu0 %v2784
      %v2938 = vpop.f32.mrb[0].mxu0
      %v2939 = vadd.f32 0.0, %v2938
      %v2940 = vpop.f32.mrb[0].mxu0
      %v2941 = vpop.f32.mrb[0].mxu0
      %v2942 = vadd.f32 0.0, %v2941
      %v2943 = vpop.f32.mrb[0].mxu0
      %2944 = vmatprep.mubr.bf16.mxu0 0
      %2945 = vmatmul.mubr.bf16.gmra.mrb[0].mxu0 %v2787
      %v2946 = vpop.f32.mrb[0].mxu0
      %v2947 = vadd.f32 0.0, %v2946
      %v2948 = vpop.f32.mrb[0].mxu0
      %v2949 = vpop.f32.mrb[0].mxu0
      %v2950 = vadd.f32 0.0, %v2949
      %v2951 = vpop.f32.mrb[0].mxu0
      %2952 = vdwg.mxu0
      %v2953 = vadd.f32 %v2227, %v2827
      %v2954 = vadd.f32 %v2228, %v2830
      %v2955 = vadd.f32 %v2229, %v2835
      %v2956 = vadd.f32 %v2230, %v2838
      %v2957 = vadd.f32 %v2231, %v2843
      %v2958 = vadd.f32 %v2232, %v2846
      %v2959 = vadd.f32 %v2233, %v2851
      %v2960 = vadd.f32 %v2234, %v2854
      %v2961 = vadd.f32 %v2235, %v2859
      %v2962 = vadd.f32 %v2236, %v2862
      %v2963 = vadd.f32 %v2237, %v2867
      %v2964 = vadd.f32 %v2238, %v2870
      %v2965 = vadd.f32 %v2239, %v2875
      %v2966 = vadd.f32 %v2240, %v2878
      %v2967 = vadd.f32 %v2241, %v2883
      %v2968 = vadd.f32 %v2242, %v2886
      %v2969 = vadd.f32 %v2243, %v2891
      %v2970 = vadd.f32 %v2244, %v2894
      %v2971 = vadd.f32 %v2245, %v2899
      %v2972 = vadd.f32 %v2246, %v2902
      %v2973 = vadd.f32 %v2247, %v2907
      %v2974 = vadd.f32 %v2248, %v2910
      %v2975 = vadd.f32 %v2249, %v2915
      %v2976 = vadd.f32 %v2250, %v2918
      %v2977 = vadd.f32 %v2251, %v2923
      %v2978 = vadd.f32 %v2252, %v2926
      %v2979 = vadd.f32 %v2253, %v2931
      %v2980 = vadd.f32 %v2254, %v2934
      %v2981 = vadd.f32 %v2255, %v2939
      %v2982 = vadd.f32 %v2256, %v2942
      %v2983 = vadd.f32 %v2257, %v2947
      %v2984 = vadd.f32 %v2258, %v2950
      %v2985 = vld [vmem:[%s1900] sm:$0xe]
      %v2986 = vld [vmem:[%s1900 + $0xc] sm:$0xe]
      %v2987 = vld [vmem:[%s1900 + $0x18] sm:$0xe]
      %v2988 = vld [vmem:[%s1900 + $0x24] sm:$0xe]
      %v2989 = vld [vmem:[%s1900 + $0x30] sm:$0xe]
      %v2990 = vld [vmem:[%s1900 + $0x3c] sm:$0xe]
      %v2991 = vld [vmem:[%s1900 + $0x48] sm:$0xe]
      %v2992 = vld [vmem:[%s1900 + $0x54] sm:$0xe]
      %v2993 = vld [vmem:[%s1900 + $0x60] sm:$0xe]
      %v2994 = vld [vmem:[%s1900 + $0x6c] sm:$0xe]
      %v2995 = vld [vmem:[%s1900 + $0x78] sm:$0xe]
      %v2996 = vld [vmem:[%s1900 + $0x84] sm:$0xe]
      %v2997 = vld [vmem:[%s1900 + $0x90] sm:$0xe]
      %v2998 = vld [vmem:[%s1900 + $0x9c] sm:$0xe]
      %v2999 = vld [vmem:[%s1900 + $0xa8] sm:$0xe]
      %v3000 = vld [vmem:[%s1900 + $0xb4] sm:$0xe]
      %v3049 = vrot.slane %v2985, 5
      %v3050 = vrot.slane %v3049, 4
      %v3051 = vrot.slane %v2260, 5
      %v3052 = vsel %vm1493, %v3050, %v3051
      %v3053 = vrot.slane %v3051, 4
      %v3054 = vrot.slane %v2261, 5
      %v3055 = vsel %vm1493, %v3053, %v3054
      %v3056 = vrot.slane %v2986, 5
      %v3057 = vrot.slane %v3056, 4
      %v3058 = vrot.slane %v2263, 5
      %v3059 = vsel %vm1493, %v3057, %v3058
      %v3060 = vrot.slane %v3058, 4
      %v3061 = vrot.slane %v2264, 5
      %v3062 = vsel %vm1493, %v3060, %v3061
      %v3063 = vrot.slane %v2987, 5
      %v3064 = vrot.slane %v3063, 4
      %v3065 = vrot.slane %v2266, 5
      %v3066 = vsel %vm1493, %v3064, %v3065
      %v3067 = vrot.slane %v3065, 4
      %v3068 = vrot.slane %v2267, 5
      %v3069 = vsel %vm1493, %v3067, %v3068
      %v3070 = vrot.slane %v2988, 5
      %v3071 = vrot.slane %v3070, 4
      %v3072 = vrot.slane %v2269, 5
      %v3073 = vsel %vm1493, %v3071, %v3072
      %v3074 = vrot.slane %v3072, 4
      %v3075 = vrot.slane %v2270, 5
      %v3076 = vsel %vm1493, %v3074, %v3075
      %v3077 = vrot.slane %v2989, 5
      %v3078 = vrot.slane %v3077, 4
      %v3079 = vrot.slane %v2272, 5
      %v3080 = vsel %vm1493, %v3078, %v3079
      %v3081 = vrot.slane %v3079, 4
      %v3082 = vrot.slane %v2273, 5
      %v3083 = vsel %vm1493, %v3081, %v3082
      %v3084 = vrot.slane %v2990, 5
      %v3085 = vrot.slane %v3084, 4
      %v3086 = vrot.slane %v2275, 5
      %v3087 = vsel %vm1493, %v3085, %v3086
      %v3088 = vrot.slane %v3086, 4
      %v3089 = vrot.slane %v2276, 5
      %v3090 = vsel %vm1493, %v3088, %v3089
      %v3091 = vrot.slane %v2991, 5
      %v3092 = vrot.slane %v3091, 4
      %v3093 = vrot.slane %v2278, 5
      %v3094 = vsel %vm1493, %v3092, %v3093
      %v3095 = vrot.slane %v3093, 4
      %v3096 = vrot.slane %v2279, 5
      %v3097 = vsel %vm1493, %v3095, %v3096
      %v3098 = vrot.slane %v2992, 5
      %v3099 = vrot.slane %v3098, 4
      %v3100 = vrot.slane %v2281, 5
      %v3101 = vsel %vm1493, %v3099, %v3100
      %v3102 = vrot.slane %v3100, 4
      %v3103 = vrot.slane %v2282, 5
      %v3104 = vsel %vm1493, %v3102, %v3103
      %v3105 = vrot.slane %v2993, 5
      %v3106 = vrot.slane %v3105, 4
      %v3107 = vrot.slane %v2284, 5
      %v3108 = vsel %vm1493, %v3106, %v3107
      %v3109 = vrot.slane %v3107, 4
      %v3110 = vrot.slane %v2285, 5
      %v3111 = vsel %vm1493, %v3109, %v3110
      %v3112 = vrot.slane %v2994, 5
      %v3113 = vrot.slane %v3112, 4
      %v3114 = vrot.slane %v2287, 5
      %v3115 = vsel %vm1493, %v3113, %v3114
      %v3116 = vrot.slane %v3114, 4
      %v3117 = vrot.slane %v2288, 5
      %v3118 = vsel %vm1493, %v3116, %v3117
      %v3119 = vrot.slane %v2995, 5
      %v3120 = vrot.slane %v3119, 4
      %v3121 = vrot.slane %v2290, 5
      %v3122 = vsel %vm1493, %v3120, %v3121
      %v3123 = vrot.slane %v3121, 4
      %v3124 = vrot.slane %v2291, 5
      %v3125 = vsel %vm1493, %v3123, %v3124
      %v3126 = vrot.slane %v2996, 5
      %v3127 = vrot.slane %v3126, 4
      %v3128 = vrot.slane %v2293, 5
      %v3129 = vsel %vm1493, %v3127, %v3128
      %v3130 = vrot.slane %v3128, 4
      %v3131 = vrot.slane %v2294, 5
      %v3132 = vsel %vm1493, %v3130, %v3131
      %v3133 = vrot.slane %v2997, 5
      %v3134 = vrot.slane %v3133, 4
      %v3135 = vrot.slane %v2296, 5
      %v3136 = vsel %vm1493, %v3134, %v3135
      %v3137 = vrot.slane %v3135, 4
      %v3138 = vrot.slane %v2297, 5
      %v3139 = vsel %vm1493, %v3137, %v3138
      %v3140 = vrot.slane %v2998, 5
      %v3141 = vrot.slane %v3140, 4
      %v3142 = vrot.slane %v2299, 5
      %v3143 = vsel %vm1493, %v3141, %v3142
      %v3144 = vrot.slane %v3142, 4
      %v3145 = vrot.slane %v2300, 5
      %v3146 = vsel %vm1493, %v3144, %v3145
      %v3147 = vrot.slane %v2999, 5
      %v3148 = vrot.slane %v3147, 4
      %v3149 = vrot.slane %v2302, 5
      %v3150 = vsel %vm1493, %v3148, %v3149
      %v3151 = vrot.slane %v3149, 4
      %v3152 = vrot.slane %v2303, 5
      %v3153 = vsel %vm1493, %v3151, %v3152
      %v3154 = vrot.slane %v3000, 5
      %v3155 = vrot.slane %v3154, 4
      %v3156 = vrot.slane %v2305, 5
      %v3157 = vsel %vm1493, %v3155, %v3156
      %v3158 = vrot.slane %v3156, 4
      %v3159 = vrot.slane %v2306, 5
      %v3160 = vsel %vm1493, %v3158, %v3159
      %s3161 = scalar_lea.vmem %s2, 10
      %v3162 = vld [vmem:[%s3161] sm:$0x3]
      %v3163 = vunpack.c.l.b16 %v3052
      %v3164 = vunpack.c.l.b16 %v3055
      %v3165 = vunpack.c.l.b16 %v3059
      %v3166 = vunpack.c.l.b16 %v3062
      %v3167 = vunpack.c.l.b16 %v3066
      %v3168 = vunpack.c.l.b16 %v3069
      %v3169 = vunpack.c.l.b16 %v3073
      %v3170 = vunpack.c.l.b16 %v3076
      %v3171 = vunpack.c.l.b16 %v3080
      %v3172 = vunpack.c.l.b16 %v3083
      %v3173 = vunpack.c.l.b16 %v3087
      %v3174 = vunpack.c.l.b16 %v3090
      %v3175 = vunpack.c.l.b16 %v3094
      %v3176 = vunpack.c.l.b16 %v3097
      %v3177 = vunpack.c.l.b16 %v3101
      %v3178 = vunpack.c.l.b16 %v3104
      %v3179 = vunpack.c.l.b16 %v3108
      %v3180 = vunpack.c.l.b16 %v3111
      %v3181 = vunpack.c.l.b16 %v3115
      %v3182 = vunpack.c.l.b16 %v3118
      %v3183 = vunpack.c.l.b16 %v3122
      %v3184 = vunpack.c.l.b16 %v3125
      %v3185 = vunpack.c.l.b16 %v3129
      %v3186 = vunpack.c.l.b16 %v3132
      %v3187 = vunpack.c.l.b16 %v3136
      %v3188 = vunpack.c.l.b16 %v3139
      %v3189 = vunpack.c.l.b16 %v3143
      %v3190 = vunpack.c.l.b16 %v3146
      %v3191 = vunpack.c.l.b16 %v3150
      %v3192 = vunpack.c.l.b16 %v3153
      %v3193 = vunpack.c.l.b16 %v3157
      %v3194 = vunpack.c.l.b16 %v3160
      %v3195 = vpack.c.b16 %v3164, %v3163
      %v3196 = vpack.c.b16 %v3166, %v3165
      %v3197 = vpack.c.b16 %v3168, %v3167
      %v3198 = vpack.c.b16 %v3170, %v3169
      %v3199 = vpack.c.b16 %v3172, %v3171
      %v3200 = vpack.c.b16 %v3174, %v3173
      %v3201 = vpack.c.b16 %v3176, %v3175
      %v3202 = vpack.c.b16 %v3178, %v3177
      %v3203 = vpack.c.b16 %v3180, %v3179
      %v3204 = vpack.c.b16 %v3182, %v3181
      %v3205 = vpack.c.b16 %v3184, %v3183
      %v3206 = vpack.c.b16 %v3186, %v3185
      %v3207 = vpack.c.b16 %v3188, %v3187
      %v3208 = vpack.c.b16 %v3190, %v3189
      %v3209 = vpack.c.b16 %v3192, %v3191
      %v3210 = vpack.c.b16 %v3194, %v3193
      %v3212 = vsel %vm937, %v3195, 0
      %v3215 = vsel %vm937, %v3196, 0
      %v3218 = vsel %vm937, %v3197, 0
      %v3221 = vsel %vm937, %v3198, 0
      %v3224 = vsel %vm937, %v3199, 0
      %v3227 = vsel %vm937, %v3200, 0
      %v3230 = vsel %vm937, %v3201, 0
      %v3233 = vsel %vm937, %v3202, 0
      %v3236 = vsel %vm937, %v3203, 0
      %v3239 = vsel %vm937, %v3204, 0
      %v3242 = vsel %vm937, %v3205, 0
      %v3245 = vsel %vm937, %v3206, 0
      %v3248 = vsel %vm937, %v3207, 0
      %v3251 = vsel %vm937, %v3208, 0
      %v3254 = vsel %vm937, %v3209, 0
      %v3257 = vsel %vm937, %v3210, 0
      %v3260 = vsel %vm986, %v3162, 0
      %3262 = vmatprep.subr.bf16.mxu0 0
      %3263 = vmatpush1.bf16.msra.mxu0 %v3260
      %3264 = vmatprep.subr.bf16.mxu0 0
      %3265 = vmatpush1.bf16.msra.mxu0 0
      %3266 = vmatprep.subr.bf16.mxu0 0
      %3267 = vmatpush1.bf16.msra.mxu0 0
      %3268 = vmatprep.subr.bf16.mxu0 0
      %3269 = vmatpush1.bf16.msra.mxu0 0
      %3270 = vmatprep.subr.bf16.mxu0 0
      %3271 = vmatpush1.bf16.msra.mxu0 0
      %3272 = vmatprep.subr.bf16.mxu0 0
      %3273 = vmatpush1.bf16.msra.mxu0 0
      %3274 = vmatprep.subr.bf16.mxu0 0
      %3275 = vmatpush1.bf16.msra.mxu0 0
      %3276 = vmatprep.subr.bf16.mxu0 0
      %3277 = vmatpush1.bf16.msra.mxu0 0
      %3278 = vmatprep.subr.bf16.mxu0 0
      %3279 = vmatpush1.bf16.msra.mxu0 0
      %3280 = vmatprep.subr.bf16.mxu0 0
      %3281 = vmatpush1.bf16.msra.mxu0 0
      %3282 = vmatprep.subr.bf16.mxu0 0
      %3283 = vmatpush1.bf16.msra.mxu0 0
      %3284 = vmatprep.subr.bf16.mxu0 0
      %3285 = vmatpush1.bf16.msra.mxu0 0
      %3286 = vmatprep.subr.bf16.mxu0 0
      %3287 = vmatpush1.bf16.msra.mxu0 0
      %3288 = vmatprep.subr.bf16.mxu0 0
      %3289 = vmatpush1.bf16.msra.mxu0 0
      %3290 = vmatprep.subr.bf16.mxu0 0
      %3291 = vmatpush1.bf16.msra.mxu0 0
      %3292 = vmatprep.subr.bf16.mxu0 0
      %3293 = vmatpush1.bf16.msra.mxu0 0
      %3294 = vmatprep.mubr.bf16.mxu0 0
      %3295 = vmatmul.mubr.bf16.gmra.mrb[0].mxu0 %v3212
      %v3296 = vpop.f32.mrb[0].mxu0
      %v3297 = vadd.f32 0.0, %v3296
      %v3298 = vpop.f32.mrb[0].mxu0
      %v3299 = vpop.f32.mrb[0].mxu0
      %v3300 = vadd.f32 0.0, %v3299
      %v3301 = vpop.f32.mrb[0].mxu0
      %3302 = vmatprep.mubr.bf16.mxu0 0
      %3303 = vmatmul.mubr.bf16.gmra.mrb[0].mxu0 %v3215
      %v3304 = vpop.f32.mrb[0].mxu0
      %v3305 = vadd.f32 0.0, %v3304
      %v3306 = vpop.f32.mrb[0].mxu0
      %v3307 = vpop.f32.mrb[0].mxu0
      %v3308 = vadd.f32 0.0, %v3307
      %v3309 = vpop.f32.mrb[0].mxu0
      %3310 = vmatprep.mubr.bf16.mxu0 0
      %3311 = vmatmul.mubr.bf16.gmra.mrb[0].mxu0 %v3218
      %v3312 = vpop.f32.mrb[0].mxu0
      %v3313 = vadd.f32 0.0, %v3312
      %v3314 = vpop.f32.mrb[0].mxu0
      %v3315 = vpop.f32.mrb[0].mxu0
      %v3316 = vadd.f32 0.0, %v3315
      %v3317 = vpop.f32.mrb[0].mxu0
      %3318 = vmatprep.mubr.bf16.mxu0 0
      %3319 = vmatmul.mubr.bf16.gmra.mrb[0].mxu0 %v3221
      %v3320 = vpop.f32.mrb[0].mxu0
      %v3321 = vadd.f32 0.0, %v3320
      %v3322 = vpop.f32.mrb[0].mxu0
      %v3323 = vpop.f32.mrb[0].mxu0
      %v3324 = vadd.f32 0.0, %v3323
      %v3325 = vpop.f32.mrb[0].mxu0
      %3326 = vmatprep.mubr.bf16.mxu0 0
      %3327 = vmatmul.mubr.bf16.gmra.mrb[0].mxu0 %v3224
      %v3328 = vpop.f32.mrb[0].mxu0
      %v3329 = vadd.f32 0.0, %v3328
      %v3330 = vpop.f32.mrb[0].mxu0
      %v3331 = vpop.f32.mrb[0].mxu0
      %v3332 = vadd.f32 0.0, %v3331
      %v3333 = vpop.f32.mrb[0].mxu0
      %3334 = vmatprep.mubr.bf16.mxu0 0
      %3335 = vmatmul.mubr.bf16.gmra.mrb[0].mxu0 %v3227
      %v3336 = vpop.f32.mrb[0].mxu0
      %v3337 = vadd.f32 0.0, %v3336
      %v3338 = vpop.f32.mrb[0].mxu0
      %v3339 = vpop.f32.mrb[0].mxu0
      %v3340 = vadd.f32 0.0, %v3339
      %v3341 = vpop.f32.mrb[0].mxu0
      %3342 = vmatprep.mubr.bf16.mxu0 0
      %3343 = vmatmul.mubr.bf16.gmra.mrb[0].mxu0 %v3230
      %v3344 = vpop.f32.mrb[0].mxu0
      %v3345 = vadd.f32 0.0, %v3344
      %v3346 = vpop.f32.mrb[0].mxu0
      %v3347 = vpop.f32.mrb[0].mxu0
      %v3348 = vadd.f32 0.0, %v3347
      %v3349 = vpop.f32.mrb[0].mxu0
      %3350 = vmatprep.mubr.bf16.mxu0 0
      %3351 = vmatmul.mubr.bf16.gmra.mrb[0].mxu0 %v3233
      %v3352 = vpop.f32.mrb[0].mxu0
      %v3353 = vadd.f32 0.0, %v3352
      %v3354 = vpop.f32.mrb[0].mxu0
      %v3355 = vpop.f32.mrb[0].mxu0
      %v3356 = vadd.f32 0.0, %v3355
      %v3357 = vpop.f32.mrb[0].mxu0
      %3358 = vmatprep.mubr.bf16.mxu0 0
      %3359 = vmatmul.mubr.bf16.gmra.mrb[0].mxu0 %v3236
      %v3360 = vpop.f32.mrb[0].mxu0
      %v3361 = vadd.f32 0.0, %v3360
      %v3362 = vpop.f32.mrb[0].mxu0
      %v3363 = vpop.f32.mrb[0].mxu0
      %v3364 = vadd.f32 0.0, %v3363
      %v3365 = vpop.f32.mrb[0].mxu0
      %3366 = vmatprep.mubr.bf16.mxu0 0
      %3367 = vmatmul.mubr.bf16.gmra.mrb[0].mxu0 %v3239
      %v3368 = vpop.f32.mrb[0].mxu0
      %v3369 = vadd.f32 0.0, %v3368
      %v3370 = vpop.f32.mrb[0].mxu0
      %v3371 = vpop.f32.mrb[0].mxu0
      %v3372 = vadd.f32 0.0, %v3371
      %v3373 = vpop.f32.mrb[0].mxu0
      %3374 = vmatprep.mubr.bf16.mxu0 0
      %3375 = vmatmul.mubr.bf16.gmra.mrb[0].mxu0 %v3242
      %v3376 = vpop.f32.mrb[0].mxu0
      %v3377 = vadd.f32 0.0, %v3376
      %v3378 = vpop.f32.mrb[0].mxu0
      %v3379 = vpop.f32.mrb[0].mxu0
      %v3380 = vadd.f32 0.0, %v3379
      %v3381 = vpop.f32.mrb[0].mxu0
      %3382 = vmatprep.mubr.bf16.mxu0 0
      %3383 = vmatmul.mubr.bf16.gmra.mrb[0].mxu0 %v3245
      %v3384 = vpop.f32.mrb[0].mxu0
      %v3385 = vadd.f32 0.0, %v3384
      %v3386 = vpop.f32.mrb[0].mxu0
      %v3387 = vpop.f32.mrb[0].mxu0
      %v3388 = vadd.f32 0.0, %v3387
      %v3389 = vpop.f32.mrb[0].mxu0
      %3390 = vmatprep.mubr.bf16.mxu0 0
      %3391 = vmatmul.mubr.bf16.gmra.mrb[0].mxu0 %v3248
      %v3392 = vpop.f32.mrb[0].mxu0
      %v3393 = vadd.f32 0.0, %v3392
      %v3394 = vpop.f32.mrb[0].mxu0
      %v3395 = vpop.f32.mrb[0].mxu0
      %v3396 = vadd.f32 0.0, %v3395
      %v3397 = vpop.f32.mrb[0].mxu0
      %3398 = vmatprep.mubr.bf16.mxu0 0
      %3399 = vmatmul.mubr.bf16.gmra.mrb[0].mxu0 %v3251
      %v3400 = vpop.f32.mrb[0].mxu0
      %v3401 = vadd.f32 0.0, %v3400
      %v3402 = vpop.f32.mrb[0].mxu0
      %v3403 = vpop.f32.mrb[0].mxu0
      %v3404 = vadd.f32 0.0, %v3403
      %v3405 = vpop.f32.mrb[0].mxu0
      %3406 = vmatprep.mubr.bf16.mxu0 0
      %3407 = vmatmul.mubr.bf16.gmra.mrb[0].mxu0 %v3254
      %v3408 = vpop.f32.mrb[0].mxu0
      %v3409 = vadd.f32 0.0, %v3408
      %v3410 = vpop.f32.mrb[0].mxu0
      %v3411 = vpop.f32.mrb[0].mxu0
      %v3412 = vadd.f32 0.0, %v3411
      %v3413 = vpop.f32.mrb[0].mxu0
      %3414 = vmatprep.mubr.bf16.mxu0 0
      %3415 = vmatmul.mubr.bf16.gmra.mrb[0].mxu0 %v3257
      %v3416 = vpop.f32.mrb[0].mxu0
      %v3417 = vadd.f32 0.0, %v3416
      %v3418 = vpop.f32.mrb[0].mxu0
      %v3419 = vpop.f32.mrb[0].mxu0
      %v3420 = vadd.f32 0.0, %v3419
      %v3421 = vpop.f32.mrb[0].mxu0
      %3422 = vdwg.mxu0
      %v3423 = vadd.f32 %v2953, %v3297
      %v3424 = vadd.f32 %v2954, %v3300
      %v3425 = vadd.f32 %v2955, %v3305
      %v3426 = vadd.f32 %v2956, %v3308
      %v3427 = vadd.f32 %v2957, %v3313
      %v3428 = vadd.f32 %v2958, %v3316
      %v3429 = vadd.f32 %v2959, %v3321
      %v3430 = vadd.f32 %v2960, %v3324
      %v3431 = vadd.f32 %v2961, %v3329
      %v3432 = vadd.f32 %v2962, %v3332
      %v3433 = vadd.f32 %v2963, %v3337
      %v3434 = vadd.f32 %v2964, %v3340
      %v3435 = vadd.f32 %v2965, %v3345
      %v3436 = vadd.f32 %v2966, %v3348
      %v3437 = vadd.f32 %v2967, %v3353
      %v3438 = vadd.f32 %v2968, %v3356
      %v3439 = vadd.f32 %v2969, %v3361
      %v3440 = vadd.f32 %v2970, %v3364
      %v3441 = vadd.f32 %v2971, %v3369
      %v3442 = vadd.f32 %v2972, %v3372
      %v3443 = vadd.f32 %v2973, %v3377
      %v3444 = vadd.f32 %v2974, %v3380
      %v3445 = vadd.f32 %v2975, %v3385
      %v3446 = vadd.f32 %v2976, %v3388
      %v3447 = vadd.f32 %v2977, %v3393
      %v3448 = vadd.f32 %v2978, %v3396
      %v3449 = vadd.f32 %v2979, %v3401
      %v3450 = vadd.f32 %v2980, %v3404
      %v3451 = vadd.f32 %v2981, %v3409
      %v3452 = vadd.f32 %v2982, %v3412
      %v3453 = vadd.f32 %v2983, %v3417
      %v3454 = vadd.f32 %v2984, %v3420
      %s3455 = scalar_lea.vmem [#allocation2], 24
      %v3456 = vld [vmem:[%s3455] sm:$0xf]
      %v3457 = vld [vmem:[%s3455 + $0x4] sm:$0xf]
      %v3458 = vld [vmem:[%s3455 + $0xc] sm:$0xf]
      %v3459 = vld [vmem:[%s3455 + $0x10] sm:$0xf]
      %v3460 = vld [vmem:[%s3455 + $0x18] sm:$0xf]
      %v3461 = vld [vmem:[%s3455 + $0x1c] sm:$0xf]
      %v3462 = vld [vmem:[%s3455 + $0x24] sm:$0xf]
      %v3463 = vld [vmem:[%s3455 + $0x28] sm:$0xf]
      %v3464 = vld [vmem:[%s3455 + $0x30] sm:$0xf]
      %v3465 = vld [vmem:[%s3455 + $0x34] sm:$0xf]
      %v3466 = vld [vmem:[%s3455 + $0x3c] sm:$0xf]
      %v3467 = vld [vmem:[%s3455 + $0x40] sm:$0xf]
      %v3468 = vld [vmem:[%s3455 + $0x48] sm:$0xf]
      %v3469 = vld [vmem:[%s3455 + $0x4c] sm:$0xf]
      %v3470 = vld [vmem:[%s3455 + $0x54] sm:$0xf]
      %v3471 = vld [vmem:[%s3455 + $0x58] sm:$0xf]
      %v3472 = vld [vmem:[%s3455 + $0x60] sm:$0xf]
      %v3473 = vld [vmem:[%s3455 + $0x64] sm:$0xf]
      %v3474 = vld [vmem:[%s3455 + $0x6c] sm:$0xf]
      %v3475 = vld [vmem:[%s3455 + $0x70] sm:$0xf]
      %v3476 = vld [vmem:[%s3455 + $0x78] sm:$0xf]
      %v3477 = vld [vmem:[%s3455 + $0x7c] sm:$0xf]
      %v3478 = vld [vmem:[%s3455 + $0x84] sm:$0xf]
      %v3479 = vld [vmem:[%s3455 + $0x88] sm:$0xf]
      %v3480 = vld [vmem:[%s3455 + $0x90] sm:$0xf]
      %v3481 = vld [vmem:[%s3455 + $0x94] sm:$0xf]
      %v3482 = vld [vmem:[%s3455 + $0x9c] sm:$0xf]
      %v3483 = vld [vmem:[%s3455 + $0xa0] sm:$0xf]
      %v3484 = vld [vmem:[%s3455 + $0xa8] sm:$0xf]
      %v3485 = vld [vmem:[%s3455 + $0xac] sm:$0xf]
      %v3486 = vld [vmem:[%s3455 + $0xb4] sm:$0xf]
      %v3487 = vld [vmem:[%s3455 + $0xb8] sm:$0xf]
      %s3488 = scalar_lea.vmem %s2, 12
      %v3489 = vld [vmem:[%s3488] sm:$0x3]
      %v3522 = vunpack.c.l.b16 %v3456
      %v3523 = vunpack.c.l.b16 %v3457
      %v3524 = vunpack.c.l.b16 %v3458
      %v3525 = vunpack.c.l.b16 %v3459
      %v3526 = vunpack.c.l.b16 %v3460
      %v3527 = vunpack.c.l.b16 %v3461
      %v3528 = vunpack.c.l.b16 %v3462
      %v3529 = vunpack.c.l.b16 %v3463
      %v3530 = vunpack.c.l.b16 %v3464
      %v3531 = vunpack.c.l.b16 %v3465
      %v3532 = vunpack.c.l.b16 %v3466
      %v3533 = vunpack.c.l.b16 %v3467
      %v3534 = vunpack.c.l.b16 %v3468
      %v3535 = vunpack.c.l.b16 %v3469
      %v3536 = vunpack.c.l.b16 %v3470
      %v3537 = vunpack.c.l.b16 %v3471
      %v3538 = vunpack.c.l.b16 %v3472
      %v3539 = vunpack.c.l.b16 %v3473
      %v3540 = vunpack.c.l.b16 %v3474
      %v3541 = vunpack.c.l.b16 %v3475
      %v3542 = vunpack.c.l.b16 %v3476
      %v3543 = vunpack.c.l.b16 %v3477
      %v3544 = vunpack.c.l.b16 %v3478
      %v3545 = vunpack.c.l.b16 %v3479
      %v3546 = vunpack.c.l.b16 %v3480
      %v3547 = vunpack.c.l.b16 %v3481
      %v3548 = vunpack.c.l.b16 %v3482
      %v3549 = vunpack.c.l.b16 %v3483
      %v3550 = vunpack.c.l.b16 %v3484
      %v3551 = vunpack.c.l.b16 %v3485
      %v3552 = vunpack.c.l.b16 %v3486
      %v3553 = vunpack.c.l.b16 %v3487
      %v3554 = vpack.c.b16 %v3523, %v3522
      %v3555 = vpack.c.b16 %v3525, %v3524
      %v3556 = vpack.c.b16 %v3527, %v3526
      %v3557 = vpack.c.b16 %v3529, %v3528
      %v3558 = vpack.c.b16 %v3531, %v3530
      %v3559 = vpack.c.b16 %v3533, %v3532
      %v3560 = vpack.c.b16 %v3535, %v3534
      %v3561 = vpack.c.b16 %v3537, %v3536
      %v3562 = vpack.c.b16 %v3539, %v3538
      %v3563 = vpack.c.b16 %v3541, %v3540
      %v3564 = vpack.c.b16 %v3543, %v3542
      %v3565 = vpack.c.b16 %v3545, %v3544
      %v3566 = vpack.c.b16 %v3547, %v3546
      %v3567 = vpack.c.b16 %v3549, %v3548
      %v3568 = vpack.c.b16 %v3551, %v3550
      %v3569 = vpack.c.b16 %v3553, %v3552
      %v3571 = vsel %vm937, %v3554, 0
      %v3574 = vsel %vm937, %v3555, 0
      %v3577 = vsel %vm937, %v3556, 0
      %v3580 = vsel %vm937, %v3557, 0
      %v3583 = vsel %vm937, %v3558, 0
      %v3586 = vsel %vm937, %v3559, 0
      %v3589 = vsel %vm937, %v3560, 0
      %v3592 = vsel %vm937, %v3561, 0
      %v3595 = vsel %vm937, %v3562, 0
      %v3598 = vsel %vm937, %v3563, 0
      %v3601 = vsel %vm937, %v3564, 0
      %v3604 = vsel %vm937, %v3565, 0
      %v3607 = vsel %vm937, %v3566, 0
      %v3610 = vsel %vm937, %v3567, 0
      %v3613 = vsel %vm937, %v3568, 0
      %v3616 = vsel %vm937, %v3569, 0
      %v3619 = vsel %vm986, %v3489, 0
      %3621 = vmatprep.subr.bf16.mxu0 0
      %3622 = vmatpush1.bf16.msra.mxu0 %v3619
      %3623 = vmatprep.subr.bf16.mxu0 0
      %3624 = vmatpush1.bf16.msra.mxu0 0
      %3625 = vmatprep.subr.bf16.mxu0 0
      %3626 = vmatpush1.bf16.msra.mxu0 0
      %3627 = vmatprep.subr.bf16.mxu0 0
      %3628 = vmatpush1.bf16.msra.mxu0 0
      %3629 = vmatprep.subr.bf16.mxu0 0
      %3630 = vmatpush1.bf16.msra.mxu0 0
      %3631 = vmatprep.subr.bf16.mxu0 0
      %3632 = vmatpush1.bf16.msra.mxu0 0
      %3633 = vmatprep.subr.bf16.mxu0 0
      %3634 = vmatpush1.bf16.msra.mxu0 0
      %3635 = vmatprep.subr.bf16.mxu0 0
      %3636 = vmatpush1.bf16.msra.mxu0 0
      %3637 = vmatprep.subr.bf16.mxu0 0
      %3638 = vmatpush1.bf16.msra.mxu0 0
      %3639 = vmatprep.subr.bf16.mxu0 0
      %3640 = vmatpush1.bf16.msra.mxu0 0
      %3641 = vmatprep.subr.bf16.mxu0 0
      %3642 = vmatpush1.bf16.msra.mxu0 0
      %3643 = vmatprep.subr.bf16.mxu0 0
      %3644 = vmatpush1.bf16.msra.mxu0 0
      %3645 = vmatprep.subr.bf16.mxu0 0
      %3646 = vmatpush1.bf16.msra.mxu0 0
      %3647 = vmatprep.subr.bf16.mxu0 0
      %3648 = vmatpush1.bf16.msra.mxu0 0
      %3649 = vmatprep.subr.bf16.mxu0 0
      %3650 = vmatpush1.bf16.msra.mxu0 0
      %3651 = vmatprep.subr.bf16.mxu0 0
      %3652 = vmatpush1.bf16.msra.mxu0 0
      %3653 = vmatprep.mubr.bf16.mxu0 0
      %3654 = vmatmul.mubr.bf16.gmra.mrb[0].mxu0 %v3571
      %v3655 = vpop.f32.mrb[0].mxu0
      %v3656 = vadd.f32 0.0, %v3655
      %v3657 = vpop.f32.mrb[0].mxu0
      %v3658 = vpop.f32.mrb[0].mxu0
      %v3659 = vadd.f32 0.0, %v3658
      %v3660 = vpop.f32.mrb[0].mxu0
      %3661 = vmatprep.mubr.bf16.mxu0 0
      %3662 = vmatmul.mubr.bf16.gmra.mrb[0].mxu0 %v3574
      %v3663 = vpop.f32.mrb[0].mxu0
      %v3664 = vadd.f32 0.0, %v3663
      %v3665 = vpop.f32.mrb[0].mxu0
      %v3666 = vpop.f32.mrb[0].mxu0
      %v3667 = vadd.f32 0.0, %v3666
      %v3668 = vpop.f32.mrb[0].mxu0
      %3669 = vmatprep.mubr.bf16.mxu0 0
      %3670 = vmatmul.mubr.bf16.gmra.mrb[0].mxu0 %v3577
      %v3671 = vpop.f32.mrb[0].mxu0
      %v3672 = vadd.f32 0.0, %v3671
      %v3673 = vpop.f32.mrb[0].mxu0
      %v3674 = vpop.f32.mrb[0].mxu0
      %v3675 = vadd.f32 0.0, %v3674
      %v3676 = vpop.f32.mrb[0].mxu0
      %3677 = vmatprep.mubr.bf16.mxu0 0
      %3678 = vmatmul.mubr.bf16.gmra.mrb[0].mxu0 %v3580
      %v3679 = vpop.f32.mrb[0].mxu0
      %v3680 = vadd.f32 0.0, %v3679
      %v3681 = vpop.f32.mrb[0].mxu0
      %v3682 = vpop.f32.mrb[0].mxu0
      %v3683 = vadd.f32 0.0, %v3682
      %v3684 = vpop.f32.mrb[0].mxu0
      %3685 = vmatprep.mubr.bf16.mxu0 0
      %3686 = vmatmul.mubr.bf16.gmra.mrb[0].mxu0 %v3583
      %v3687 = vpop.f32.mrb[0].mxu0
      %v3688 = vadd.f32 0.0, %v3687
      %v3689 = vpop.f32.mrb[0].mxu0
      %v3690 = vpop.f32.mrb[0].mxu0
      %v3691 = vadd.f32 0.0, %v3690
      %v3692 = vpop.f32.mrb[0].mxu0
      %3693 = vmatprep.mubr.bf16.mxu0 0
      %3694 = vmatmul.mubr.bf16.gmra.mrb[0].mxu0 %v3586
      %v3695 = vpop.f32.mrb[0].mxu0
      %v3696 = vadd.f32 0.0, %v3695
      %v3697 = vpop.f32.mrb[0].mxu0
      %v3698 = vpop.f32.mrb[0].mxu0
      %v3699 = vadd.f32 0.0, %v3698
      %v3700 = vpop.f32.mrb[0].mxu0
      %3701 = vmatprep.mubr.bf16.mxu0 0
      %3702 = vmatmul.mubr.bf16.gmra.mrb[0].mxu0 %v3589
      %v3703 = vpop.f32.mrb[0].mxu0
      %v3704 = vadd.f32 0.0, %v3703
      %v3705 = vpop.f32.mrb[0].mxu0
      %v3706 = vpop.f32.mrb[0].mxu0
      %v3707 = vadd.f32 0.0, %v3706
      %v3708 = vpop.f32.mrb[0].mxu0
      %3709 = vmatprep.mubr.bf16.mxu0 0
      %3710 = vmatmul.mubr.bf16.gmra.mrb[0].mxu0 %v3592
      %v3711 = vpop.f32.mrb[0].mxu0
      %v3712 = vadd.f32 0.0, %v3711
      %v3713 = vpop.f32.mrb[0].mxu0
      %v3714 = vpop.f32.mrb[0].mxu0
      %v3715 = vadd.f32 0.0, %v3714
      %v3716 = vpop.f32.mrb[0].mxu0
      %3717 = vmatprep.mubr.bf16.mxu0 0
      %3718 = vmatmul.mubr.bf16.gmra.mrb[0].mxu0 %v3595
      %v3719 = vpop.f32.mrb[0].mxu0
      %v3720 = vadd.f32 0.0, %v3719
      %v3721 = vpop.f32.mrb[0].mxu0
      %v3722 = vpop.f32.mrb[0].mxu0
      %v3723 = vadd.f32 0.0, %v3722
      %v3724 = vpop.f32.mrb[0].mxu0
      %3725 = vmatprep.mubr.bf16.mxu0 0
      %3726 = vmatmul.mubr.bf16.gmra.mrb[0].mxu0 %v3598
      %v3727 = vpop.f32.mrb[0].mxu0
      %v3728 = vadd.f32 0.0, %v3727
      %v3729 = vpop.f32.mrb[0].mxu0
      %v3730 = vpop.f32.mrb[0].mxu0
      %v3731 = vadd.f32 0.0, %v3730
      %v3732 = vpop.f32.mrb[0].mxu0
      %3733 = vmatprep.mubr.bf16.mxu0 0
      %3734 = vmatmul.mubr.bf16.gmra.mrb[0].mxu0 %v3601
      %v3735 = vpop.f32.mrb[0].mxu0
      %v3736 = vadd.f32 0.0, %v3735
      %v3737 = vpop.f32.mrb[0].mxu0
      %v3738 = vpop.f32.mrb[0].mxu0
      %v3739 = vadd.f32 0.0, %v3738
      %v3740 = vpop.f32.mrb[0].mxu0
      %3741 = vmatprep.mubr.bf16.mxu0 0
      %3742 = vmatmul.mubr.bf16.gmra.mrb[0].mxu0 %v3604
      %v3743 = vpop.f32.mrb[0].mxu0
      %v3744 = vadd.f32 0.0, %v3743
      %v3745 = vpop.f32.mrb[0].mxu0
      %v3746 = vpop.f32.mrb[0].mxu0
      %v3747 = vadd.f32 0.0, %v3746
      %v3748 = vpop.f32.mrb[0].mxu0
      %3749 = vmatprep.mubr.bf16.mxu0 0
      %3750 = vmatmul.mubr.bf16.gmra.mrb[0].mxu0 %v3607
      %v3751 = vpop.f32.mrb[0].mxu0
      %v3752 = vadd.f32 0.0, %v3751
      %v3753 = vpop.f32.mrb[0].mxu0
      %v3754 = vpop.f32.mrb[0].mxu0
      %v3755 = vadd.f32 0.0, %v3754
      %v3756 = vpop.f32.mrb[0].mxu0
      %3757 = vmatprep.mubr.bf16.mxu0 0
      %3758 = vmatmul.mubr.bf16.gmra.mrb[0].mxu0 %v3610
      %v3759 = vpop.f32.mrb[0].mxu0
      %v3760 = vadd.f32 0.0, %v3759
      %v3761 = vpop.f32.mrb[0].mxu0
      %v3762 = vpop.f32.mrb[0].mxu0
      %v3763 = vadd.f32 0.0, %v3762
      %v3764 = vpop.f32.mrb[0].mxu0
      %3765 = vmatprep.mubr.bf16.mxu0 0
      %3766 = vmatmul.mubr.bf16.gmra.mrb[0].mxu0 %v3613
      %v3767 = vpop.f32.mrb[0].mxu0
      %v3768 = vadd.f32 0.0, %v3767
      %v3769 = vpop.f32.mrb[0].mxu0
      %v3770 = vpop.f32.mrb[0].mxu0
      %v3771 = vadd.f32 0.0, %v3770
      %v3772 = vpop.f32.mrb[0].mxu0
      %3773 = vmatprep.mubr.bf16.mxu0 0
      %3774 = vmatmul.mubr.bf16.gmra.mrb[0].mxu0 %v3616
      %v3775 = vpop.f32.mrb[0].mxu0
      %v3776 = vadd.f32 0.0, %v3775
      %v3777 = vpop.f32.mrb[0].mxu0
      %v3778 = vpop.f32.mrb[0].mxu0
      %v3779 = vadd.f32 0.0, %v3778
      %v3780 = vpop.f32.mrb[0].mxu0
      %3781 = vdwg.mxu0
      %v3782 = vadd.f32 %v3423, %v3656
      %v3783 = vadd.f32 %v3424, %v3659
      %v3784 = vadd.f32 %v3425, %v3664
      %v3785 = vadd.f32 %v3426, %v3667
      %v3786 = vadd.f32 %v3427, %v3672
      %v3787 = vadd.f32 %v3428, %v3675
      %v3788 = vadd.f32 %v3429, %v3680
      %v3789 = vadd.f32 %v3430, %v3683
      %v3790 = vadd.f32 %v3431, %v3688
      %v3791 = vadd.f32 %v3432, %v3691
      %v3792 = vadd.f32 %v3433, %v3696
      %v3793 = vadd.f32 %v3434, %v3699
      %v3794 = vadd.f32 %v3435, %v3704
      %v3795 = vadd.f32 %v3436, %v3707
      %v3796 = vadd.f32 %v3437, %v3712
      %v3797 = vadd.f32 %v3438, %v3715
      %v3798 = vadd.f32 %v3439, %v3720
      %v3799 = vadd.f32 %v3440, %v3723
      %v3800 = vadd.f32 %v3441, %v3728
      %v3801 = vadd.f32 %v3442, %v3731
      %v3802 = vadd.f32 %v3443, %v3736
      %v3803 = vadd.f32 %v3444, %v3739
      %v3804 = vadd.f32 %v3445, %v3744
      %v3805 = vadd.f32 %v3446, %v3747
      %v3806 = vadd.f32 %v3447, %v3752
      %v3807 = vadd.f32 %v3448, %v3755
      %v3808 = vadd.f32 %v3449, %v3760
      %v3809 = vadd.f32 %v3450, %v3763
      %v3810 = vadd.f32 %v3451, %v3768
      %v3811 = vadd.f32 %v3452, %v3771
      %v3812 = vadd.f32 %v3453, %v3776
      %v3813 = vadd.f32 %v3454, %v3779
      %v3814 = vld [vmem:[%s3455] sm:$0xf]
      %v3815 = vld [vmem:[%s3455 + $0x4] sm:$0xf]
      %v3816 = vld [vmem:[%s3455 + $0x8] sm:$0x1]
      %v3817 = vld [vmem:[%s3455 + $0xc] sm:$0xf]
      %v3818 = vld [vmem:[%s3455 + $0x10] sm:$0xf]
      %v3819 = vld [vmem:[%s3455 + $0x14] sm:$0x1]
      %v3820 = vld [vmem:[%s3455 + $0x18] sm:$0xf]
      %v3821 = vld [vmem:[%s3455 + $0x1c] sm:$0xf]
      %v3822 = vld [vmem:[%s3455 + $0x20] sm:$0x1]
      %v3823 = vld [vmem:[%s3455 + $0x24] sm:$0xf]
      %v3824 = vld [vmem:[%s3455 + $0x28] sm:$0xf]
      %v3825 = vld [vmem:[%s3455 + $0x2c] sm:$0x1]
      %v3826 = vld [vmem:[%s3455 + $0x30] sm:$0xf]
      %v3827 = vld [vmem:[%s3455 + $0x34] sm:$0xf]
      %v3828 = vld [vmem:[%s3455 + $0x38] sm:$0x1]
      %v3829 = vld [vmem:[%s3455 + $0x3c] sm:$0xf]
      %v3830 = vld [vmem:[%s3455 + $0x40] sm:$0xf]
      %v3831 = vld [vmem:[%s3455 + $0x44] sm:$0x1]
      %v3832 = vld [vmem:[%s3455 + $0x48] sm:$0xf]
      %v3833 = vld [vmem:[%s3455 + $0x4c] sm:$0xf]
      %v3834 = vld [vmem:[%s3455 + $0x50] sm:$0x1]
      %v3835 = vld [vmem:[%s3455 + $0x54] sm:$0xf]
      %v3836 = vld [vmem:[%s3455 + $0x58] sm:$0xf]
      %v3837 = vld [vmem:[%s3455 + $0x5c] sm:$0x1]
      %v3838 = vld [vmem:[%s3455 + $0x60] sm:$0xf]
      %v3839 = vld [vmem:[%s3455 + $0x64] sm:$0xf]
      %v3840 = vld [vmem:[%s3455 + $0x68] sm:$0x1]
      %v3841 = vld [vmem:[%s3455 + $0x6c] sm:$0xf]
      %v3842 = vld [vmem:[%s3455 + $0x70] sm:$0xf]
      %v3843 = vld [vmem:[%s3455 + $0x74] sm:$0x1]
      %v3844 = vld [vmem:[%s3455 + $0x78] sm:$0xf]
      %v3845 = vld [vmem:[%s3455 + $0x7c] sm:$0xf]
      %v3846 = vld [vmem:[%s3455 + $0x80] sm:$0x1]
      %v3847 = vld [vmem:[%s3455 + $0x84] sm:$0xf]
      %v3848 = vld [vmem:[%s3455 + $0x88] sm:$0xf]
      %v3849 = vld [vmem:[%s3455 + $0x8c] sm:$0x1]
      %v3850 = vld [vmem:[%s3455 + $0x90] sm:$0xf]
      %v3851 = vld [vmem:[%s3455 + $0x94] sm:$0xf]
      %v3852 = vld [vmem:[%s3455 + $0x98] sm:$0x1]
      %v3853 = vld [vmem:[%s3455 + $0x9c] sm:$0xf]
      %v3854 = vld [vmem:[%s3455 + $0xa0] sm:$0xf]
      %v3855 = vld [vmem:[%s3455 + $0xa4] sm:$0x1]
      %v3856 = vld [vmem:[%s3455 + $0xa8] sm:$0xf]
      %v3857 = vld [vmem:[%s3455 + $0xac] sm:$0xf]
      %v3858 = vld [vmem:[%s3455 + $0xb0] sm:$0x1]
      %v3859 = vld [vmem:[%s3455 + $0xb4] sm:$0xf]
      %v3860 = vld [vmem:[%s3455 + $0xb8] sm:$0xf]
      %v3861 = vld [vmem:[%s3455 + $0xbc] sm:$0x1]
      %v3863 = vshrl.u32 %v3814, 16
      %v3865 = vrot.slane %v3863, 4
      %v3866 = vshll.u32 %v3814, 16
      %v3868 = vrot.slane %v3866, 5
      %v3869 = vor.u32 %v3865, %v3868
      %v3870 = vrot.slane %v3869, 4
      %v3872 = vshll.u32 %v3815, 16
      %v3874 = vrot.slane %v3872, 5
      %v3875 = vsel %vm502, %v3870, %v3874
      %v3876 = vshrl.u32 %v3815, 16
      %v3878 = vrot.slane %v3876, 4
      %v3879 = vor.u32 %v3878, %v3874
      %v3880 = vrot.slane %v3879, 4
      %v3882 = vshll.u32 %v3816, 16
      %v3884 = vrot.slane %v3882, 5
      %v3885 = vsel %vm502, %v3880, %v3884
      %v3887 = vshrl.u32 %v3817, 16
      %v3889 = vrot.slane %v3887, 4
      %v3890 = vshll.u32 %v3817, 16
      %v3892 = vrot.slane %v3890, 5
      %v3893 = vor.u32 %v3889, %v3892
      %v3894 = vrot.slane %v3893, 4
      %v3896 = vshll.u32 %v3818, 16
      %v3898 = vrot.slane %v3896, 5
      %v3899 = vsel %vm502, %v3894, %v3898
      %v3900 = vshrl.u32 %v3818, 16
      %v3902 = vrot.slane %v3900, 4
      %v3903 = vor.u32 %v3902, %v3898
      %v3904 = vrot.slane %v3903, 4
      %v3906 = vshll.u32 %v3819, 16
      %v3908 = vrot.slane %v3906, 5
      %v3909 = vsel %vm502, %v3904, %v3908
      %v3911 = vshrl.u32 %v3820, 16
      %v3913 = vrot.slane %v3911, 4
      %v3914 = vshll.u32 %v3820, 16
      %v3916 = vrot.slane %v3914, 5
      %v3917 = vor.u32 %v3913, %v3916
      %v3918 = vrot.slane %v3917, 4
      %v3920 = vshll.u32 %v3821, 16
      %v3922 = vrot.slane %v3920, 5
      %v3923 = vsel %vm502, %v3918, %v3922
      %v3924 = vshrl.u32 %v3821, 16
      %v3926 = vrot.slane %v3924, 4
      %v3927 = vor.u32 %v3926, %v3922
      %v3928 = vrot.slane %v3927, 4
      %v3930 = vshll.u32 %v3822, 16
      %v3932 = vrot.slane %v3930, 5
      %v3933 = vsel %vm502, %v3928, %v3932
      %v3935 = vshrl.u32 %v3823, 16
      %v3937 = vrot.slane %v3935, 4
      %v3938 = vshll.u32 %v3823, 16
      %v3940 = vrot.slane %v3938, 5
      %v3941 = vor.u32 %v3937, %v3940
      %v3942 = vrot.slane %v3941, 4
      %v3944 = vshll.u32 %v3824, 16
      %v3946 = vrot.slane %v3944, 5
      %v3947 = vsel %vm502, %v3942, %v3946
      %v3948 = vshrl.u32 %v3824, 16
      %v3950 = vrot.slane %v3948, 4
      %v3951 = vor.u32 %v3950, %v3946
      %v3952 = vrot.slane %v3951, 4
      %v3954 = vshll.u32 %v3825, 16
      %v3956 = vrot.slane %v3954, 5
      %v3957 = vsel %vm502, %v3952, %v3956
      %v3959 = vshrl.u32 %v3826, 16
      %v3961 = vrot.slane %v3959, 4
      %v3962 = vshll.u32 %v3826, 16
      %v3964 = vrot.slane %v3962, 5
      %v3965 = vor.u32 %v3961, %v3964
      %v3966 = vrot.slane %v3965, 4
      %v3968 = vshll.u32 %v3827, 16
      %v3970 = vrot.slane %v3968, 5
      %v3971 = vsel %vm502, %v3966, %v3970
      %v3972 = vshrl.u32 %v3827, 16
      %v3974 = vrot.slane %v3972, 4
      %v3975 = vor.u32 %v3974, %v3970
      %v3976 = vrot.slane %v3975, 4
      %v3978 = vshll.u32 %v3828, 16
      %v3980 = vrot.slane %v3978, 5
      %v3981 = vsel %vm502, %v3976, %v3980
      %v3983 = vshrl.u32 %v3829, 16
      %v3985 = vrot.slane %v3983, 4
      %v3986 = vshll.u32 %v3829, 16
      %v3988 = vrot.slane %v3986, 5
      %v3989 = vor.u32 %v3985, %v3988
      %v3990 = vrot.slane %v3989, 4
      %v3992 = vshll.u32 %v3830, 16
      %v3994 = vrot.slane %v3992, 5
      %v3995 = vsel %vm502, %v3990, %v3994
      %v3996 = vshrl.u32 %v3830, 16
      %v3998 = vrot.slane %v3996, 4
      %v3999 = vor.u32 %v3998, %v3994
      %v4000 = vrot.slane %v3999, 4
      %v4002 = vshll.u32 %v3831, 16
      %v4004 = vrot.slane %v4002, 5
      %v4005 = vsel %vm502, %v4000, %v4004
      %v4007 = vshrl.u32 %v3832, 16
      %v4009 = vrot.slane %v4007, 4
      %v4010 = vshll.u32 %v3832, 16
      %v4012 = vrot.slane %v4010, 5
      %v4013 = vor.u32 %v4009, %v4012
      %v4014 = vrot.slane %v4013, 4
      %v4016 = vshll.u32 %v3833, 16
      %v4018 = vrot.slane %v4016, 5
      %v4019 = vsel %vm502, %v4014, %v4018
      %v4020 = vshrl.u32 %v3833, 16
      %v4022 = vrot.slane %v4020, 4
      %v4023 = vor.u32 %v4022, %v4018
      %v4024 = vrot.slane %v4023, 4
      %v4026 = vshll.u32 %v3834, 16
      %v4028 = vrot.slane %v4026, 5
      %v4029 = vsel %vm502, %v4024, %v4028
      %v4031 = vshrl.u32 %v3835, 16
      %v4033 = vrot.slane %v4031, 4
      %v4034 = vshll.u32 %v3835, 16
      %v4036 = vrot.slane %v4034, 5
      %v4037 = vor.u32 %v4033, %v4036
      %v4038 = vrot.slane %v4037, 4
      %v4040 = vshll.u32 %v3836, 16
      %v4042 = vrot.slane %v4040, 5
      %v4043 = vsel %vm502, %v4038, %v4042
      %v4044 = vshrl.u32 %v3836, 16
      %v4046 = vrot.slane %v4044, 4
      %v4047 = vor.u32 %v4046, %v4042
      %v4048 = vrot.slane %v4047, 4
      %v4050 = vshll.u32 %v3837, 16
      %v4052 = vrot.slane %v4050, 5
      %v4053 = vsel %vm502, %v4048, %v4052
      %v4055 = vshrl.u32 %v3838, 16
      %v4057 = vrot.slane %v4055, 4
      %v4058 = vshll.u32 %v3838, 16
      %v4060 = vrot.slane %v4058, 5
      %v4061 = vor.u32 %v4057, %v4060
      %v4062 = vrot.slane %v4061, 4
      %v4064 = vshll.u32 %v3839, 16
      %v4066 = vrot.slane %v4064, 5
      %v4067 = vsel %vm502, %v4062, %v4066
      %v4068 = vshrl.u32 %v3839, 16
      %v4070 = vrot.slane %v4068, 4
      %v4071 = vor.u32 %v4070, %v4066
      %v4072 = vrot.slane %v4071, 4
      %v4074 = vshll.u32 %v3840, 16
      %v4076 = vrot.slane %v4074, 5
      %v4077 = vsel %vm502, %v4072, %v4076
      %v4079 = vshrl.u32 %v3841, 16
      %v4081 = vrot.slane %v4079, 4
      %v4082 = vshll.u32 %v3841, 16
      %v4084 = vrot.slane %v4082, 5
      %v4085 = vor.u32 %v4081, %v4084
      %v4086 = vrot.slane %v4085, 4
      %v4088 = vshll.u32 %v3842, 16
      %v4090 = vrot.slane %v4088, 5
      %v4091 = vsel %vm502, %v4086, %v4090
      %v4092 = vshrl.u32 %v3842, 16
      %v4094 = vrot.slane %v4092, 4
      %v4095 = vor.u32 %v4094, %v4090
      %v4096 = vrot.slane %v4095, 4
      %v4098 = vshll.u32 %v3843, 16
      %v4100 = vrot.slane %v4098, 5
      %v4101 = vsel %vm502, %v4096, %v4100
      %v4103 = vshrl.u32 %v3844, 16
      %v4105 = vrot.slane %v4103, 4
      %v4106 = vshll.u32 %v3844, 16
      %v4108 = vrot.slane %v4106, 5
      %v4109 = vor.u32 %v4105, %v4108
      %v4110 = vrot.slane %v4109, 4
      %v4112 = vshll.u32 %v3845, 16
      %v4114 = vrot.slane %v4112, 5
      %v4115 = vsel %vm502, %v4110, %v4114
      %v4116 = vshrl.u32 %v3845, 16
      %v4118 = vrot.slane %v4116, 4
      %v4119 = vor.u32 %v4118, %v4114
      %v4120 = vrot.slane %v4119, 4
      %v4122 = vshll.u32 %v3846, 16
      %v4124 = vrot.slane %v4122, 5
      %v4125 = vsel %vm502, %v4120, %v4124
      %v4127 = vshrl.u32 %v3847, 16
      %v4129 = vrot.slane %v4127, 4
      %v4130 = vshll.u32 %v3847, 16
      %v4132 = vrot.slane %v4130, 5
      %v4133 = vor.u32 %v4129, %v4132
      %v4134 = vrot.slane %v4133, 4
      %v4136 = vshll.u32 %v3848, 16
      %v4138 = vrot.slane %v4136, 5
      %v4139 = vsel %vm502, %v4134, %v4138
      %v4140 = vshrl.u32 %v3848, 16
      %v4142 = vrot.slane %v4140, 4
      %v4143 = vor.u32 %v4142, %v4138
      %v4144 = vrot.slane %v4143, 4
      %v4146 = vshll.u32 %v3849, 16
      %v4148 = vrot.slane %v4146, 5
      %v4149 = vsel %vm502, %v4144, %v4148
      %v4151 = vshrl.u32 %v3850, 16
      %v4153 = vrot.slane %v4151, 4
      %v4154 = vshll.u32 %v3850, 16
      %v4156 = vrot.slane %v4154, 5
      %v4157 = vor.u32 %v4153, %v4156
      %v4158 = vrot.slane %v4157, 4
      %v4160 = vshll.u32 %v3851, 16
      %v4162 = vrot.slane %v4160, 5
      %v4163 = vsel %vm502, %v4158, %v4162
      %v4164 = vshrl.u32 %v3851, 16
      %v4166 = vrot.slane %v4164, 4
      %v4167 = vor.u32 %v4166, %v4162
      %v4168 = vrot.slane %v4167, 4
      %v4170 = vshll.u32 %v3852, 16
      %v4172 = vrot.slane %v4170, 5
      %v4173 = vsel %vm502, %v4168, %v4172
      %v4175 = vshrl.u32 %v3853, 16
      %v4177 = vrot.slane %v4175, 4
      %v4178 = vshll.u32 %v3853, 16
      %v4180 = vrot.slane %v4178, 5
      %v4181 = vor.u32 %v4177, %v4180
      %v4182 = vrot.slane %v4181, 4
      %v4184 = vshll.u32 %v3854, 16
      %v4186 = vrot.slane %v4184, 5
      %v4187 = vsel %vm502, %v4182, %v4186
      %v4188 = vshrl.u32 %v3854, 16
      %v4190 = vrot.slane %v4188, 4
      %v4191 = vor.u32 %v4190, %v4186
      %v4192 = vrot.slane %v4191, 4
      %v4194 = vshll.u32 %v3855, 16
      %v4196 = vrot.slane %v4194, 5
      %v4197 = vsel %vm502, %v4192, %v4196
      %v4199 = vshrl.u32 %v3856, 16
      %v4201 = vrot.slane %v4199, 4
      %v4202 = vshll.u32 %v3856, 16
      %v4204 = vrot.slane %v4202, 5
      %v4205 = vor.u32 %v4201, %v4204
      %v4206 = vrot.slane %v4205, 4
      %v4208 = vshll.u32 %v3857, 16
      %v4210 = vrot.slane %v4208, 5
      %v4211 = vsel %vm502, %v4206, %v4210
      %v4212 = vshrl.u32 %v3857, 16
      %v4214 = vrot.slane %v4212, 4
      %v4215 = vor.u32 %v4214, %v4210
      %v4216 = vrot.slane %v4215, 4
      %v4218 = vshll.u32 %v3858, 16
      %v4220 = vrot.slane %v4218, 5
      %v4221 = vsel %vm502, %v4216, %v4220
      %v4223 = vshrl.u32 %v3859, 16
      %v4225 = vrot.slane %v4223, 4
      %v4226 = vshll.u32 %v3859, 16
      %v4228 = vrot.slane %v4226, 5
      %v4229 = vor.u32 %v4225, %v4228
      %v4230 = vrot.slane %v4229, 4
      %v4232 = vshll.u32 %v3860, 16
      %v4234 = vrot.slane %v4232, 5
      %v4235 = vsel %vm502, %v4230, %v4234
      %v4236 = vshrl.u32 %v3860, 16
      %v4238 = vrot.slane %v4236, 4
      %v4239 = vor.u32 %v4238, %v4234
      %v4240 = vrot.slane %v4239, 4
      %v4242 = vshll.u32 %v3861, 16
      %v4244 = vrot.slane %v4242, 5
      %v4245 = vsel %vm502, %v4240, %v4244
      %s4246 = scalar_lea.vmem %s2, 14
      %v4247 = vld [vmem:[%s4246] sm:$0x3]
      %v4248 = vunpack.c.l.b16 %v3875
      %v4249 = vunpack.c.l.b16 %v3885
      %v4250 = vunpack.c.l.b16 %v3899
      %v4251 = vunpack.c.l.b16 %v3909
      %v4252 = vunpack.c.l.b16 %v3923
      %v4253 = vunpack.c.l.b16 %v3933
      %v4254 = vunpack.c.l.b16 %v3947
      %v4255 = vunpack.c.l.b16 %v3957
      %v4256 = vunpack.c.l.b16 %v3971
      %v4257 = vunpack.c.l.b16 %v3981
      %v4258 = vunpack.c.l.b16 %v3995
      %v4259 = vunpack.c.l.b16 %v4005
      %v4260 = vunpack.c.l.b16 %v4019
      %v4261 = vunpack.c.l.b16 %v4029
      %v4262 = vunpack.c.l.b16 %v4043
      %v4263 = vunpack.c.l.b16 %v4053
      %v4264 = vunpack.c.l.b16 %v4067
      %v4265 = vunpack.c.l.b16 %v4077
      %v4266 = vunpack.c.l.b16 %v4091
      %v4267 = vunpack.c.l.b16 %v4101
      %v4268 = vunpack.c.l.b16 %v4115
      %v4269 = vunpack.c.l.b16 %v4125
      %v4270 = vunpack.c.l.b16 %v4139
      %v4271 = vunpack.c.l.b16 %v4149
      %v4272 = vunpack.c.l.b16 %v4163
      %v4273 = vunpack.c.l.b16 %v4173
      %v4274 = vunpack.c.l.b16 %v4187
      %v4275 = vunpack.c.l.b16 %v4197
      %v4276 = vunpack.c.l.b16 %v4211
      %v4277 = vunpack.c.l.b16 %v4221
      %v4278 = vunpack.c.l.b16 %v4235
      %v4279 = vunpack.c.l.b16 %v4245
      %v4280 = vpack.c.b16 %v4249, %v4248
      %v4281 = vpack.c.b16 %v4251, %v4250
      %v4282 = vpack.c.b16 %v4253, %v4252
      %v4283 = vpack.c.b16 %v4255, %v4254
      %v4284 = vpack.c.b16 %v4257, %v4256
      %v4285 = vpack.c.b16 %v4259, %v4258
      %v4286 = vpack.c.b16 %v4261, %v4260
      %v4287 = vpack.c.b16 %v4263, %v4262
      %v4288 = vpack.c.b16 %v4265, %v4264
      %v4289 = vpack.c.b16 %v4267, %v4266
      %v4290 = vpack.c.b16 %v4269, %v4268
      %v4291 = vpack.c.b16 %v4271, %v4270
      %v4292 = vpack.c.b16 %v4273, %v4272
      %v4293 = vpack.c.b16 %v4275, %v4274
      %v4294 = vpack.c.b16 %v4277, %v4276
      %v4295 = vpack.c.b16 %v4279, %v4278
      %v4297 = vsel %vm937, %v4280, 0
      %v4300 = vsel %vm937, %v4281, 0
      %v4303 = vsel %vm937, %v4282, 0
      %v4306 = vsel %vm937, %v4283, 0
      %v4309 = vsel %vm937, %v4284, 0
      %v4312 = vsel %vm937, %v4285, 0
      %v4315 = vsel %vm937, %v4286, 0
      %v4318 = vsel %vm937, %v4287, 0
      %v4321 = vsel %vm937, %v4288, 0
      %v4324 = vsel %vm937, %v4289, 0
      %v4327 = vsel %vm937, %v4290, 0
      %v4330 = vsel %vm937, %v4291, 0
      %v4333 = vsel %vm937, %v4292, 0
      %v4336 = vsel %vm937, %v4293, 0
      %v4339 = vsel %vm937, %v4294, 0
      %v4342 = vsel %vm937, %v4295, 0
      %v4345 = vsel %vm986, %v4247, 0
      %4347 = vmatprep.subr.bf16.mxu0 0
      %4348 = vmatpush1.bf16.msra.mxu0 %v4345
      %4349 = vmatprep.subr.bf16.mxu0 0
      %4350 = vmatpush1.bf16.msra.mxu0 0
      %4351 = vmatprep.subr.bf16.mxu0 0
      %4352 = vmatpush1.bf16.msra.mxu0 0
      %4353 = vmatprep.subr.bf16.mxu0 0
      %4354 = vmatpush1.bf16.msra.mxu0 0
      %4355 = vmatprep.subr.bf16.mxu0 0
      %4356 = vmatpush1.bf16.msra.mxu0 0
      %4357 = vmatprep.subr.bf16.mxu0 0
      %4358 = vmatpush1.bf16.msra.mxu0 0
      %4359 = vmatprep.subr.bf16.mxu0 0
      %4360 = vmatpush1.bf16.msra.mxu0 0
      %4361 = vmatprep.subr.bf16.mxu0 0
      %4362 = vmatpush1.bf16.msra.mxu0 0
      %4363 = vmatprep.subr.bf16.mxu0 0
      %4364 = vmatpush1.bf16.msra.mxu0 0
      %4365 = vmatprep.subr.bf16.mxu0 0
      %4366 = vmatpush1.bf16.msra.mxu0 0
      %4367 = vmatprep.subr.bf16.mxu0 0
      %4368 = vmatpush1.bf16.msra.mxu0 0
      %4369 = vmatprep.subr.bf16.mxu0 0
      %4370 = vmatpush1.bf16.msra.mxu0 0
      %4371 = vmatprep.subr.bf16.mxu0 0
      %4372 = vmatpush1.bf16.msra.mxu0 0
      %4373 = vmatprep.subr.bf16.mxu0 0
      %4374 = vmatpush1.bf16.msra.mxu0 0
      %4375 = vmatprep.subr.bf16.mxu0 0
      %4376 = vmatpush1.bf16.msra.mxu0 0
      %4377 = vmatprep.subr.bf16.mxu0 0
      %4378 = vmatpush1.bf16.msra.mxu0 0
      %4379 = vmatprep.mubr.bf16.mxu0 0
      %4380 = vmatmul.mubr.bf16.gmra.mrb[0].mxu0 %v4297
      %v4381 = vpop.f32.mrb[0].mxu0
      %v4382 = vadd.f32 0.0, %v4381
      %v4383 = vpop.f32.mrb[0].mxu0
      %v4384 = vpop.f32.mrb[0].mxu0
      %v4385 = vadd.f32 0.0, %v4384
      %v4386 = vpop.f32.mrb[0].mxu0
      %4387 = vmatprep.mubr.bf16.mxu0 0
      %4388 = vmatmul.mubr.bf16.gmra.mrb[0].mxu0 %v4300
      %v4389 = vpop.f32.mrb[0].mxu0
      %v4390 = vadd.f32 0.0, %v4389
      %v4391 = vpop.f32.mrb[0].mxu0
      %v4392 = vpop.f32.mrb[0].mxu0
      %v4393 = vadd.f32 0.0, %v4392
      %v4394 = vpop.f32.mrb[0].mxu0
      %4395 = vmatprep.mubr.bf16.mxu0 0
      %4396 = vmatmul.mubr.bf16.gmra.mrb[0].mxu0 %v4303
      %v4397 = vpop.f32.mrb[0].mxu0
      %v4398 = vadd.f32 0.0, %v4397
      %v4399 = vpop.f32.mrb[0].mxu0
      %v4400 = vpop.f32.mrb[0].mxu0
      %v4401 = vadd.f32 0.0, %v4400
      %v4402 = vpop.f32.mrb[0].mxu0
      %4403 = vmatprep.mubr.bf16.mxu0 0
      %4404 = vmatmul.mubr.bf16.gmra.mrb[0].mxu0 %v4306
      %v4405 = vpop.f32.mrb[0].mxu0
      %v4406 = vadd.f32 0.0, %v4405
      %v4407 = vpop.f32.mrb[0].mxu0
      %v4408 = vpop.f32.mrb[0].mxu0
      %v4409 = vadd.f32 0.0, %v4408
      %v4410 = vpop.f32.mrb[0].mxu0
      %4411 = vmatprep.mubr.bf16.mxu0 0
      %4412 = vmatmul.mubr.bf16.gmra.mrb[0].mxu0 %v4309
      %v4413 = vpop.f32.mrb[0].mxu0
      %v4414 = vadd.f32 0.0, %v4413
      %v4415 = vpop.f32.mrb[0].mxu0
      %v4416 = vpop.f32.mrb[0].mxu0
      %v4417 = vadd.f32 0.0, %v4416
      %v4418 = vpop.f32.mrb[0].mxu0
      %4419 = vmatprep.mubr.bf16.mxu0 0
      %4420 = vmatmul.mubr.bf16.gmra.mrb[0].mxu0 %v4312
      %v4421 = vpop.f32.mrb[0].mxu0
      %v4422 = vadd.f32 0.0, %v4421
      %v4423 = vpop.f32.mrb[0].mxu0
      %v4424 = vpop.f32.mrb[0].mxu0
      %v4425 = vadd.f32 0.0, %v4424
      %v4426 = vpop.f32.mrb[0].mxu0
      %4427 = vmatprep.mubr.bf16.mxu0 0
      %4428 = vmatmul.mubr.bf16.gmra.mrb[0].mxu0 %v4315
      %v4429 = vpop.f32.mrb[0].mxu0
      %v4430 = vadd.f32 0.0, %v4429
      %v4431 = vpop.f32.mrb[0].mxu0
      %v4432 = vpop.f32.mrb[0].mxu0
      %v4433 = vadd.f32 0.0, %v4432
      %v4434 = vpop.f32.mrb[0].mxu0
      %4435 = vmatprep.mubr.bf16.mxu0 0
      %4436 = vmatmul.mubr.bf16.gmra.mrb[0].mxu0 %v4318
      %v4437 = vpop.f32.mrb[0].mxu0
      %v4438 = vadd.f32 0.0, %v4437
      %v4439 = vpop.f32.mrb[0].mxu0
      %v4440 = vpop.f32.mrb[0].mxu0
      %v4441 = vadd.f32 0.0, %v4440
      %v4442 = vpop.f32.mrb[0].mxu0
      %4443 = vmatprep.mubr.bf16.mxu0 0
      %4444 = vmatmul.mubr.bf16.gmra.mrb[0].mxu0 %v4321
      %v4445 = vpop.f32.mrb[0].mxu0
      %v4446 = vadd.f32 0.0, %v4445
      %v4447 = vpop.f32.mrb[0].mxu0
      %v4448 = vpop.f32.mrb[0].mxu0
      %v4449 = vadd.f32 0.0, %v4448
      %v4450 = vpop.f32.mrb[0].mxu0
      %4451 = vmatprep.mubr.bf16.mxu0 0
      %4452 = vmatmul.mubr.bf16.gmra.mrb[0].mxu0 %v4324
      %v4453 = vpop.f32.mrb[0].mxu0
      %v4454 = vadd.f32 0.0, %v4453
      %v4455 = vpop.f32.mrb[0].mxu0
      %v4456 = vpop.f32.mrb[0].mxu0
      %v4457 = vadd.f32 0.0, %v4456
      %v4458 = vpop.f32.mrb[0].mxu0
      %4459 = vmatprep.mubr.bf16.mxu0 0
      %4460 = vmatmul.mubr.bf16.gmra.mrb[0].mxu0 %v4327
      %v4461 = vpop.f32.mrb[0].mxu0
      %v4462 = vadd.f32 0.0, %v4461
      %v4463 = vpop.f32.mrb[0].mxu0
      %v4464 = vpop.f32.mrb[0].mxu0
      %v4465 = vadd.f32 0.0, %v4464
      %v4466 = vpop.f32.mrb[0].mxu0
      %4467 = vmatprep.mubr.bf16.mxu0 0
      %4468 = vmatmul.mubr.bf16.gmra.mrb[0].mxu0 %v4330
      %v4469 = vpop.f32.mrb[0].mxu0
      %v4470 = vadd.f32 0.0, %v4469
      %v4471 = vpop.f32.mrb[0].mxu0
      %v4472 = vpop.f32.mrb[0].mxu0
      %v4473 = vadd.f32 0.0, %v4472
      %v4474 = vpop.f32.mrb[0].mxu0
      %4475 = vmatprep.mubr.bf16.mxu0 0
      %4476 = vmatmul.mubr.bf16.gmra.mrb[0].mxu0 %v4333
      %v4477 = vpop.f32.mrb[0].mxu0
      %v4478 = vadd.f32 0.0, %v4477
      %v4479 = vpop.f32.mrb[0].mxu0
      %v4480 = vpop.f32.mrb[0].mxu0
      %v4481 = vadd.f32 0.0, %v4480
      %v4482 = vpop.f32.mrb[0].mxu0
      %4483 = vmatprep.mubr.bf16.mxu0 0
      %4484 = vmatmul.mubr.bf16.gmra.mrb[0].mxu0 %v4336
      %v4485 = vpop.f32.mrb[0].mxu0
      %v4486 = vadd.f32 0.0, %v4485
      %v4487 = vpop.f32.mrb[0].mxu0
      %v4488 = vpop.f32.mrb[0].mxu0
      %v4489 = vadd.f32 0.0, %v4488
      %v4490 = vpop.f32.mrb[0].mxu0
      %4491 = vmatprep.mubr.bf16.mxu0 0
      %4492 = vmatmul.mubr.bf16.gmra.mrb[0].mxu0 %v4339
      %v4493 = vpop.f32.mrb[0].mxu0
      %v4494 = vadd.f32 0.0, %v4493
      %v4495 = vpop.f32.mrb[0].mxu0
      %v4496 = vpop.f32.mrb[0].mxu0
      %v4497 = vadd.f32 0.0, %v4496
      %v4498 = vpop.f32.mrb[0].mxu0
      %4499 = vmatprep.mubr.bf16.mxu0 0
      %4500 = vmatmul.mubr.bf16.gmra.mrb[0].mxu0 %v4342
      %v4501 = vpop.f32.mrb[0].mxu0
      %v4502 = vadd.f32 0.0, %v4501
      %v4503 = vpop.f32.mrb[0].mxu0
      %v4504 = vpop.f32.mrb[0].mxu0
      %v4505 = vadd.f32 0.0, %v4504
      %v4506 = vpop.f32.mrb[0].mxu0
      %4507 = vdwg.mxu0
      %v4508 = vadd.f32 %v3782, %v4382
      %v4509 = vadd.f32 %v3783, %v4385
      %v4510 = vadd.f32 %v3784, %v4390
      %v4511 = vadd.f32 %v3785, %v4393
      %v4512 = vadd.f32 %v3786, %v4398
      %v4513 = vadd.f32 %v3787, %v4401
      %v4514 = vadd.f32 %v3788, %v4406
      %v4515 = vadd.f32 %v3789, %v4409
      %v4516 = vadd.f32 %v3790, %v4414
      %v4517 = vadd.f32 %v3791, %v4417
      %v4518 = vadd.f32 %v3792, %v4422
      %v4519 = vadd.f32 %v3793, %v4425
      %v4520 = vadd.f32 %v3794, %v4430
      %v4521 = vadd.f32 %v3795, %v4433
      %v4522 = vadd.f32 %v3796, %v4438
      %v4523 = vadd.f32 %v3797, %v4441
      %v4524 = vadd.f32 %v3798, %v4446
      %v4525 = vadd.f32 %v3799, %v4449
      %v4526 = vadd.f32 %v3800, %v4454
      %v4527 = vadd.f32 %v3801, %v4457
      %v4528 = vadd.f32 %v3802, %v4462
      %v4529 = vadd.f32 %v3803, %v4465
      %v4530 = vadd.f32 %v3804, %v4470
      %v4531 = vadd.f32 %v3805, %v4473
      %v4532 = vadd.f32 %v3806, %v4478
      %v4533 = vadd.f32 %v3807, %v4481
      %v4534 = vadd.f32 %v3808, %v4486
      %v4535 = vadd.f32 %v3809, %v4489
      %v4536 = vadd.f32 %v3810, %v4494
      %v4537 = vadd.f32 %v3811, %v4497
      %v4538 = vadd.f32 %v3812, %v4502
      %v4539 = vadd.f32 %v3813, %v4505
      %v4540 = vld [vmem:[%s3455] sm:$0xe]
      %v4541 = vld [vmem:[%s3455 + $0xc] sm:$0xe]
      %v4542 = vld [vmem:[%s3455 + $0x18] sm:$0xe]
      %v4543 = vld [vmem:[%s3455 + $0x24] sm:$0xe]
      %v4544 = vld [vmem:[%s3455 + $0x30] sm:$0xe]
      %v4545 = vld [vmem:[%s3455 + $0x3c] sm:$0xe]
      %v4546 = vld [vmem:[%s3455 + $0x48] sm:$0xe]
      %v4547 = vld [vmem:[%s3455 + $0x54] sm:$0xe]
      %v4548 = vld [vmem:[%s3455 + $0x60] sm:$0xe]
      %v4549 = vld [vmem:[%s3455 + $0x6c] sm:$0xe]
      %v4550 = vld [vmem:[%s3455 + $0x78] sm:$0xe]
      %v4551 = vld [vmem:[%s3455 + $0x84] sm:$0xe]
      %v4552 = vld [vmem:[%s3455 + $0x90] sm:$0xe]
      %v4553 = vld [vmem:[%s3455 + $0x9c] sm:$0xe]
      %v4554 = vld [vmem:[%s3455 + $0xa8] sm:$0xe]
      %v4555 = vld [vmem:[%s3455 + $0xb4] sm:$0xe]
      %v4604 = vrot.slane %v4540, 5
      %v4605 = vrot.slane %v4604, 4
      %v4606 = vrot.slane %v3815, 5
      %v4607 = vsel %vm1493, %v4605, %v4606
      %v4608 = vrot.slane %v4606, 4
      %v4609 = vrot.slane %v3816, 5
      %v4610 = vsel %vm1493, %v4608, %v4609
      %v4611 = vrot.slane %v4541, 5
      %v4612 = vrot.slane %v4611, 4
      %v4613 = vrot.slane %v3818, 5
      %v4614 = vsel %vm1493, %v4612, %v4613
      %v4615 = vrot.slane %v4613, 4
      %v4616 = vrot.slane %v3819, 5
      %v4617 = vsel %vm1493, %v4615, %v4616
      %v4618 = vrot.slane %v4542, 5
      %v4619 = vrot.slane %v4618, 4
      %v4620 = vrot.slane %v3821, 5
      %v4621 = vsel %vm1493, %v4619, %v4620
      %v4622 = vrot.slane %v4620, 4
      %v4623 = vrot.slane %v3822, 5
      %v4624 = vsel %vm1493, %v4622, %v4623
      %v4625 = vrot.slane %v4543, 5
      %v4626 = vrot.slane %v4625, 4
      %v4627 = vrot.slane %v3824, 5
      %v4628 = vsel %vm1493, %v4626, %v4627
      %v4629 = vrot.slane %v4627, 4
      %v4630 = vrot.slane %v3825, 5
      %v4631 = vsel %vm1493, %v4629, %v4630
      %v4632 = vrot.slane %v4544, 5
      %v4633 = vrot.slane %v4632, 4
      %v4634 = vrot.slane %v3827, 5
      %v4635 = vsel %vm1493, %v4633, %v4634
      %v4636 = vrot.slane %v4634, 4
      %v4637 = vrot.slane %v3828, 5
      %v4638 = vsel %vm1493, %v4636, %v4637
      %v4639 = vrot.slane %v4545, 5
      %v4640 = vrot.slane %v4639, 4
      %v4641 = vrot.slane %v3830, 5
      %v4642 = vsel %vm1493, %v4640, %v4641
      %v4643 = vrot.slane %v4641, 4
      %v4644 = vrot.slane %v3831, 5
      %v4645 = vsel %vm1493, %v4643, %v4644
      %v4646 = vrot.slane %v4546, 5
      %v4647 = vrot.slane %v4646, 4
      %v4648 = vrot.slane %v3833, 5
      %v4649 = vsel %vm1493, %v4647, %v4648
      %v4650 = vrot.slane %v4648, 4
      %v4651 = vrot.slane %v3834, 5
      %v4652 = vsel %vm1493, %v4650, %v4651
      %v4653 = vrot.slane %v4547, 5
      %v4654 = vrot.slane %v4653, 4
      %v4655 = vrot.slane %v3836, 5
      %v4656 = vsel %vm1493, %v4654, %v4655
      %v4657 = vrot.slane %v4655, 4
      %v4658 = vrot.slane %v3837, 5
      %v4659 = vsel %vm1493, %v4657, %v4658
      %v4660 = vrot.slane %v4548, 5
      %v4661 = vrot.slane %v4660, 4
      %v4662 = vrot.slane %v3839, 5
      %v4663 = vsel %vm1493, %v4661, %v4662
      %v4664 = vrot.slane %v4662, 4
      %v4665 = vrot.slane %v3840, 5
      %v4666 = vsel %vm1493, %v4664, %v4665
      %v4667 = vrot.slane %v4549, 5
      %v4668 = vrot.slane %v4667, 4
      %v4669 = vrot.slane %v3842, 5
      %v4670 = vsel %vm1493, %v4668, %v4669
      %v4671 = vrot.slane %v4669, 4
      %v4672 = vrot.slane %v3843, 5
      %v4673 = vsel %vm1493, %v4671, %v4672
      %v4674 = vrot.slane %v4550, 5
      %v4675 = vrot.slane %v4674, 4
      %v4676 = vrot.slane %v3845, 5
      %v4677 = vsel %vm1493, %v4675, %v4676
      %v4678 = vrot.slane %v4676, 4
      %v4679 = vrot.slane %v3846, 5
      %v4680 = vsel %vm1493, %v4678, %v4679
      %v4681 = vrot.slane %v4551, 5
      %v4682 = vrot.slane %v4681, 4
      %v4683 = vrot.slane %v3848, 5
      %v4684 = vsel %vm1493, %v4682, %v4683
      %v4685 = vrot.slane %v4683, 4
      %v4686 = vrot.slane %v3849, 5
      %v4687 = vsel %vm1493, %v4685, %v4686
      %v4688 = vrot.slane %v4552, 5
      %v4689 = vrot.slane %v4688, 4
      %v4690 = vrot.slane %v3851, 5
      %v4691 = vsel %vm1493, %v4689, %v4690
      %v4692 = vrot.slane %v4690, 4
      %v4693 = vrot.slane %v3852, 5
      %v4694 = vsel %vm1493, %v4692, %v4693
      %v4695 = vrot.slane %v4553, 5
      %v4696 = vrot.slane %v4695, 4
      %v4697 = vrot.slane %v3854, 5
      %v4698 = vsel %vm1493, %v4696, %v4697
      %v4699 = vrot.slane %v4697, 4
      %v4700 = vrot.slane %v3855, 5
      %v4701 = vsel %vm1493, %v4699, %v4700
      %v4702 = vrot.slane %v4554, 5
      %v4703 = vrot.slane %v4702, 4
      %v4704 = vrot.slane %v3857, 5
      %v4705 = vsel %vm1493, %v4703, %v4704
      %v4706 = vrot.slane %v4704, 4
      %v4707 = vrot.slane %v3858, 5
      %v4708 = vsel %vm1493, %v4706, %v4707
      %v4709 = vrot.slane %v4555, 5
      %v4710 = vrot.slane %v4709, 4
      %v4711 = vrot.slane %v3860, 5
      %v4712 = vsel %vm1493, %v4710, %v4711
      %v4713 = vrot.slane %v4711, 4
      %v4714 = vrot.slane %v3861, 5
      %v4715 = vsel %vm1493, %v4713, %v4714
      %s4716 = scalar_lea.vmem %s2, 16
      %v4717 = vld [vmem:[%s4716] sm:$0x3]
      %v4718 = vunpack.c.l.b16 %v4607
      %v4719 = vunpack.c.l.b16 %v4610
      %v4720 = vunpack.c.l.b16 %v4614
      %v4721 = vunpack.c.l.b16 %v4617
      %v4722 = vunpack.c.l.b16 %v4621
      %v4723 = vunpack.c.l.b16 %v4624
      %v4724 = vunpack.c.l.b16 %v4628
      %v4725 = vunpack.c.l.b16 %v4631
      %v4726 = vunpack.c.l.b16 %v4635
      %v4727 = vunpack.c.l.b16 %v4638
      %v4728 = vunpack.c.l.b16 %v4642
      %v4729 = vunpack.c.l.b16 %v4645
      %v4730 = vunpack.c.l.b16 %v4649
      %v4731 = vunpack.c.l.b16 %v4652
      %v4732 = vunpack.c.l.b16 %v4656
      %v4733 = vunpack.c.l.b16 %v4659
      %v4734 = vunpack.c.l.b16 %v4663
      %v4735 = vunpack.c.l.b16 %v4666
      %v4736 = vunpack.c.l.b16 %v4670
      %v4737 = vunpack.c.l.b16 %v4673
      %v4738 = vunpack.c.l.b16 %v4677
      %v4739 = vunpack.c.l.b16 %v4680
      %v4740 = vunpack.c.l.b16 %v4684
      %v4741 = vunpack.c.l.b16 %v4687
      %v4742 = vunpack.c.l.b16 %v4691
      %v4743 = vunpack.c.l.b16 %v4694
      %v4744 = vunpack.c.l.b16 %v4698
      %v4745 = vunpack.c.l.b16 %v4701
      %v4746 = vunpack.c.l.b16 %v4705
      %v4747 = vunpack.c.l.b16 %v4708
      %v4748 = vunpack.c.l.b16 %v4712
      %v4749 = vunpack.c.l.b16 %v4715
      %v4750 = vpack.c.b16 %v4719, %v4718
      %v4751 = vpack.c.b16 %v4721, %v4720
      %v4752 = vpack.c.b16 %v4723, %v4722
      %v4753 = vpack.c.b16 %v4725, %v4724
      %v4754 = vpack.c.b16 %v4727, %v4726
      %v4755 = vpack.c.b16 %v4729, %v4728
      %v4756 = vpack.c.b16 %v4731, %v4730
      %v4757 = vpack.c.b16 %v4733, %v4732
      %v4758 = vpack.c.b16 %v4735, %v4734
      %v4759 = vpack.c.b16 %v4737, %v4736
      %v4760 = vpack.c.b16 %v4739, %v4738
      %v4761 = vpack.c.b16 %v4741, %v4740
      %v4762 = vpack.c.b16 %v4743, %v4742
      %v4763 = vpack.c.b16 %v4745, %v4744
      %v4764 = vpack.c.b16 %v4747, %v4746
      %v4765 = vpack.c.b16 %v4749, %v4748
      %v4767 = vsel %vm937, %v4750, 0
      %v4770 = vsel %vm937, %v4751, 0
      %v4773 = vsel %vm937, %v4752, 0
      %v4776 = vsel %vm937, %v4753, 0
      %v4779 = vsel %vm937, %v4754, 0
      %v4782 = vsel %vm937, %v4755, 0
      %v4785 = vsel %vm937, %v4756, 0
      %v4788 = vsel %vm937, %v4757, 0
      %v4791 = vsel %vm937, %v4758, 0
      %v4794 = vsel %vm937, %v4759, 0
      %v4797 = vsel %vm937, %v4760, 0
      %v4800 = vsel %vm937, %v4761, 0
      %v4803 = vsel %vm937, %v4762, 0
      %v4806 = vsel %vm937, %v4763, 0
      %v4809 = vsel %vm937, %v4764, 0
      %v4812 = vsel %vm937, %v4765, 0
      %v4815 = vsel %vm986, %v4717, 0
      %4817 = vmatprep.subr.bf16.mxu0 0
      %4818 = vmatpush1.bf16.msra.mxu0 %v4815
      %4819 = vmatprep.subr.bf16.mxu0 0
      %4820 = vmatpush1.bf16.msra.mxu0 0
      %4821 = vmatprep.subr.bf16.mxu0 0
      %4822 = vmatpush1.bf16.msra.mxu0 0
      %4823 = vmatprep.subr.bf16.mxu0 0
      %4824 = vmatpush1.bf16.msra.mxu0 0
      %4825 = vmatprep.subr.bf16.mxu0 0
      %4826 = vmatpush1.bf16.msra.mxu0 0
      %4827 = vmatprep.subr.bf16.mxu0 0
      %4828 = vmatpush1.bf16.msra.mxu0 0
      %4829 = vmatprep.subr.bf16.mxu0 0
      %4830 = vmatpush1.bf16.msra.mxu0 0
      %4831 = vmatprep.subr.bf16.mxu0 0
      %4832 = vmatpush1.bf16.msra.mxu0 0
      %4833 = vmatprep.subr.bf16.mxu0 0
      %4834 = vmatpush1.bf16.msra.mxu0 0
      %4835 = vmatprep.subr.bf16.mxu0 0
      %4836 = vmatpush1.bf16.msra.mxu0 0
      %4837 = vmatprep.subr.bf16.mxu0 0
      %4838 = vmatpush1.bf16.msra.mxu0 0
      %4839 = vmatprep.subr.bf16.mxu0 0
      %4840 = vmatpush1.bf16.msra.mxu0 0
      %4841 = vmatprep.subr.bf16.mxu0 0
      %4842 = vmatpush1.bf16.msra.mxu0 0
      %4843 = vmatprep.subr.bf16.mxu0 0
      %4844 = vmatpush1.bf16.msra.mxu0 0
      %4845 = vmatprep.subr.bf16.mxu0 0
      %4846 = vmatpush1.bf16.msra.mxu0 0
      %4847 = vmatprep.subr.bf16.mxu0 0
      %4848 = vmatpush1.bf16.msra.mxu0 0
      %4849 = vmatprep.mubr.bf16.mxu0 0
      %4850 = vmatmul.mubr.bf16.gmra.mrb[0].mxu0 %v4767
      %v4851 = vpop.f32.mrb[0].mxu0
      %v4852 = vadd.f32 0.0, %v4851
      %v4853 = vpop.f32.mrb[0].mxu0
      %v4854 = vpop.f32.mrb[0].mxu0
      %v4855 = vadd.f32 0.0, %v4854
      %v4856 = vpop.f32.mrb[0].mxu0
      %4857 = vmatprep.mubr.bf16.mxu0 0
      %4858 = vmatmul.mubr.bf16.gmra.mrb[0].mxu0 %v4770
      %v4859 = vpop.f32.mrb[0].mxu0
      %v4860 = vadd.f32 0.0, %v4859
      %v4861 = vpop.f32.mrb[0].mxu0
      %v4862 = vpop.f32.mrb[0].mxu0
      %v4863 = vadd.f32 0.0, %v4862
      %v4864 = vpop.f32.mrb[0].mxu0
      %4865 = vmatprep.mubr.bf16.mxu0 0
      %4866 = vmatmul.mubr.bf16.gmra.mrb[0].mxu0 %v4773
      %v4867 = vpop.f32.mrb[0].mxu0
      %v4868 = vadd.f32 0.0, %v4867
      %v4869 = vpop.f32.mrb[0].mxu0
      %v4870 = vpop.f32.mrb[0].mxu0
      %v4871 = vadd.f32 0.0, %v4870
      %v4872 = vpop.f32.mrb[0].mxu0
      %4873 = vmatprep.mubr.bf16.mxu0 0
      %4874 = vmatmul.mubr.bf16.gmra.mrb[0].mxu0 %v4776
      %v4875 = vpop.f32.mrb[0].mxu0
      %v4876 = vadd.f32 0.0, %v4875
      %v4877 = vpop.f32.mrb[0].mxu0
      %v4878 = vpop.f32.mrb[0].mxu0
      %v4879 = vadd.f32 0.0, %v4878
      %v4880 = vpop.f32.mrb[0].mxu0
      %4881 = vmatprep.mubr.bf16.mxu0 0
      %4882 = vmatmul.mubr.bf16.gmra.mrb[0].mxu0 %v4779
      %v4883 = vpop.f32.mrb[0].mxu0
      %v4884 = vadd.f32 0.0, %v4883
      %v4885 = vpop.f32.mrb[0].mxu0
      %v4886 = vpop.f32.mrb[0].mxu0
      %v4887 = vadd.f32 0.0, %v4886
      %v4888 = vpop.f32.mrb[0].mxu0
      %4889 = vmatprep.mubr.bf16.mxu0 0
      %4890 = vmatmul.mubr.bf16.gmra.mrb[0].mxu0 %v4782
      %v4891 = vpop.f32.mrb[0].mxu0
      %v4892 = vadd.f32 0.0, %v4891
      %v4893 = vpop.f32.mrb[0].mxu0
      %v4894 = vpop.f32.mrb[0].mxu0
      %v4895 = vadd.f32 0.0, %v4894
      %v4896 = vpop.f32.mrb[0].mxu0
      %4897 = vmatprep.mubr.bf16.mxu0 0
      %4898 = vmatmul.mubr.bf16.gmra.mrb[0].mxu0 %v4785
      %v4899 = vpop.f32.mrb[0].mxu0
      %v4900 = vadd.f32 0.0, %v4899
      %v4901 = vpop.f32.mrb[0].mxu0
      %v4902 = vpop.f32.mrb[0].mxu0
      %v4903 = vadd.f32 0.0, %v4902
      %v4904 = vpop.f32.mrb[0].mxu0
      %4905 = vmatprep.mubr.bf16.mxu0 0
      %4906 = vmatmul.mubr.bf16.gmra.mrb[0].mxu0 %v4788
      %v4907 = vpop.f32.mrb[0].mxu0
      %v4908 = vadd.f32 0.0, %v4907
      %v4909 = vpop.f32.mrb[0].mxu0
      %v4910 = vpop.f32.mrb[0].mxu0
      %v4911 = vadd.f32 0.0, %v4910
      %v4912 = vpop.f32.mrb[0].mxu0
      %4913 = vmatprep.mubr.bf16.mxu0 0
      %4914 = vmatmul.mubr.bf16.gmra.mrb[0].mxu0 %v4791
      %v4915 = vpop.f32.mrb[0].mxu0
      %v4916 = vadd.f32 0.0, %v4915
      %v4917 = vpop.f32.mrb[0].mxu0
      %v4918 = vpop.f32.mrb[0].mxu0
      %v4919 = vadd.f32 0.0, %v4918
      %v4920 = vpop.f32.mrb[0].mxu0
      %4921 = vmatprep.mubr.bf16.mxu0 0
      %4922 = vmatmul.mubr.bf16.gmra.mrb[0].mxu0 %v4794
      %v4923 = vpop.f32.mrb[0].mxu0
      %v4924 = vadd.f32 0.0, %v4923
      %v4925 = vpop.f32.mrb[0].mxu0
      %v4926 = vpop.f32.mrb[0].mxu0
      %v4927 = vadd.f32 0.0, %v4926
      %v4928 = vpop.f32.mrb[0].mxu0
      %4929 = vmatprep.mubr.bf16.mxu0 0
      %4930 = vmatmul.mubr.bf16.gmra.mrb[0].mxu0 %v4797
      %v4931 = vpop.f32.mrb[0].mxu0
      %v4932 = vadd.f32 0.0, %v4931
      %v4933 = vpop.f32.mrb[0].mxu0
      %v4934 = vpop.f32.mrb[0].mxu0
      %v4935 = vadd.f32 0.0, %v4934
      %v4936 = vpop.f32.mrb[0].mxu0
      %4937 = vmatprep.mubr.bf16.mxu0 0
      %4938 = vmatmul.mubr.bf16.gmra.mrb[0].mxu0 %v4800
      %v4939 = vpop.f32.mrb[0].mxu0
      %v4940 = vadd.f32 0.0, %v4939
      %v4941 = vpop.f32.mrb[0].mxu0
      %v4942 = vpop.f32.mrb[0].mxu0
      %v4943 = vadd.f32 0.0, %v4942
      %v4944 = vpop.f32.mrb[0].mxu0
      %4945 = vmatprep.mubr.bf16.mxu0 0
      %4946 = vmatmul.mubr.bf16.gmra.mrb[0].mxu0 %v4803
      %v4947 = vpop.f32.mrb[0].mxu0
      %v4948 = vadd.f32 0.0, %v4947
      %v4949 = vpop.f32.mrb[0].mxu0
      %v4950 = vpop.f32.mrb[0].mxu0
      %v4951 = vadd.f32 0.0, %v4950
      %v4952 = vpop.f32.mrb[0].mxu0
      %4953 = vmatprep.mubr.bf16.mxu0 0
      %4954 = vmatmul.mubr.bf16.gmra.mrb[0].mxu0 %v4806
      %v4955 = vpop.f32.mrb[0].mxu0
      %v4956 = vadd.f32 0.0, %v4955
      %v4957 = vpop.f32.mrb[0].mxu0
      %v4958 = vpop.f32.mrb[0].mxu0
      %v4959 = vadd.f32 0.0, %v4958
      %v4960 = vpop.f32.mrb[0].mxu0
      %4961 = vmatprep.mubr.bf16.mxu0 0
      %4962 = vmatmul.mubr.bf16.gmra.mrb[0].mxu0 %v4809
      %v4963 = vpop.f32.mrb[0].mxu0
      %v4964 = vadd.f32 0.0, %v4963
      %v4965 = vpop.f32.mrb[0].mxu0
      %v4966 = vpop.f32.mrb[0].mxu0
      %v4967 = vadd.f32 0.0, %v4966
      %v4968 = vpop.f32.mrb[0].mxu0
      %4969 = vmatprep.mubr.bf16.mxu0 0
      %4970 = vmatmul.mubr.bf16.gmra.mrb[0].mxu0 %v4812
      %v4971 = vpop.f32.mrb[0].mxu0
      %v4972 = vadd.f32 0.0, %v4971
      %v4973 = vpop.f32.mrb[0].mxu0
      %v4974 = vpop.f32.mrb[0].mxu0
      %v4975 = vadd.f32 0.0, %v4974
      %v4976 = vpop.f32.mrb[0].mxu0
      %4977 = vdwg.mxu0
      %v4978 = vadd.f32 %v4508, %v4852
      %v4979 = vadd.f32 %v4509, %v4855
      %v4980 = vadd.f32 %v4510, %v4860
      %v4981 = vadd.f32 %v4511, %v4863
      %v4982 = vadd.f32 %v4512, %v4868
      %v4983 = vadd.f32 %v4513, %v4871
      %v4984 = vadd.f32 %v4514, %v4876
      %v4985 = vadd.f32 %v4515, %v4879
      %v4986 = vadd.f32 %v4516, %v4884
      %v4987 = vadd.f32 %v4517, %v4887
      %v4988 = vadd.f32 %v4518, %v4892
      %v4989 = vadd.f32 %v4519, %v4895
      %v4990 = vadd.f32 %v4520, %v4900
      %v4991 = vadd.f32 %v4521, %v4903
      %v4992 = vadd.f32 %v4522, %v4908
      %v4993 = vadd.f32 %v4523, %v4911
      %v4994 = vadd.f32 %v4524, %v4916
      %v4995 = vadd.f32 %v4525, %v4919
      %v4996 = vadd.f32 %v4526, %v4924
      %v4997 = vadd.f32 %v4527, %v4927
      %v4998 = vadd.f32 %v4528, %v4932
      %v4999 = vadd.f32 %v4529, %v4935
      %v5000 = vadd.f32 %v4530, %v4940
      %v5001 = vadd.f32 %v4531, %v4943
      %v5002 = vadd.f32 %v4532, %v4948
      %v5003 = vadd.f32 %v4533, %v4951
      %v5004 = vadd.f32 %v4534, %v4956
      %v5005 = vadd.f32 %v4535, %v4959
      %v5006 = vadd.f32 %v4536, %v4964
      %v5007 = vadd.f32 %v4537, %v4967
      %v5008 = vadd.f32 %v4538, %v4972
      %v5009 = vadd.f32 %v4539, %v4975
      %v5010 = vpack.c.bf16 %v4979, %v4978
      %v5011 = vpack.c.bf16 %v4981, %v4980
      %v5012 = vpack.c.bf16 %v4983, %v4982
      %v5013 = vpack.c.bf16 %v4985, %v4984
      %v5014 = vpack.c.bf16 %v4987, %v4986
      %v5015 = vpack.c.bf16 %v4989, %v4988
      %v5016 = vpack.c.bf16 %v4991, %v4990
      %v5017 = vpack.c.bf16 %v4993, %v4992
      %v5018 = vpack.c.bf16 %v4995, %v4994
      %v5019 = vpack.c.bf16 %v4997, %v4996
      %v5020 = vpack.c.bf16 %v4999, %v4998
      %v5021 = vpack.c.bf16 %v5001, %v5000
      %v5022 = vpack.c.bf16 %v5003, %v5002
      %v5023 = vpack.c.bf16 %v5005, %v5004
      %v5024 = vpack.c.bf16 %v5007, %v5006
      %v5025 = vpack.c.bf16 %v5009, %v5008
      %v5042 = vunpack.c.l.b16 %v5010
      %v5043 = vunpack.c.h.b16 %v5010
      %v5044 = vunpack.c.l.b16 %v5011
      %v5045 = vunpack.c.h.b16 %v5011
      %v5046 = vunpack.c.l.b16 %v5012
      %v5047 = vunpack.c.h.b16 %v5012
      %v5048 = vunpack.c.l.b16 %v5013
      %v5049 = vunpack.c.h.b16 %v5013
      %v5050 = vunpack.c.l.b16 %v5014
      %v5051 = vunpack.c.h.b16 %v5014
      %v5052 = vunpack.c.l.b16 %v5015
      %v5053 = vunpack.c.h.b16 %v5015
      %v5054 = vunpack.c.l.b16 %v5016
      %v5055 = vunpack.c.h.b16 %v5016
      %v5056 = vunpack.c.l.b16 %v5017
      %v5057 = vunpack.c.h.b16 %v5017
      %v5058 = vunpack.c.l.b16 %v5018
      %v5059 = vunpack.c.h.b16 %v5018
      %v5060 = vunpack.c.l.b16 %v5019
      %v5061 = vunpack.c.h.b16 %v5019
      %v5062 = vunpack.c.l.b16 %v5020
      %v5063 = vunpack.c.h.b16 %v5020
      %v5064 = vunpack.c.l.b16 %v5021
      %v5065 = vunpack.c.h.b16 %v5021
      %v5066 = vunpack.c.l.b16 %v5022
      %v5067 = vunpack.c.h.b16 %v5022
      %v5068 = vunpack.c.l.b16 %v5023
      %v5069 = vunpack.c.h.b16 %v5023
      %v5070 = vunpack.c.l.b16 %v5024
      %v5071 = vunpack.c.h.b16 %v5024
      %v5072 = vunpack.c.l.b16 %v5025
      %v5073 = vunpack.c.h.b16 %v5025
      %v5074 = vpack.c.b16 %v5042, %v5042
      %v5075 = vpack.c.b16 %v5043, %v5043
      %v5076 = vpack.c.b16 %v5044, %v5044
      %v5077 = vpack.c.b16 %v5045, %v5045
      %v5078 = vpack.c.b16 %v5046, %v5046
      %v5079 = vpack.c.b16 %v5047, %v5047
      %v5080 = vpack.c.b16 %v5048, %v5048
      %v5081 = vpack.c.b16 %v5049, %v5049
      %v5082 = vpack.c.b16 %v5050, %v5050
      %v5083 = vpack.c.b16 %v5051, %v5051
      %v5084 = vpack.c.b16 %v5052, %v5052
      %v5085 = vpack.c.b16 %v5053, %v5053
      %v5086 = vpack.c.b16 %v5054, %v5054
      %v5087 = vpack.c.b16 %v5055, %v5055
      %v5088 = vpack.c.b16 %v5056, %v5056
      %v5089 = vpack.c.b16 %v5057, %v5057
      %v5090 = vpack.c.b16 %v5058, %v5058
      %v5091 = vpack.c.b16 %v5059, %v5059
      %v5092 = vpack.c.b16 %v5060, %v5060
      %v5093 = vpack.c.b16 %v5061, %v5061
      %v5094 = vpack.c.b16 %v5062, %v5062
      %v5095 = vpack.c.b16 %v5063, %v5063
      %v5096 = vpack.c.b16 %v5064, %v5064
      %v5097 = vpack.c.b16 %v5065, %v5065
      %v5098 = vpack.c.b16 %v5066, %v5066
      %v5099 = vpack.c.b16 %v5067, %v5067
      %v5100 = vpack.c.b16 %v5068, %v5068
      %v5101 = vpack.c.b16 %v5069, %v5069
      %v5102 = vpack.c.b16 %v5070, %v5070
      %v5103 = vpack.c.b16 %v5071, %v5071
      %v5104 = vpack.c.b16 %v5072, %v5072
      %v5105 = vpack.c.b16 %v5073, %v5073
      %5138 = vst [vmem:[%s330] sm:$0xf] %v5074
      %5139 = vst [vmem:[%s330 + $0x4] sm:$0xf] %v5075
      %5140 = vst [vmem:[%s330 + $0x8] sm:$0xf] %v5076
      %5141 = vst [vmem:[%s330 + $0xc] sm:$0xf] %v5077
      %5142 = vst [vmem:[%s330 + $0x10] sm:$0xf] %v5078
      %5143 = vst [vmem:[%s330 + $0x14] sm:$0xf] %v5079
      %5144 = vst [vmem:[%s330 + $0x18] sm:$0xf] %v5080
      %5145 = vst [vmem:[%s330 + $0x1c] sm:$0xf] %v5081
      %5146 = vst [vmem:[%s330 + $0x20] sm:$0xf] %v5082
      %5147 = vst [vmem:[%s330 + $0x24] sm:$0xf] %v5083
      %5148 = vst [vmem:[%s330 + $0x28] sm:$0xf] %v5084
      %5149 = vst [vmem:[%s330 + $0x2c] sm:$0xf] %v5085
      %5150 = vst [vmem:[%s330 + $0x30] sm:$0xf] %v5086
      %5151 = vst [vmem:[%s330 + $0x34] sm:$0xf] %v5087
      %5152 = vst [vmem:[%s330 + $0x38] sm:$0xf] %v5088
      %5153 = vst [vmem:[%s330 + $0x3c] sm:$0xf] %v5089
      %5154 = vst [vmem:[%s330 + $0x40] sm:$0xf] %v5090
      %5155 = vst [vmem:[%s330 + $0x44] sm:$0xf] %v5091
      %5156 = vst [vmem:[%s330 + $0x48] sm:$0xf] %v5092
      %5157 = vst [vmem:[%s330 + $0x4c] sm:$0xf] %v5093
      %5158 = vst [vmem:[%s330 + $0x50] sm:$0xf] %v5094
      %5159 = vst [vmem:[%s330 + $0x54] sm:$0xf] %v5095
      %5160 = vst [vmem:[%s330 + $0x58] sm:$0xf] %v5096
      %5161 = vst [vmem:[%s330 + $0x5c] sm:$0xf] %v5097
      %5162 = vst [vmem:[%s330 + $0x60] sm:$0xf] %v5098
      %5163 = vst [vmem:[%s330 + $0x64] sm:$0xf] %v5099
      %5164 = vst [vmem:[%s330 + $0x68] sm:$0xf] %v5100
      %5165 = vst [vmem:[%s330 + $0x6c] sm:$0xf] %v5101
      %5166 = vst [vmem:[%s330 + $0x70] sm:$0xf] %v5102
      %5167 = vst [vmem:[%s330 + $0x74] sm:$0xf] %v5103
      %5168 = vst [vmem:[%s330 + $0x78] sm:$0xf] %v5104
      %5169 = vst [vmem:[%s330 + $0x7c] sm:$0xf] %v5105
      %v5170 = vunpack.c.l.bf16 %v5010
      %v5171 = vunpack.c.h.bf16 %v5010
      %v5172 = vunpack.c.l.bf16 %v5011
      %v5173 = vunpack.c.h.bf16 %v5011
      %v5174 = vunpack.c.l.bf16 %v5012
      %v5175 = vunpack.c.h.bf16 %v5012
      %v5176 = vunpack.c.l.bf16 %v5013
      %v5177 = vunpack.c.h.bf16 %v5013
      %v5178 = vunpack.c.l.bf16 %v5014
      %v5179 = vunpack.c.h.bf16 %v5014
      %v5180 = vunpack.c.l.bf16 %v5015
      %v5181 = vunpack.c.h.bf16 %v5015
      %v5182 = vunpack.c.l.bf16 %v5016
      %v5183 = vunpack.c.h.bf16 %v5016
      %v5184 = vunpack.c.l.bf16 %v5017
      %v5185 = vunpack.c.h.bf16 %v5017
      %v5186 = vunpack.c.l.bf16 %v5018
      %v5187 = vunpack.c.h.bf16 %v5018
      %v5188 = vunpack.c.l.bf16 %v5019
      %v5189 = vunpack.c.h.bf16 %v5019
      %v5190 = vunpack.c.l.bf16 %v5020
      %v5191 = vunpack.c.h.bf16 %v5020
      %v5192 = vunpack.c.l.bf16 %v5021
      %v5193 = vunpack.c.h.bf16 %v5021
      %v5194 = vunpack.c.l.bf16 %v5022
      %v5195 = vunpack.c.h.bf16 %v5022
      %v5196 = vunpack.c.l.bf16 %v5023
      %v5197 = vunpack.c.h.bf16 %v5023
      %v5198 = vunpack.c.l.bf16 %v5024
      %v5199 = vunpack.c.h.bf16 %v5024
      %v5200 = vunpack.c.l.bf16 %v5025
      %v5201 = vunpack.c.h.bf16 %v5025
      %v5202 = vadd.f32 %v5170, %v5171
      %v5203 = vadd.f32 %v5202, %v5172
      %v5204 = vadd.f32 %v5203, %v5173
      %v5205 = vadd.f32 %v5204, %v5174
      %v5206 = vadd.f32 %v5205, %v5175
      %v5207 = vadd.f32 %v5206, %v5176
      %v5208 = vadd.f32 %v5207, %v5177
      %v5209 = vadd.f32 %v5208, %v5178
      %v5210 = vadd.f32 %v5209, %v5179
      %v5211 = vadd.f32 %v5210, %v5180
      %v5212 = vadd.f32 %v5211, %v5181
      %v5213 = vadd.f32 %v5212, %v5182
      %v5214 = vadd.f32 %v5213, %v5183
      %v5215 = vadd.f32 %v5214, %v5184
      %v5216 = vadd.f32 %v5215, %v5185
      %v5217 = vadd.f32 %v5216, %v5186
      %v5218 = vadd.f32 %v5217, %v5187
      %v5219 = vadd.f32 %v5218, %v5188
      %v5220 = vadd.f32 %v5219, %v5189
      %v5221 = vadd.f32 %v5220, %v5190
      %v5222 = vadd.f32 %v5221, %v5191
      %v5223 = vadd.f32 %v5222, %v5192
      %v5224 = vadd.f32 %v5223, %v5193
      %v5225 = vadd.f32 %v5224, %v5194
      %v5226 = vadd.f32 %v5225, %v5195
      %v5227 = vadd.f32 %v5226, %v5196
      %v5228 = vadd.f32 %v5227, %v5197
      %v5229 = vadd.f32 %v5228, %v5198
      %v5230 = vadd.f32 %v5229, %v5199
      %v5231 = vadd.f32 %v5230, %v5200
      %v5232 = vadd.f32 %v5231, %v5201
      %v5233 = vrot.slane %v5232, 4
      %v5234 = vadd.f32 %v5232, %v5233
      %v5235 = vrot.slane %v5234, 2
      %v5236 = vadd.f32 %v5234, %v5235
      %v5237 = vrot.slane %v5236, 1
      %v5238 = vadd.f32 %v5236, %v5237
      %5239 = vst [vmem:[%s338] sm:$0x1] %v5238
      %v5240 = vmul.f32 %v5170, %v5170
      %v5241 = vmul.f32 %v5171, %v5171
      %v5242 = vmul.f32 %v5172, %v5172
      %v5243 = vmul.f32 %v5173, %v5173
      %v5244 = vmul.f32 %v5174, %v5174
      %v5245 = vmul.f32 %v5175, %v5175
      %v5246 = vmul.f32 %v5176, %v5176
      %v5247 = vmul.f32 %v5177, %v5177
      %v5248 = vmul.f32 %v5178, %v5178
      %v5249 = vmul.f32 %v5179, %v5179
      %v5250 = vmul.f32 %v5180, %v5180
      %v5251 = vmul.f32 %v5181, %v5181
      %v5252 = vmul.f32 %v5182, %v5182
      %v5253 = vmul.f32 %v5183, %v5183
      %v5254 = vmul.f32 %v5184, %v5184
      %v5255 = vmul.f32 %v5185, %v5185
      %v5256 = vmul.f32 %v5186, %v5186
      %v5257 = vmul.f32 %v5187, %v5187
      %v5258 = vmul.f32 %v5188, %v5188
      %v5259 = vmul.f32 %v5189, %v5189
      %v5260 = vmul.f32 %v5190, %v5190
      %v5261 = vmul.f32 %v5191, %v5191
      %v5262 = vmul.f32 %v5192, %v5192
      %v5263 = vmul.f32 %v5193, %v5193
      %v5264 = vmul.f32 %v5194, %v5194
      %v5265 = vmul.f32 %v5195, %v5195
      %v5266 = vmul.f32 %v5196, %v5196
      %v5267 = vmul.f32 %v5197, %v5197
      %v5268 = vmul.f32 %v5198, %v5198
      %v5269 = vmul.f32 %v5199, %v5199
      %v5270 = vmul.f32 %v5200, %v5200
      %v5271 = vmul.f32 %v5201, %v5201
      %v5272 = vadd.f32 %v5240, %v5241
      %v5273 = vadd.f32 %v5272, %v5242
      %v5274 = vadd.f32 %v5273, %v5243
      %v5275 = vadd.f32 %v5274, %v5244
      %v5276 = vadd.f32 %v5275, %v5245
      %v5277 = vadd.f32 %v5276, %v5246
      %v5278 = vadd.f32 %v5277, %v5247
      %v5279 = vadd.f32 %v5278, %v5248
      %v5280 = vadd.f32 %v5279, %v5249
      %v5281 = vadd.f32 %v5280, %v5250
      %v5282 = vadd.f32 %v5281, %v5251
      %v5283 = vadd.f32 %v5282, %v5252
      %v5284 = vadd.f32 %v5283, %v5253
      %v5285 = vadd.f32 %v5284, %v5254
      %v5286 = vadd.f32 %v5285, %v5255
      %v5287 = vadd.f32 %v5286, %v5256
      %v5288 = vadd.f32 %v5287, %v5257
      %v5289 = vadd.f32 %v5288, %v5258
      %v5290 = vadd.f32 %v5289, %v5259
      %v5291 = vadd.f32 %v5290, %v5260
      %v5292 = vadd.f32 %v5291, %v5261
      %v5293 = vadd.f32 %v5292, %v5262
      %v5294 = vadd.f32 %v5293, %v5263
      %v5295 = vadd.f32 %v5294, %v5264
      %v5296 = vadd.f32 %v5295, %v5265
      %v5297 = vadd.f32 %v5296, %v5266
      %v5298 = vadd.f32 %v5297, %v5267
      %v5299 = vadd.f32 %v5298, %v5268
      %v5300 = vadd.f32 %v5299, %v5269
      %v5301 = vadd.f32 %v5300, %v5270
      %v5302 = vadd.f32 %v5301, %v5271
      %v5303 = vrot.slane %v5302, 4
      %v5304 = vadd.f32 %v5302, %v5303
      %v5305 = vrot.slane %v5304, 2
      %v5306 = vadd.f32 %v5304, %v5305
      %v5307 = vrot.slane %v5306, 1
      %v5308 = vadd.f32 %v5306, %v5307
      %5309 = vst [vmem:[%s338 + $0x1] sm:$0x1] %v5308
      %s5310 = smul.u32 16, %s21
      %p5311 = scmp.lt.s32.totalorder %s20, 1
      %s5312 = scalar_select %p5311, %s20, 1
      %p5313 = scmp.lt.s32.totalorder %s5310, 15
      %s5314 = scalar_select %p5313, %s5310, 15
      %s5315 = smul.addr %s5314, 2
      %s5316 = smul.addr %s5312, 32
      %s5317 = sadd.s32 %s5315, %s5316
      %s5318 = smul.addr %s5317, 4
      %s5319 = scalar_lea.vmem %s3, %s5318
      %p5320 = scmp.lt.s32.totalorder %s20, 1
      %s5321 = scalar_select %p5320, %s20, 1
      %p5322 = scmp.lt.s32.totalorder %s21, 0
      %s5323 = scalar_select %p5322, %s21, 0
      %s5324 = sadd.s32 %s5323, %s5321
      %s5325 = smul.addr %s5324, 2
      %s5326 = scalar_lea.vmem %s4, %s5325
      // Predicated region
      $region33: #{conv2d_batch_leaky.1} parent=31 // pred_check
        %p5327 = pneg %p129
      $region34: #{conv2d_batch_leaky.1} parent=31 // pred_check_branch
        %5329 = sbr.rel (%p5327) target = $region36
      $region35: #{conv2d_batch_leaky.1} parent=31 // pred_region
        %s5330 = smul.u32 16, %s21
      $region36: #{conv2d_batch_leaky.1} parent=31 // pred_fallthru
        _
      // Predicated region
      $region37: #{conv2d_batch_leaky.1} parent=31 // pred_check
        %p5331 = pneg %p157
      $region38: #{conv2d_batch_leaky.1} parent=31 // pred_check_branch
        %5333 = sbr.rel (%p5331) target = $region40
      $region39: #{conv2d_batch_leaky.1} parent=31 // pred_region
        _
      $region40: #{conv2d_batch_leaky.1} parent=31 // pred_fallthru
        _
    $region32: #{conv2d_batch_leaky.1} parent=5 // pred_fallthru
      _
    %p5334 = scmp.le.s32.totalorder 2, %s11
    // Predicated region
    $region41: #{conv2d_batch_leaky.1} parent=5 // pred_check
      %p5335 = pneg %p5334
    $region42: #{conv2d_batch_leaky.1} parent=5 // pred_check_branch
      %5337 = sbr.rel (%p5335) target = $region44
    $region43: #{conv2d_batch_leaky.1} parent=5 // pred_region
      %s5338 = ssub.s32 %s11, 2
      // Predicated region
      $region45: #{conv2d_batch_leaky.1} parent=43 // pred_check
        %p5339 = pneg %p135
      $region46: #{conv2d_batch_leaky.1} parent=43 // pred_check_branch
        %5341 = sbr.rel (%p5339) target = $region48
      $region47: #{conv2d_batch_leaky.1} parent=43 // pred_region
        %s5342 = smul.u32 16, %s23
        %p5343 = scmp.lt.s32.totalorder %s22, 1
        %s5344 = scalar_select %p5343, %s22, 1
        %p5345 = scmp.lt.s32.totalorder %s5342, 15
        %s5346 = scalar_select %p5345, %s5342, 15
        %s5347 = smul.addr %s5346, 2
        %s5348 = smul.addr %s5344, 32
        %s5349 = sadd.s32 %s5347, %s5348
        %s5350 = smul.addr %s5349, 4
        %s5351 = scalar_lea.vmem %s3, %s5350
      $region48: #{conv2d_batch_leaky.1} parent=43 // pred_fallthru
        _
      // Predicated region
      $region49: #{conv2d_batch_leaky.1} parent=43 // pred_check
        %p5352 = pneg %p163
      $region50: #{conv2d_batch_leaky.1} parent=43 // pred_check_branch
        %5354 = sbr.rel (%p5352) target = $region52
      $region51: #{conv2d_batch_leaky.1} parent=43 // pred_region
        %p5355 = scmp.lt.s32.totalorder %s22, 1
        %s5356 = scalar_select %p5355, %s22, 1
        %p5357 = scmp.lt.s32.totalorder %s23, 0
        %s5358 = scalar_select %p5357, %s23, 0
        %s5359 = sadd.s32 %s5358, %s5356
        %s5360 = smul.addr %s5359, 2
        %s5361 = scalar_lea.vmem %s4, %s5360
      $region52: #{conv2d_batch_leaky.1} parent=43 // pred_fallthru
        _
    $region44: #{conv2d_batch_leaky.1} parent=5 // pred_fallthru
      _
  $region6: #{conv2d_batch_leaky.1} parent=0 // loop_footer
    %s15 = sadd.s32 1, %s11
  $region7: #{conv2d_batch_leaky.1} parent=0 // loop_footer_branch
    %10 = sbr.rel target = $region3
  $region8: #{conv2d_batch_leaky.1} parent=0 // loop_exit
    _

</llo_original>
